<compile_context>
chip_gen: v7x
topology: tpu7x:2x2x1
jax: 0.10.0
libtpu: 0.0.40
codegen_flags: <defaults>
</compile_context>

<pallas_src>
import functools
import math

import jax
import jax.numpy as jnp
from jax import lax
from jax.experimental import pallas as pl
from jax.experimental.pallas import tpu as pltpu

BF16 = jnp.bfloat16
F32 = jnp.float32

# <= 64 MiB physical VMEM on v7x, above the 16/32 MiB default scoped limits.
VMEM_LIMIT = 48 * 1024 * 1024


# ----------------------------------------------------------------------------
# in-kernel helpers (pure functions traced inside kernel bodies, f32 math)
# ----------------------------------------------------------------------------
def _layer_norm(x, g, b, eps=1e-5):
    mu = jnp.mean(x, axis=-1, keepdims=True)
    var = jnp.mean((x - mu) ** 2, axis=-1, keepdims=True)
    return (x - mu) * lax.rsqrt(var + eps) * g + b


def _softmax_last(x):
    m = jnp.max(x, axis=-1, keepdims=True)
    e = jnp.exp(x - m)
    return e * pl.reciprocal(jnp.sum(e, axis=-1, keepdims=True), approx=True)


# ----------------------------------------------------------------------------
# Kernel 1: fused transformer decoder stack
#   grid = (num_batch_tiles, num_blocks); residual resident in the output
#   block across the (arbitrary) block axis; per-block weights streamed.
# ----------------------------------------------------------------------------
def _stack_kernel(num_heads, x_ref, wq_ref, wk_ref, wv_ref, bq_ref, bk_ref,
                  bv_ref, wo_ref, bo_ref, g1_ref, be1_ref, w1_ref, b1_ref,
                  w2_ref, b2_ref, g2_ref, be2_ref, o_ref):
    n = pl.program_id(1)
    nb = pl.num_programs(1)

    @pl.when(n == 0)
    def _():
        o_ref[...] = x_ref[...]

    x = o_ref[...]                                   # (TB, T, E) f32 residual
    TB, T, E = x.shape
    A = wq_ref.shape[2]
    H = num_heads
    dh = A // H
    scale = 1.0 / math.sqrt(dh)

    # fold (TB, T) -> rows so every projection sees M = TB*T
    x2 = x.reshape(TB * T, E)
    x2b = x2.astype(BF16)

    q = (jnp.dot(x2b, wq_ref[0], preferred_element_type=F32) + bq_ref[0]) * scale
    k = jnp.dot(x2b, wk_ref[0], preferred_element_type=F32) + bk_ref[0]
    v = jnp.dot(x2b, wv_ref[0], preferred_element_type=F32) + bv_ref[0]
    q3 = q.reshape(TB, T, A).astype(BF16)
    k3 = k.reshape(TB, T, A).astype(BF16)
    v3 = v.reshape(TB, T, A).astype(BF16)

    # additive causal mask (one add per head instead of compare+select)
    row = lax.broadcasted_iota(jnp.int32, (T, T), 0)
    col = lax.broadcasted_iota(jnp.int32, (T, T), 1)
    mask_add = jnp.where(col <= row, 0.0, -1e30).astype(F32)

    # per-head attention; head outputs folded directly into the wo projection
    # (wo is stored head-major (H, dh, E) -> leading-dim index, no lane slices
    # of weights, no ctx scratch, no masked stores).
    # TODO(synk): a single batched einsum over all heads needs multi-batch-dim
    # dot_general / einshape support; kept as a per-head loop for portability.
    attn = jnp.zeros((TB * T, E), F32)
    for h in range(H):
        sl = slice(h * dh, (h + 1) * dh)
        s = jnp.einsum('btd,bsd->bts', q3[:, :, sl], k3[:, :, sl],
                       preferred_element_type=F32) + mask_add
        p = _softmax_last(s).astype(BF16)
        ctx_h = jnp.einsum('bts,bsd->btd', p, v3[:, :, sl],
                           preferred_element_type=F32)
        attn = attn + jnp.dot(ctx_h.reshape(TB * T, dh).astype(BF16),
                              wo_ref[0, h], preferred_element_type=F32)
    attn = attn + bo_ref[0]

    # all but the last block: full-row LN + FFN + LN (residual for next block)
    @pl.when(n < nb - 1)
    def _():
        y = _layer_norm(x2 + attn, g1_ref[0], be1_ref[0])
        f1 = jnp.maximum(
            jnp.dot(y.astype(BF16), w1_ref[0], preferred_element_type=F32)
            + b1_ref[0], 0.0)
        f2 = jnp.dot(f1.astype(BF16), w2_ref[0],
                     preferred_element_type=F32) + b2_ref[0]
        o_ref[...] = _layer_norm(y + f2, g2_ref[0], be2_ref[0]).reshape(TB, T, E)

    # last block: downstream only consumes the final time step -> skip the
    # LN/FFN/LN work for the other T-1 rows.
    @pl.when(n == nb - 1)
    def _():
        xl = x[:, T - 1, :]                               # (TB, E)
        al = attn.reshape(TB, T, E)[:, T - 1, :]          # (TB, E)
        y = _layer_norm(xl + al, g1_ref[0], be1_ref[0])
        f1 = jnp.maximum(
            jnp.dot(y.astype(BF16), w1_ref[0], preferred_element_type=F32)
            + b1_ref[0], 0.0)
        f2 = jnp.dot(f1.astype(BF16), w2_ref[0],
                     preferred_element_type=F32) + b2_ref[0]
        o_ref[:, T - 1:T, :] = _layer_norm(
            y + f2, g2_ref[0], be2_ref[0]).reshape(TB, 1, E)


def transformer_stack(x, stk, num_heads, batch_tile=None):
    B, T, E = x.shape
    NB, _, A = stk["wq"].shape
    Fh = stk["w1"].shape[2]
    H = num_heads
    dh = A // H
    assert A % H == 0

    # TODO(synk): at real scale size TB so M = TB*T clears the per-generation
    # weight-streaming ridge (>=256 rows v5e, >=320 v7x, >=700 v6e) while
    # keeping >=2 batch tiles for the v7x second TensorCore.
    TB = batch_tile or B
    assert B % TB == 0
    grid = (B // TB, NB)

    xmap = lambda i, n: (i, 0, 0)
    wmap3 = lambda i, n: (n, 0, 0)
    wmap4 = lambda i, n: (n, 0, 0, 0)
    w3 = lambda shp: pl.BlockSpec((1,) + shp, wmap3)

    return pl.pallas_call(
        functools.partial(_stack_kernel, H),
        out_shape=jax.ShapeDtypeStruct((B, T, E), F32),
        grid=grid,
        in_specs=[
            pl.BlockSpec((TB, T, E), xmap),
            w3((E, A)), w3((E, A)), w3((E, A)),
            w3((1, A)), w3((1, A)), w3((1, A)),
            pl.BlockSpec((1, H, dh, E), wmap4), w3((1, E)),
            w3((1, E)), w3((1, E)),
            w3((E, Fh)), w3((1, Fh)),
            w3((Fh, E)), w3((1, E)),
            w3((1, E)), w3((1, E)),
        ],
        out_specs=pl.BlockSpec((TB, T, E), xmap),
        input_output_aliases={0: 0},
        compiler_params=pltpu.CompilerParams(
            dimension_semantics=("parallel", "arbitrary"),
            vmem_limit_bytes=VMEM_LIMIT),
    )(x, stk["wq"], stk["wk"], stk["wv"], stk["bq"], stk["bk"], stk["bv"],
      stk["wo"], stk["bo"], stk["g1"], stk["be1"], stk["w1"], stk["b1"],
      stk["w2"], stk["b2"], stk["g2"], stk["be2"])


# ----------------------------------------------------------------------------
# Kernel 2: batch-folded switching network + copy/keyword coverage attention.
#   h is (B, E) so every matmul has M = B (not 1); coverage rows are lane-dense
#   (B, S) / (B, K); outputs already scaled by the switching probabilities.
# ----------------------------------------------------------------------------
def _attn_heads_kernel(h_ref, doc_ref, enc_ref, kw_ref, ccov_ref, kcov_ref,
                       cwh_ref, cws_ref, cwc_ref, cv_ref, cba_ref,
                       kwh_ref, kwk_ref, kwc_ref, kv_ref, kba_ref,
                       wss_ref, bss_ref, wsd_ref, bsd_ref,
                       acopy_ref, pkw_ref, nccov_ref, nkcov_ref,
                       swt_ref, loss_ref):
    h = h_ref[...]
    hb = h.astype(BF16)
    docb = doc_ref[...].astype(BF16)
    enc = enc_ref[...]
    kw = kw_ref[...]
    ccov = ccov_ref[...]
    kcov = kcov_ref[...]
    B, S, E = enc.shape
    K = kw.shape[1]

    # switching network: softmax(Ws*h + Wd*doc) over 3 classes
    sw_logits = (jnp.dot(hb, wss_ref[...], preferred_element_type=F32)
                 + bss_ref[...]
                 + jnp.dot(docb, wsd_ref[...], preferred_element_type=F32)
                 + bsd_ref[...])
    sw = _softmax_last(sw_logits)                          # (B, 3)
    sw_c = sw[:, 1:2]
    sw_k = sw[:, 2:3]

    # copy attention with coverage over bert_inputs (M = B*S for the big dot)
    enc2 = enc.reshape(B * S, E).astype(BF16)
    hf = jnp.dot(hb, cwh_ref[...], preferred_element_type=F32)       # (B, E)
    feat = (jnp.dot(enc2, cws_ref[...], preferred_element_type=F32).reshape(B, S, E)
            + hf[:, None, :] + ccov[:, :, None] * cwc_ref[...][None]
            + cba_ref[...][None])
    e = jnp.sum(jnp.tanh(feat) * cv_ref[...][None], axis=-1)         # (B, S)
    alpha = _softmax_last(e)
    loss_c = jnp.sum(jnp.minimum(alpha, ccov), axis=-1, keepdims=True)
    nccov_ref[...] = ccov + alpha
    acopy_ref[...] = alpha * sw_c

    # keyword attention with coverage over keyword embeddings
    kw2 = kw.reshape(B * K, E).astype(BF16)
    hfk = jnp.dot(hb, kwh_ref[...], preferred_element_type=F32)
    featk = (jnp.dot(kw2, kwk_ref[...], preferred_element_type=F32).reshape(B, K, E)
             + hfk[:, None, :] + kcov[:, :, None] * kwc_ref[...][None]
             + kba_ref[...][None])
    ek = jnp.sum(jnp.tanh(featk) * kv_ref[...][None], axis=-1)       # (B, K)
    alphak = _softmax_last(ek)
    loss_k = jnp.sum(jnp.minimum(alphak, kcov), axis=-1, keepdims=True)
    nkcov_ref[...] = kcov + alphak
    pkw_ref[...] = alphak * sw_k

    swt_ref[...] = sw[:, 0:1]
    # TODO(synk): coverage-loss reduction over batch (sum vs mean) unknown; sum.
    loss_ref[...] = jnp.sum(loss_c + loss_k, keepdims=True)


def attention_heads(h, doc, enc, kw, ccov_row, kcov_row, params):
    B, E = h.shape
    S = enc.shape[1]
    K = kw.shape[1]
    cp, kp = params["copy"], params["keyword"]

    full2 = lambda shp: pl.BlockSpec(shp, lambda i: (0, 0))
    full3 = lambda shp: pl.BlockSpec(shp, lambda i: (0, 0, 0))

    return pl.pallas_call(
        _attn_heads_kernel,
        out_shape=(jax.ShapeDtypeStruct((B, S), F32),
                   jax.ShapeDtypeStruct((B, K), F32),
                   jax.ShapeDtypeStruct((B, S), F32),
                   jax.ShapeDtypeStruct((B, K), F32),
                   jax.ShapeDtypeStruct((B, 1), F32),
                   jax.ShapeDtypeStruct((1, 1), F32)),
        grid=(1,),
        in_specs=[full2((B, E)), full2((B, E)), full3((B, S, E)), full3((B, K, E)),
                  full2((B, S)), full2((B, K)),
                  full2((E, E)), full2((E, E)), full2((1, E)), full2((1, E)),
                  full2((1, E)),
                  full2((E, E)), full2((E, E)), full2((1, E)), full2((1, E)),
                  full2((1, E)),
                  full2((E, 3)), full2((1, 3)), full2((E, 3)), full2((1, 3))],
        out_specs=(full2((B, S)), full2((B, K)), full2((B, S)), full2((B, K)),
                   full2((B, 1)), full2((1, 1))),
        compiler_params=pltpu.CompilerParams(
            dimension_semantics=("arbitrary",),
            vmem_limit_bytes=VMEM_LIMIT),
    )(h, doc, enc, kw, ccov_row, kcov_row,
      cp["Wh"], cp["Ws"], cp["wc"], cp["v"], cp["ba"],
      kp["Wh"], kp["Wk"], kp["wc"], kp["v"], kp["ba"],
      params["Wsw_s"], params["bsw_s"], params["Wsw_d"], params["bsw_d"])


# ----------------------------------------------------------------------------
# Kernel 3: V-tiled vocab head + copy-distribution scatter.
#   grid = (pass, v_tile): pass 0 accumulates the online-softmax max/denominator
#   in (B,1) VMEM scratch; pass 1 writes the normalized, switching-scaled
#   probabilities and the per-tile one-hot copy scatter.  Wout streams in
#   (E, TV) tiles; nothing O(V) is resident in VMEM.
# ----------------------------------------------------------------------------
def _vocab_kernel(h_ref, swt_ref, alpha_ref, src_ref, wout_ref, bout_ref,
                  trans_ref, pcopy_ref, m_sc, l_sc):
    p = pl.program_id(0)
    j = pl.program_id(1)

    hb = h_ref[...].astype(BF16)                                     # (B, E)
    logits = (jnp.dot(hb, wout_ref[...], preferred_element_type=F32)
              + bout_ref[...])                                       # (B, TV)

    @pl.when(p == 0)
    def _():
        @pl.when(j == 0)
        def _():
            m_sc[...] = jnp.full_like(m_sc, -jnp.inf)
            l_sc[...] = jnp.zeros_like(l_sc)
        m_prev = m_sc[...]
        m_new = jnp.maximum(m_prev, jnp.max(logits, axis=-1, keepdims=True))
        l_sc[...] = (l_sc[...] * jnp.exp(m_prev - m_new)
                     + jnp.sum(jnp.exp(logits - m_new), axis=-1, keepdims=True))
        m_sc[...] = m_new

    @pl.when(p == 1)
    def _():
        scale = swt_ref[...] * pl.reciprocal(l_sc[...], approx=True)  # (B, 1)
        trans_ref[...] = jnp.exp(logits - m_sc[...]) * scale

        B, S = src_ref.shape
        TV = logits.shape[1]
        base = j * TV
        pos = lax.broadcasted_iota(jnp.int32, (B, S, TV), 2) + base
        onehot = (src_ref[...][:, :, None] == pos).astype(BF16)       # (B,S,TV)
        a3 = alpha_ref[...][:, None, :].astype(BF16)                  # (B,1,S)
        pcopy_ref[...] = jnp.einsum('bqs,bst->bqt', a3, onehot,
                                    preferred_element_type=F32)[:, 0, :]


def vocab_head(h, swt, alpha_scaled, source, params, v_tile=None):
    B, E = h.shape
    S = source.shape[1]
    V = params["Wout"].shape[1]
    TV = v_tile or (128 if V % 128 == 0 else V)
    assert V % TV == 0
    NV = V // TV

    fixed = lambda shp: pl.BlockSpec(shp, lambda p, j: (0, 0))
    # pass-0 output index parks on block 0 -> no garbage writebacks in pass 0
    out_map = lambda p, j: (0, p * j)

    return pl.pallas_call(
        _vocab_kernel,
        out_shape=(jax.ShapeDtypeStruct((B, V), F32),
                   jax.ShapeDtypeStruct((B, V), F32)),
        grid=(2, NV),
        in_specs=[fixed((B, E)), fixed((B, 1)), fixed((B, S)), fixed((B, S)),
                  pl.BlockSpec((E, TV), lambda p, j: (0, j)),
                  pl.BlockSpec((1, TV), lambda p, j: (0, j))],
        out_specs=(pl.BlockSpec((B, TV), out_map),
                   pl.BlockSpec((B, TV), out_map)),
        scratch_shapes=[pltpu.VMEM((B, 1), F32), pltpu.VMEM((B, 1), F32)],
        compiler_params=pltpu.CompilerParams(
            dimension_semantics=("arbitrary", "arbitrary"),
            vmem_limit_bytes=VMEM_LIMIT),
    )(h, swt, alpha_scaled, source.astype(jnp.int32),
      params["Wout"], params["bout"])


# ----------------------------------------------------------------------------
# Decoder forward (glue + the three fused kernels)
# ----------------------------------------------------------------------------
def decoder_forward(params, source, target, bert_inputs, documentEmbedding,
                    keywordEmbeddings, CopyCoverageVector, KeywordCoverageVector,
                    flag=True, dropout_key=None, batch_tile=None, v_tile=None):
    keep_prob = params["keep_prob"]
    if flag:
        # TODO(synk): nn.Dropout(keep_prob) treats the arg as the DROP prob;
        # if the reference meant a keep probability the mask/scale invert.
        mask = jax.random.bernoulli(dropout_key, 1.0 - keep_prob, target.shape)
        target = jnp.where(mask, target / (1.0 - keep_prob), 0.0)

    x = transformer_stack(target, params["stack"], params["num_heads"],
                          batch_tile=batch_tile)
    # TODO(synk): TransformerDecoder source unavailable; assume it yields the
    # last-step hidden state [B, 1, E], as implied by squeeze(1) downstream.
    h = x[:, -1, :]                                   # (B, E)
    doc = documentEmbedding[:, 0, :]                  # (B, E)

    acopy, pkw, nccov, nkcov, swt, loss = attention_heads(
        h, doc, bert_inputs, keywordEmbeddings,
        CopyCoverageVector[:, :, 0], KeywordCoverageVector[:, :, 0], params)

    trans, pcopy = vocab_head(h, swt, acopy, source, params, v_tile=v_tile)

    decoder_result = (trans, pcopy, pkw)              # already switching-scaled
    new_copy_cov = nccov[:, :, None]                  # back to (B, S, 1)
    new_kw_cov = nkcov[:, :, None]                    # back to (B, K, 1)
    coverage_loss = loss[0, 0]
    return decoder_result, new_copy_cov, new_kw_cov, coverage_loss


# ----------------------------------------------------------------------------
# Deterministic parameter init (matmul weights stored bf16, biases/LN f32)
# ----------------------------------------------------------------------------
def init_params(key, output_size, attention_size, embedding_size,
                feedforward_hidden_size, num_heads, num_blocks, keep_prob):
    E, A, Fh, V, NB, H = (embedding_size, attention_size,
                          feedforward_hidden_size, output_size, num_blocks,
                          num_heads)
    dh = A // H
    counter = [0]

    def nxt():
        counter[0] += 1
        return jax.random.fold_in(key, counter[0])

    def dense(shape, dtype=F32, scale=0.05):
        return (scale * jax.random.normal(nxt(), shape)).astype(dtype)

    stack = dict(
        wq=dense((NB, E, A), BF16), wk=dense((NB, E, A), BF16),
        wv=dense((NB, E, A), BF16),
        bq=dense((NB, 1, A)), bk=dense((NB, 1, A)), bv=dense((NB, 1, A)),
        # output projection stored head-major: (NB, H, dh, E) so the kernel
        # indexes heads along an untiled leading dim (no lane slicing).
        wo=dense((NB, H, dh, E), BF16), bo=dense((NB, 1, E)),
        g1=jnp.ones((NB, 1, E), F32), be1=jnp.zeros((NB, 1, E), F32),
        w1=dense((NB, E, Fh), BF16), b1=dense((NB, 1, Fh)),
        w2=dense((NB, Fh, E), BF16), b2=dense((NB, 1, E)),
        g2=jnp.ones((NB, 1, E), F32), be2=jnp.zeros((NB, 1, E), F32),
    )

    copy = dict(Wh=dense((E, E), BF16), Ws=dense((E, E), BF16),
                wc=dense((1, E)), v=dense((1, E)), ba=dense((1, E)))
    keyword = dict(Wh=dense((E, E), BF16), Wk=dense((E, E), BF16),
                   wc=dense((1, E)), v=dense((1, E)), ba=dense((1, E)))

    return dict(
        stack=stack,
        Wout=dense((E, V), BF16), bout=dense((1, V)),
        copy=copy, keyword=keyword,
        Wsw_s=dense((E, 3), BF16), bsw_s=dense((1, 3)),
        Wsw_d=dense((E, 3), BF16), bsw_d=dense((1, 3)),
        num_heads=num_heads, output_size=output_size, keep_prob=keep_prob,
    )


# ----------------------------------------------------------------------------
if __name__ == "__main__":
    B, T, S, K = 2, 8, 16, 8
    E, A, Fh, H, NB, V = 32, 32, 64, 4, 2, 256
    keep_prob = 0.1

    key = jax.random.PRNGKey(0)
    k_par, k_src, k_tgt, k_bert, k_doc, k_kw, k_drop = jax.random.split(key, 7)

    params = init_params(k_par, V, A, E, Fh, H, NB, keep_prob)

    source = jax.random.randint(k_src, (B, S), 0, V, dtype=jnp.int32)
    target = jax.random.normal(k_tgt, (B, T, E), dtype=F32)
    bert_inputs = jax.random.normal(k_bert, (B, S, E), dtype=F32)
    documentEmbedding = jax.random.normal(k_doc, (B, 1, E), dtype=F32)
    keywordEmbeddings = jax.random.normal(k_kw, (B, K, E), dtype=F32)
    CopyCoverageVector = jnp.zeros((B, S, 1), F32)
    KeywordCoverageVector = jnp.zeros((B, K, 1), F32)

    out = decoder_forward(params, source, target, bert_inputs, documentEmbedding,
                          keywordEmbeddings, CopyCoverageVector,
                          KeywordCoverageVector, flag=True, dropout_key=k_drop,
                          batch_tile=1, v_tile=128)
    jax.tree_util.tree_map(lambda a: jax.block_until_ready(a), out)
    print("KERNEL_OK")
</pallas_src>

<mosaic_0001>
module attributes {stable_mosaic.version = 11 : i64} {
  func.func @_stack_kernel(%arg0: i32, %arg1: i32, %arg2: memref<1x8x32xf32, #tpu.memory_space<vmem>>, %arg3: memref<1x32x32xbf16, #tpu.memory_space<vmem>>, %arg4: memref<1x32x32xbf16, #tpu.memory_space<vmem>>, %arg5: memref<1x32x32xbf16, #tpu.memory_space<vmem>>, %arg6: memref<1x1x32xf32, #tpu.memory_space<vmem>>, %arg7: memref<1x1x32xf32, #tpu.memory_space<vmem>>, %arg8: memref<1x1x32xf32, #tpu.memory_space<vmem>>, %arg9: memref<1x4x8x32xbf16, #tpu.memory_space<vmem>>, %arg10: memref<1x1x32xf32, #tpu.memory_space<vmem>>, %arg11: memref<1x1x32xf32, #tpu.memory_space<vmem>>, %arg12: memref<1x1x32xf32, #tpu.memory_space<vmem>>, %arg13: memref<1x32x64xbf16, #tpu.memory_space<vmem>>, %arg14: memref<1x1x64xf32, #tpu.memory_space<vmem>>, %arg15: memref<1x64x32xbf16, #tpu.memory_space<vmem>>, %arg16: memref<1x1x32xf32, #tpu.memory_space<vmem>>, %arg17: memref<1x1x32xf32, #tpu.memory_space<vmem>>, %arg18: memref<1x1x32xf32, #tpu.memory_space<vmem>>, %arg19: memref<1x8x32xf32, #tpu.memory_space<vmem>>) attributes {dimension_semantics = [#tpu.dimension_semantics<parallel>, #tpu.dimension_semantics<arbitrary>], iteration_bounds = array<i64: 2, 2>, scalar_prefetch = 0 : i64, scratch_operands = 0 : i64, tpu.core_type = #tpu.core_type<tc>, window_params = [{transform_indices = @transform_0, window_bounds = array<i64: 1, 8, 32>}, {transform_indices = @transform_1, window_bounds = array<i64: 1, 32, 32>}, {transform_indices = @transform_2, window_bounds = array<i64: 1, 32, 32>}, {transform_indices = @transform_3, window_bounds = array<i64: 1, 32, 32>}, {transform_indices = @transform_4, window_bounds = array<i64: 1, 1, 32>}, {transform_indices = @transform_5, window_bounds = array<i64: 1, 1, 32>}, {transform_indices = @transform_6, window_bounds = array<i64: 1, 1, 32>}, {transform_indices = @transform_7, window_bounds = array<i64: 1, 4, 8, 32>}, {transform_indices = @transform_8, window_bounds = array<i64: 1, 1, 32>}, {transform_indices = @transform_9, window_bounds = array<i64: 1, 1, 32>}, {transform_indices = @transform_10, window_bounds = array<i64: 1, 1, 32>}, {transform_indices = @transform_11, window_bounds = array<i64: 1, 32, 64>}, {transform_indices = @transform_12, window_bounds = array<i64: 1, 1, 64>}, {transform_indices = @transform_13, window_bounds = array<i64: 1, 64, 32>}, {transform_indices = @transform_14, window_bounds = array<i64: 1, 1, 32>}, {transform_indices = @transform_15, window_bounds = array<i64: 1, 1, 32>}, {transform_indices = @transform_16, window_bounds = array<i64: 1, 1, 32>}, {transform_indices = @transform_17, window_bounds = array<i64: 1, 8, 32>}]} {
    %c0_i32 = arith.constant 0 : i32
    %0 = arith.cmpi eq, %arg1, %c0_i32 : i32
    %1 = arith.extui %0 : i1 to i32
    %c0_i32_0 = arith.constant 0 : i32
    %2 = arith.cmpi ne, %1, %c0_i32_0 : i32
    scf.if %2 {
      %c0_66 = arith.constant 0 : index
      %c0_67 = arith.constant 0 : index
      %c0_68 = arith.constant 0 : index
      %148 = vector.load %arg2[%c0_66, %c0_67, %c0_68] : memref<1x8x32xf32, #tpu.memory_space<vmem>>, vector<1x8x32xf32>
      %c0_69 = arith.constant 0 : index
      %c0_70 = arith.constant 0 : index
      %c0_71 = arith.constant 0 : index
      %149 = vector.load %arg19[%c0_69, %c0_70, %c0_71] : memref<1x8x32xf32, #tpu.memory_space<vmem>>, vector<1x8x32xf32>
      tpu.vector_store %arg19[%c0_69, %c0_70, %c0_71], %148 {strides = array<i32>} : memref<1x8x32xf32, #tpu.memory_space<vmem>>, vector<1x8x32xf32>,
    } else {
    }
    %c0 = arith.constant 0 : index
    %c0_1 = arith.constant 0 : index
    %c0_2 = arith.constant 0 : index
    %3 = vector.load %arg19[%c0, %c0_1, %c0_2] : memref<1x8x32xf32, #tpu.memory_space<vmem>>, vector<1x8x32xf32>
    %4 = vector.shape_cast %3 : vector<1x8x32xf32> to vector<8x32xf32>
    %5 = arith.truncf %4 : vector<8x32xf32> to vector<8x32xbf16>
    %c0_3 = arith.constant 0 : index
    %c0_4 = arith.constant 0 : index
    %c0_5 = arith.constant 0 : index
    %6 = vector.load %arg3[%c0_3, %c0_4, %c0_5] : memref<1x32x32xbf16, #tpu.memory_space<vmem>>, vector<1x32x32xbf16>
    %7 = vector.shape_cast %6 : vector<1x32x32xbf16> to vector<32x32xbf16>
    %cst = arith.constant dense<0.000000e+00> : vector<8x32xf32>
    %8 = tpu.matmul %5, %7, %cst {dimension_numbers = #tpu.dot_dimension_numbers<[1], [0], [0], [1], [0, 0, 1, 1], [], []>} : vector<8x32xbf16>, vector<32x32xbf16>, vector<8x32xf32> -> vector<8x32xf32>
    %c0_6 = arith.constant 0 : index
    %c0_7 = arith.constant 0 : index
    %c0_8 = arith.constant 0 : index
    %9 = vector.load %arg6[%c0_6, %c0_7, %c0_8] : memref<1x1x32xf32, #tpu.memory_space<vmem>>, vector<1x1x32xf32>
    %10 = vector.shape_cast %9 : vector<1x1x32xf32> to vector<1x32xf32>
    %11 = vector.broadcast %10 : vector<1x32xf32> to vector<8x32xf32>
    %12 = arith.addf %8, %11 : vector<8x32xf32>
    %cst_9 = arith.constant 0.353553385 : f32
    %13 = vector.broadcast %cst_9 : f32 to vector<8x32xf32>
    %14 = arith.mulf %12, %13 : vector<8x32xf32>
    %c0_10 = arith.constant 0 : index
    %c0_11 = arith.constant 0 : index
    %c0_12 = arith.constant 0 : index
    %15 = vector.load %arg4[%c0_10, %c0_11, %c0_12] : memref<1x32x32xbf16, #tpu.memory_space<vmem>>, vector<1x32x32xbf16>
    %16 = vector.shape_cast %15 : vector<1x32x32xbf16> to vector<32x32xbf16>
    %cst_13 = arith.constant dense<0.000000e+00> : vector<8x32xf32>
    %17 = tpu.matmul %5, %16, %cst_13 {dimension_numbers = #tpu.dot_dimension_numbers<[1], [0], [0], [1], [0, 0, 1, 1], [], []>} : vector<8x32xbf16>, vector<32x32xbf16>, vector<8x32xf32> -> vector<8x32xf32>
    %c0_14 = arith.constant 0 : index
    %c0_15 = arith.constant 0 : index
    %c0_16 = arith.constant 0 : index
    %18 = vector.load %arg7[%c0_14, %c0_15, %c0_16] : memref<1x1x32xf32, #tpu.memory_space<vmem>>, vector<1x1x32xf32>
    %19 = vector.shape_cast %18 : vector<1x1x32xf32> to vector<1x32xf32>
    %20 = vector.broadcast %19 : vector<1x32xf32> to vector<8x32xf32>
    %21 = arith.addf %17, %20 : vector<8x32xf32>
    %c0_17 = arith.constant 0 : index
    %c0_18 = arith.constant 0 : index
    %c0_19 = arith.constant 0 : index
    %22 = vector.load %arg5[%c0_17, %c0_18, %c0_19] : memref<1x32x32xbf16, #tpu.memory_space<vmem>>, vector<1x32x32xbf16>
    %23 = vector.shape_cast %22 : vector<1x32x32xbf16> to vector<32x32xbf16>
    %cst_20 = arith.constant dense<0.000000e+00> : vector<8x32xf32>
    %24 = tpu.matmul %5, %23, %cst_20 {dimension_numbers = #tpu.dot_dimension_numbers<[1], [0], [0], [1], [0, 0, 1, 1], [], []>} : vector<8x32xbf16>, vector<32x32xbf16>, vector<8x32xf32> -> vector<8x32xf32>
    %c0_21 = arith.constant 0 : index
    %c0_22 = arith.constant 0 : index
    %c0_23 = arith.constant 0 : index
    %25 = vector.load %arg8[%c0_21, %c0_22, %c0_23] : memref<1x1x32xf32, #tpu.memory_space<vmem>>, vector<1x1x32xf32>
    %26 = vector.shape_cast %25 : vector<1x1x32xf32> to vector<1x32xf32>
    %27 = vector.broadcast %26 : vector<1x32xf32> to vector<8x32xf32>
    %28 = arith.addf %24, %27 : vector<8x32xf32>
    %29 = vector.shape_cast %14 : vector<8x32xf32> to vector<1x8x32xf32>
    %30 = arith.truncf %29 : vector<1x8x32xf32> to vector<1x8x32xbf16>
    %31 = vector.shape_cast %21 : vector<8x32xf32> to vector<1x8x32xf32>
    %32 = arith.truncf %31 : vector<1x8x32xf32> to vector<1x8x32xbf16>
    %33 = vector.shape_cast %28 : vector<8x32xf32> to vector<1x8x32xf32>
    %34 = arith.truncf %33 : vector<1x8x32xf32> to vector<1x8x32xbf16>
    %35 = tpu.iota {dimensions = array<i32: 0>} : vector<8x8xi32>
    %36 = tpu.iota {dimensions = array<i32: 1>} : vector<8x8xi32>
    %37 = arith.cmpi sle, %36, %35 : vector<8x8xi32>
    %cst_24 = arith.constant 0.000000e+00 : f32
    %cst_25 = arith.constant -1.000000e+30 : f32
    %38 = vector.broadcast %cst_24 : f32 to vector<8x8xf32>
    %39 = vector.broadcast %cst_25 : f32 to vector<8x8xf32>
    %40 = arith.select %37, %38, %39 : vector<8x8xi1>, vector<8x8xf32>
    %cst_26 = arith.constant 0.000000e+00 : f32
    %41 = vector.broadcast %cst_26 : f32 to vector<8x32xf32>
    %42 = vector.extract_strided_slice %30 {offsets = [0, 0, 0], sizes = [1, 8, 8], strides = [1, 1, 1]} : vector<1x8x32xbf16> to vector<1x8x8xbf16>
    %43 = vector.extract_strided_slice %32 {offsets = [0, 0, 0], sizes = [1, 8, 8], strides = [1, 1, 1]} : vector<1x8x32xbf16> to vector<1x8x8xbf16>
    "tpu.trace_start"() <{level = 10 : i32, message = "btd,bsd->bts"}> : () -> ()
    %cst_27 = arith.constant dense<0.000000e+00> : vector<1x8x8xf32>
    %44 = tpu.matmul %42, %43, %cst_27 {dimension_numbers = #tpu.dot_dimension_numbers<[2], [2], [1], [1], [0, 0, 0, 1, 1, 1], [0], [0]>} : vector<1x8x8xbf16>, vector<1x8x8xbf16>, vector<1x8x8xf32> -> vector<1x8x8xf32>
    "tpu.trace_stop"() : () -> ()
    %45 = vector.shape_cast %40 : vector<8x8xf32> to vector<1x8x8xf32>
    %46 = arith.addf %44, %45 : vector<1x8x8xf32>
    %cst_28 = arith.constant dense<0xFF800000> : vector<1x8xf32>
    %47 = vector.multi_reduction <maximumf>, %46, %cst_28 [2] : vector<1x8x8xf32> to vector<1x8xf32>
    %48 = vector.shape_cast %47 : vector<1x8xf32> to vector<1x8x1xf32>
    %49 = vector.broadcast %48 : vector<1x8x1xf32> to vector<1x8x8xf32>
    %50 = arith.subf %46, %49 : vector<1x8x8xf32>
    %51 = math.exp %50 : vector<1x8x8xf32>
    %cst_29 = arith.constant dense<0.000000e+00> : vector<1x8xf32>
    %52 = vector.multi_reduction <add>, %51, %cst_29 [2] : vector<1x8x8xf32> to vector<1x8xf32>
    %53 = vector.shape_cast %52 : vector<1x8xf32> to vector<1x8x1xf32>
    %54 = tpu.reciprocal %53 {approx = true} : vector<1x8x1xf32> -> vector<1x8x1xf32>
    %55 = vector.broadcast %54 : vector<1x8x1xf32> to vector<1x8x8xf32>
    %56 = arith.mulf %51, %55 : vector<1x8x8xf32>
    %57 = arith.truncf %56 : vector<1x8x8xf32> to vector<1x8x8xbf16>
    %58 = vector.extract_strided_slice %34 {offsets = [0, 0, 0], sizes = [1, 8, 8], strides = [1, 1, 1]} : vector<1x8x32xbf16> to vector<1x8x8xbf16>
    "tpu.trace_start"() <{level = 10 : i32, message = "bts,bsd->btd"}> : () -> ()
    %cst_30 = arith.constant dense<0.000000e+00> : vector<1x8x8xf32>
    %59 = tpu.matmul %57, %58, %cst_30 {dimension_numbers = #tpu.dot_dimension_numbers<[2], [1], [1], [2], [0, 0, 0, 1, 1, 2], [0], [0]>} : vector<1x8x8xbf16>, vector<1x8x8xbf16>, vector<1x8x8xf32> -> vector<1x8x8xf32>
    "tpu.trace_stop"() : () -> ()
    %60 = vector.shape_cast %59 : vector<1x8x8xf32> to vector<8x8xf32>
    %61 = arith.truncf %60 : vector<8x8xf32> to vector<8x8xbf16>
    %c0_31 = arith.constant 0 : index
    %c0_32 = arith.constant 0 : index
    %c0_33 = arith.constant 0 : index
    %c0_34 = arith.constant 0 : index
    %62 = vector.load %arg9[%c0_31, %c0_32, %c0_33, %c0_34] : memref<1x4x8x32xbf16, #tpu.memory_space<vmem>>, vector<1x1x8x32xbf16>
    %63 = vector.shape_cast %62 : vector<1x1x8x32xbf16> to vector<8x32xbf16>
    %cst_35 = arith.constant dense<0.000000e+00> : vector<8x32xf32>
    %64 = tpu.matmul %61, %63, %cst_35 {dimension_numbers = #tpu.dot_dimension_numbers<[1], [0], [0], [1], [0, 0, 1, 1], [], []>} : vector<8x8xbf16>, vector<8x32xbf16>, vector<8x32xf32> -> vector<8x32xf32>
    %65 = arith.addf %41, %64 : vector<8x32xf32>
    %66 = vector.extract_strided_slice %30 {offsets = [0, 0, 8], sizes = [1, 8, 8], strides = [1, 1, 1]} : vector<1x8x32xbf16> to vector<1x8x8xbf16>
    %67 = vector.extract_strided_slice %32 {offsets = [0, 0, 8], sizes = [1, 8, 8], strides = [1, 1, 1]} : vector<1x8x32xbf16> to vector<1x8x8xbf16>
    "tpu.trace_start"() <{level = 10 : i32, message = "btd,bsd->bts"}> : () -> ()
    %cst_36 = arith.constant dense<0.000000e+00> : vector<1x8x8xf32>
    %68 = tpu.matmul %66, %67, %cst_36 {dimension_numbers = #tpu.dot_dimension_numbers<[2], [2], [1], [1], [0, 0, 0, 1, 1, 1], [0], [0]>} : vector<1x8x8xbf16>, vector<1x8x8xbf16>, vector<1x8x8xf32> -> vector<1x8x8xf32>
    "tpu.trace_stop"() : () -> ()
    %69 = vector.shape_cast %40 : vector<8x8xf32> to vector<1x8x8xf32>
    %70 = arith.addf %68, %69 : vector<1x8x8xf32>
    %cst_37 = arith.constant dense<0xFF800000> : vector<1x8xf32>
    %71 = vector.multi_reduction <maximumf>, %70, %cst_37 [2] : vector<1x8x8xf32> to vector<1x8xf32>
    %72 = vector.shape_cast %71 : vector<1x8xf32> to vector<1x8x1xf32>
    %73 = vector.broadcast %72 : vector<1x8x1xf32> to vector<1x8x8xf32>
    %74 = arith.subf %70, %73 : vector<1x8x8xf32>
    %75 = math.exp %74 : vector<1x8x8xf32>
    %cst_38 = arith.constant dense<0.000000e+00> : vector<1x8xf32>
    %76 = vector.multi_reduction <add>, %75, %cst_38 [2] : vector<1x8x8xf32> to vector<1x8xf32>
    %77 = vector.shape_cast %76 : vector<1x8xf32> to vector<1x8x1xf32>
    %78 = tpu.reciprocal %77 {approx = true} : vector<1x8x1xf32> -> vector<1x8x1xf32>
    %79 = vector.broadcast %78 : vector<1x8x1xf32> to vector<1x8x8xf32>
    %80 = arith.mulf %75, %79 : vector<1x8x8xf32>
    %81 = arith.truncf %80 : vector<1x8x8xf32> to vector<1x8x8xbf16>
    %82 = vector.extract_strided_slice %34 {offsets = [0, 0, 8], sizes = [1, 8, 8], strides = [1, 1, 1]} : vector<1x8x32xbf16> to vector<1x8x8xbf16>
    "tpu.trace_start"() <{level = 10 : i32, message = "bts,bsd->btd"}> : () -> ()
    %cst_39 = arith.constant dense<0.000000e+00> : vector<1x8x8xf32>
    %83 = tpu.matmul %81, %82, %cst_39 {dimension_numbers = #tpu.dot_dimension_numbers<[2], [1], [1], [2], [0, 0, 0, 1, 1, 2], [0], [0]>} : vector<1x8x8xbf16>, vector<1x8x8xbf16>, vector<1x8x8xf32> -> vector<1x8x8xf32>
    "tpu.trace_stop"() : () -> ()
    %84 = vector.shape_cast %83 : vector<1x8x8xf32> to vector<8x8xf32>
    %85 = arith.truncf %84 : vector<8x8xf32> to vector<8x8xbf16>
    %c0_40 = arith.constant 0 : index
    %c1 = arith.constant 1 : index
    %c0_41 = arith.constant 0 : index
    %c0_42 = arith.constant 0 : index
    %86 = vector.load %arg9[%c0_40, %c1, %c0_41, %c0_42] : memref<1x4x8x32xbf16, #tpu.memory_space<vmem>>, vector<1x1x8x32xbf16>
    %87 = vector.shape_cast %86 : vector<1x1x8x32xbf16> to vector<8x32xbf16>
    %cst_43 = arith.constant dense<0.000000e+00> : vector<8x32xf32>
    %88 = tpu.matmul %85, %87, %cst_43 {dimension_numbers = #tpu.dot_dimension_numbers<[1], [0], [0], [1], [0, 0, 1, 1], [], []>} : vector<8x8xbf16>, vector<8x32xbf16>, vector<8x32xf32> -> vector<8x32xf32>
    %89 = arith.addf %65, %88 : vector<8x32xf32>
    %90 = vector.extract_strided_slice %30 {offsets = [0, 0, 16], sizes = [1, 8, 8], strides = [1, 1, 1]} : vector<1x8x32xbf16> to vector<1x8x8xbf16>
    %91 = vector.extract_strided_slice %32 {offsets = [0, 0, 16], sizes = [1, 8, 8], strides = [1, 1, 1]} : vector<1x8x32xbf16> to vector<1x8x8xbf16>
    "tpu.trace_start"() <{level = 10 : i32, message = "btd,bsd->bts"}> : () -> ()
    %cst_44 = arith.constant dense<0.000000e+00> : vector<1x8x8xf32>
    %92 = tpu.matmul %90, %91, %cst_44 {dimension_numbers = #tpu.dot_dimension_numbers<[2], [2], [1], [1], [0, 0, 0, 1, 1, 1], [0], [0]>} : vector<1x8x8xbf16>, vector<1x8x8xbf16>, vector<1x8x8xf32> -> vector<1x8x8xf32>
    "tpu.trace_stop"() : () -> ()
    %93 = vector.shape_cast %40 : vector<8x8xf32> to vector<1x8x8xf32>
    %94 = arith.addf %92, %93 : vector<1x8x8xf32>
    %cst_45 = arith.constant dense<0xFF800000> : vector<1x8xf32>
    %95 = vector.multi_reduction <maximumf>, %94, %cst_45 [2] : vector<1x8x8xf32> to vector<1x8xf32>
    %96 = vector.shape_cast %95 : vector<1x8xf32> to vector<1x8x1xf32>
    %97 = vector.broadcast %96 : vector<1x8x1xf32> to vector<1x8x8xf32>
    %98 = arith.subf %94, %97 : vector<1x8x8xf32>
    %99 = math.exp %98 : vector<1x8x8xf32>
    %cst_46 = arith.constant dense<0.000000e+00> : vector<1x8xf32>
    %100 = vector.multi_reduction <add>, %99, %cst_46 [2] : vector<1x8x8xf32> to vector<1x8xf32>
    %101 = vector.shape_cast %100 : vector<1x8xf32> to vector<1x8x1xf32>
    %102 = tpu.reciprocal %101 {approx = true} : vector<1x8x1xf32> -> vector<1x8x1xf32>
    %103 = vector.broadcast %102 : vector<1x8x1xf32> to vector<1x8x8xf32>
    %104 = arith.mulf %99, %103 : vector<1x8x8xf32>
    %105 = arith.truncf %104 : vector<1x8x8xf32> to vector<1x8x8xbf16>
    %106 = vector.extract_strided_slice %34 {offsets = [0, 0, 16], sizes = [1, 8, 8], strides = [1, 1, 1]} : vector<1x8x32xbf16> to vector<1x8x8xbf16>
    "tpu.trace_start"() <{level = 10 : i32, message = "bts,bsd->btd"}> : () -> ()
    %cst_47 = arith.constant dense<0.000000e+00> : vector<1x8x8xf32>
    %107 = tpu.matmul %105, %106, %cst_47 {dimension_numbers = #tpu.dot_dimension_numbers<[2], [1], [1], [2], [0, 0, 0, 1, 1, 2], [0], [0]>} : vector<1x8x8xbf16>, vector<1x8x8xbf16>, vector<1x8x8xf32> -> vector<1x8x8xf32>
    "tpu.trace_stop"() : () -> ()
    %108 = vector.shape_cast %107 : vector<1x8x8xf32> to vector<8x8xf32>
    %109 = arith.truncf %108 : vector<8x8xf32> to vector<8x8xbf16>
    %c0_48 = arith.constant 0 : index
    %c2 = arith.constant 2 : index
    %c0_49 = arith.constant 0 : index
    %c0_50 = arith.constant 0 : index
    %110 = vector.load %arg9[%c0_48, %c2, %c0_49, %c0_50] : memref<1x4x8x32xbf16, #tpu.memory_space<vmem>>, vector<1x1x8x32xbf16>
    %111 = vector.shape_cast %110 : vector<1x1x8x32xbf16> to vector<8x32xbf16>
    %cst_51 = arith.constant dense<0.000000e+00> : vector<8x32xf32>
    %112 = tpu.matmul %109, %111, %cst_51 {dimension_numbers = #tpu.dot_dimension_numbers<[1], [0], [0], [1], [0, 0, 1, 1], [], []>} : vector<8x8xbf16>, vector<8x32xbf16>, vector<8x32xf32> -> vector<8x32xf32>
    %113 = arith.addf %89, %112 : vector<8x32xf32>
    %114 = vector.extract_strided_slice %30 {offsets = [0, 0, 24], sizes = [1, 8, 8], strides = [1, 1, 1]} : vector<1x8x32xbf16> to vector<1x8x8xbf16>
    %115 = vector.extract_strided_slice %32 {offsets = [0, 0, 24], sizes = [1, 8, 8], strides = [1, 1, 1]} : vector<1x8x32xbf16> to vector<1x8x8xbf16>
    "tpu.trace_start"() <{level = 10 : i32, message = "btd,bsd->bts"}> : () -> ()
    %cst_52 = arith.constant dense<0.000000e+00> : vector<1x8x8xf32>
    %116 = tpu.matmul %114, %115, %cst_52 {dimension_numbers = #tpu.dot_dimension_numbers<[2], [2], [1], [1], [0, 0, 0, 1, 1, 1], [0], [0]>} : vector<1x8x8xbf16>, vector<1x8x8xbf16>, vector<1x8x8xf32> -> vector<1x8x8xf32>
    "tpu.trace_stop"() : () -> ()
    %117 = vector.shape_cast %40 : vector<8x8xf32> to vector<1x8x8xf32>
    %118 = arith.addf %116, %117 : vector<1x8x8xf32>
    %cst_53 = arith.constant dense<0xFF800000> : vector<1x8xf32>
    %119 = vector.multi_reduction <maximumf>, %118, %cst_53 [2] : vector<1x8x8xf32> to vector<1x8xf32>
    %120 = vector.shape_cast %119 : vector<1x8xf32> to vector<1x8x1xf32>
    %121 = vector.broadcast %120 : vector<1x8x1xf32> to vector<1x8x8xf32>
    %122 = arith.subf %118, %121 : vector<1x8x8xf32>
    %123 = math.exp %122 : vector<1x8x8xf32>
    %cst_54 = arith.constant dense<0.000000e+00> : vector<1x8xf32>
    %124 = vector.multi_reduction <add>, %123, %cst_54 [2] : vector<1x8x8xf32> to vector<1x8xf32>
    %125 = vector.shape_cast %124 : vector<1x8xf32> to vector<1x8x1xf32>
    %126 = tpu.reciprocal %125 {approx = true} : vector<1x8x1xf32> -> vector<1x8x1xf32>
    %127 = vector.broadcast %126 : vector<1x8x1xf32> to vector<1x8x8xf32>
    %128 = arith.mulf %123, %127 : vector<1x8x8xf32>
    %129 = arith.truncf %128 : vector<1x8x8xf32> to vector<1x8x8xbf16>
    %130 = vector.extract_strided_slice %34 {offsets = [0, 0, 24], sizes = [1, 8, 8], strides = [1, 1, 1]} : vector<1x8x32xbf16> to vector<1x8x8xbf16>
    "tpu.trace_start"() <{level = 10 : i32, message = "bts,bsd->btd"}> : () -> ()
    %cst_55 = arith.constant dense<0.000000e+00> : vector<1x8x8xf32>
    %131 = tpu.matmul %129, %130, %cst_55 {dimension_numbers = #tpu.dot_dimension_numbers<[2], [1], [1], [2], [0, 0, 0, 1, 1, 2], [0], [0]>} : vector<1x8x8xbf16>, vector<1x8x8xbf16>, vector<1x8x8xf32> -> vector<1x8x8xf32>
    "tpu.trace_stop"() : () -> ()
    %132 = vector.shape_cast %131 : vector<1x8x8xf32> to vector<8x8xf32>
    %133 = arith.truncf %132 : vector<8x8xf32> to vector<8x8xbf16>
    %c0_56 = arith.constant 0 : index
    %c3 = arith.constant 3 : index
    %c0_57 = arith.constant 0 : index
    %c0_58 = arith.constant 0 : index
    %134 = vector.load %arg9[%c0_56, %c3, %c0_57, %c0_58] : memref<1x4x8x32xbf16, #tpu.memory_space<vmem>>, vector<1x1x8x32xbf16>
    %135 = vector.shape_cast %134 : vector<1x1x8x32xbf16> to vector<8x32xbf16>
    %cst_59 = arith.constant dense<0.000000e+00> : vector<8x32xf32>
    %136 = tpu.matmul %133, %135, %cst_59 {dimension_numbers = #tpu.dot_dimension_numbers<[1], [0], [0], [1], [0, 0, 1, 1], [], []>} : vector<8x8xbf16>, vector<8x32xbf16>, vector<8x32xf32> -> vector<8x32xf32>
    %137 = arith.addf %113, %136 : vector<8x32xf32>
    %c0_60 = arith.constant 0 : index
    %c0_61 = arith.constant 0 : index
    %c0_62 = arith.constant 0 : index
    %138 = vector.load %arg10[%c0_60, %c0_61, %c0_62] : memref<1x1x32xf32, #tpu.memory_space<vmem>>, vector<1x1x32xf32>
    %139 = vector.shape_cast %138 : vector<1x1x32xf32> to vector<1x32xf32>
    %140 = vector.broadcast %139 : vector<1x32xf32> to vector<8x32xf32>
    %141 = arith.addf %137, %140 : vector<8x32xf32>
    %c1_i32 = arith.constant 1 : i32
    %142 = arith.cmpi slt, %arg1, %c1_i32 : i32
    %143 = arith.extui %142 : i1 to i32
    %c0_i32_63 = arith.constant 0 : i32
    %144 = arith.cmpi ne, %143, %c0_i32_63 : i32
    scf.if %144 {
      %148 = arith.addf %4, %141 : vector<8x32xf32>
      %c0_66 = arith.constant 0 : index
      %c0_67 = arith.constant 0 : index
      %c0_68 = arith.constant 0 : index
      %149 = vector.load %arg11[%c0_66, %c0_67, %c0_68] : memref<1x1x32xf32, #tpu.memory_space<vmem>>, vector<1x1x32xf32>
      %150 = vector.shape_cast %149 : vector<1x1x32xf32> to vector<1x32xf32>
      %c0_69 = arith.constant 0 : index
      %c0_70 = arith.constant 0 : index
      %c0_71 = arith.constant 0 : index
      %151 = vector.load %arg12[%c0_69, %c0_70, %c0_71] : memref<1x1x32xf32, #tpu.memory_space<vmem>>, vector<1x1x32xf32>
      %152 = vector.shape_cast %151 : vector<1x1x32xf32> to vector<1x32xf32>
      %cst_72 = arith.constant dense<0.000000e+00> : vector<8xf32>
      %153 = vector.multi_reduction <add>, %148, %cst_72 [1] : vector<8x32xf32> to vector<8xf32>
      %154 = vector.shape_cast %153 : vector<8xf32> to vector<8x1xf32>
      %cst_73 = arith.constant 3.200000e+01 : f32
      %155 = vector.broadcast %cst_73 : f32 to vector<8x1xf32>
      %156 = arith.divf %154, %155 : vector<8x1xf32>
      %157 = vector.broadcast %156 : vector<8x1xf32> to vector<8x32xf32>
      %158 = arith.subf %148, %157 : vector<8x32xf32>
      %159 = arith.mulf %158, %158 : vector<8x32xf32>
      %cst_74 = arith.constant dense<0.000000e+00> : vector<8xf32>
      %160 = vector.multi_reduction <add>, %159, %cst_74 [1] : vector<8x32xf32> to vector<8xf32>
      %161 = vector.shape_cast %160 : vector<8xf32> to vector<8x1xf32>
      %cst_75 = arith.constant 3.200000e+01 : f32
      %162 = vector.broadcast %cst_75 : f32 to vector<8x1xf32>
      %163 = arith.divf %161, %162 : vector<8x1xf32>
      %164 = vector.broadcast %156 : vector<8x1xf32> to vector<8x32xf32>
      %165 = arith.subf %148, %164 : vector<8x32xf32>
      %cst_76 = arith.constant 9.99999974E-6 : f32
      %166 = vector.broadcast %cst_76 : f32 to vector<8x1xf32>
      %167 = arith.addf %163, %166 : vector<8x1xf32>
      %168 = math.rsqrt %167 : vector<8x1xf32>
      %169 = vector.broadcast %168 : vector<8x1xf32> to vector<8x32xf32>
      %170 = arith.mulf %165, %169 : vector<8x32xf32>
      %171 = vector.broadcast %150 : vector<1x32xf32> to vector<8x32xf32>
      %172 = arith.mulf %170, %171 : vector<8x32xf32>
      %173 = vector.broadcast %152 : vector<1x32xf32> to vector<8x32xf32>
      %174 = arith.addf %172, %173 : vector<8x32xf32>
      %175 = arith.truncf %174 : vector<8x32xf32> to vector<8x32xbf16>
      %c0_77 = arith.constant 0 : index
      %c0_78 = arith.constant 0 : index
      %c0_79 = arith.constant 0 : index
      %176 = vector.load %arg13[%c0_77, %c0_78, %c0_79] : memref<1x32x64xbf16, #tpu.memory_space<vmem>>, vector<1x32x64xbf16>
      %177 = vector.shape_cast %176 : vector<1x32x64xbf16> to vector<32x64xbf16>
      %cst_80 = arith.constant dense<0.000000e+00> : vector<8x64xf32>
      %178 = tpu.matmul %175, %177, %cst_80 {dimension_numbers = #tpu.dot_dimension_numbers<[1], [0], [0], [1], [0, 0, 1, 1], [], []>} : vector<8x32xbf16>, vector<32x64xbf16>, vector<8x64xf32> -> vector<8x64xf32>
      %c0_81 = arith.constant 0 : index
      %c0_82 = arith.constant 0 : index
      %c0_83 = arith.constant 0 : index
      %179 = vector.load %arg14[%c0_81, %c0_82, %c0_83] : memref<1x1x64xf32, #tpu.memory_space<vmem>>, vector<1x1x64xf32>
      %180 = vector.shape_cast %179 : vector<1x1x64xf32> to vector<1x64xf32>
      %181 = vector.broadcast %180 : vector<1x64xf32> to vector<8x64xf32>
      %182 = arith.addf %178, %181 : vector<8x64xf32>
      %cst_84 = arith.constant 0.000000e+00 : f32
      %183 = vector.broadcast %cst_84 : f32 to vector<8x64xf32>
      %184 = arith.maximumf %182, %183 : vector<8x64xf32>
      %185 = arith.truncf %184 : vector<8x64xf32> to vector<8x64xbf16>
      %c0_85 = arith.constant 0 : index
      %c0_86 = arith.constant 0 : index
      %c0_87 = arith.constant 0 : index
      %186 = vector.load %arg15[%c0_85, %c0_86, %c0_87] : memref<1x64x32xbf16, #tpu.memory_space<vmem>>, vector<1x64x32xbf16>
      %187 = vector.shape_cast %186 : vector<1x64x32xbf16> to vector<64x32xbf16>
      %cst_88 = arith.constant dense<0.000000e+00> : vector<8x32xf32>
      %188 = tpu.matmul %185, %187, %cst_88 {dimension_numbers = #tpu.dot_dimension_numbers<[1], [0], [0], [1], [0, 0, 1, 1], [], []>} : vector<8x64xbf16>, vector<64x32xbf16>, vector<8x32xf32> -> vector<8x32xf32>
      %c0_89 = arith.constant 0 : index
      %c0_90 = arith.constant 0 : index
      %c0_91 = arith.constant 0 : index
      %189 = vector.load %arg16[%c0_89, %c0_90, %c0_91] : memref<1x1x32xf32, #tpu.memory_space<vmem>>, vector<1x1x32xf32>
      %190 = vector.shape_cast %189 : vector<1x1x32xf32> to vector<1x32xf32>
      %191 = vector.broadcast %190 : vector<1x32xf32> to vector<8x32xf32>
      %192 = arith.addf %188, %191 : vector<8x32xf32>
      %193 = arith.addf %174, %192 : vector<8x32xf32>
      %c0_92 = arith.constant 0 : index
      %c0_93 = arith.constant 0 : index
      %c0_94 = arith.constant 0 : index
      %194 = vector.load %arg17[%c0_92, %c0_93, %c0_94] : memref<1x1x32xf32, #tpu.memory_space<vmem>>, vector<1x1x32xf32>
      %195 = vector.shape_cast %194 : vector<1x1x32xf32> to vector<1x32xf32>
      %c0_95 = arith.constant 0 : index
      %c0_96 = arith.constant 0 : index
      %c0_97 = arith.constant 0 : index
      %196 = vector.load %arg18[%c0_95, %c0_96, %c0_97] : memref<1x1x32xf32, #tpu.memory_space<vmem>>, vector<1x1x32xf32>
      %197 = vector.shape_cast %196 : vector<1x1x32xf32> to vector<1x32xf32>
      %cst_98 = arith.constant dense<0.000000e+00> : vector<8xf32>
      %198 = vector.multi_reduction <add>, %193, %cst_98 [1] : vector<8x32xf32> to vector<8xf32>
      %199 = vector.shape_cast %198 : vector<8xf32> to vector<8x1xf32>
      %cst_99 = arith.constant 3.200000e+01 : f32
      %200 = vector.broadcast %cst_99 : f32 to vector<8x1xf32>
      %201 = arith.divf %199, %200 : vector<8x1xf32>
      %202 = vector.broadcast %201 : vector<8x1xf32> to vector<8x32xf32>
      %203 = arith.subf %193, %202 : vector<8x32xf32>
      %204 = arith.mulf %203, %203 : vector<8x32xf32>
      %cst_100 = arith.constant dense<0.000000e+00> : vector<8xf32>
      %205 = vector.multi_reduction <add>, %204, %cst_100 [1] : vector<8x32xf32> to vector<8xf32>
      %206 = vector.shape_cast %205 : vector<8xf32> to vector<8x1xf32>
      %cst_101 = arith.constant 3.200000e+01 : f32
      %207 = vector.broadcast %cst_101 : f32 to vector<8x1xf32>
      %208 = arith.divf %206, %207 : vector<8x1xf32>
      %209 = vector.broadcast %201 : vector<8x1xf32> to vector<8x32xf32>
      %210 = arith.subf %193, %209 : vector<8x32xf32>
      %cst_102 = arith.constant 9.99999974E-6 : f32
      %211 = vector.broadcast %cst_102 : f32 to vector<8x1xf32>
      %212 = arith.addf %208, %211 : vector<8x1xf32>
      %213 = math.rsqrt %212 : vector<8x1xf32>
      %214 = vector.broadcast %213 : vector<8x1xf32> to vector<8x32xf32>
      %215 = arith.mulf %210, %214 : vector<8x32xf32>
      %216 = vector.broadcast %195 : vector<1x32xf32> to vector<8x32xf32>
      %217 = arith.mulf %215, %216 : vector<8x32xf32>
      %218 = vector.broadcast %197 : vector<1x32xf32> to vector<8x32xf32>
      %219 = arith.addf %217, %218 : vector<8x32xf32>
      %220 = vector.shape_cast %219 : vector<8x32xf32> to vector<1x8x32xf32>
      %c0_103 = arith.constant 0 : index
      %c0_104 = arith.constant 0 : index
      %c0_105 = arith.constant 0 : index
      %221 = vector.load %arg19[%c0_103, %c0_104, %c0_105] : memref<1x8x32xf32, #tpu.memory_space<vmem>>, vector<1x8x32xf32>
      tpu.vector_store %arg19[%c0_103, %c0_104, %c0_105], %220 {strides = array<i32>} : memref<1x8x32xf32, #tpu.memory_space<vmem>>, vector<1x8x32xf32>,
    } else {
    }
    %c1_i32_64 = arith.constant 1 : i32
    %145 = arith.cmpi eq, %arg1, %c1_i32_64 : i32
    %146 = arith.extui %145 : i1 to i32
    %c0_i32_65 = arith.constant 0 : i32
    %147 = arith.cmpi ne, %146, %c0_i32_65 : i32
    scf.if %147 {
      %148 = vector.extract_strided_slice %3 {offsets = [0, 7, 0], sizes = [1, 1, 32], strides = [1, 1, 1]} : vector<1x8x32xf32> to vector<1x1x32xf32>
      %149 = vector.shape_cast %148 : vector<1x1x32xf32> to vector<1x32xf32>
      %150 = vector.shape_cast %141 : vector<8x32xf32> to vector<1x8x32xf32>
      %151 = vector.extract_strided_slice %150 {offsets = [0, 7, 0], sizes = [1, 1, 32], strides = [1, 1, 1]} : vector<1x8x32xf32> to vector<1x1x32xf32>
      %152 = vector.shape_cast %151 : vector<1x1x32xf32> to vector<1x32xf32>
      %153 = arith.addf %149, %152 : vector<1x32xf32>
      %c0_66 = arith.constant 0 : index
      %c0_67 = arith.constant 0 : index
      %c0_68 = arith.constant 0 : index
      %154 = vector.load %arg11[%c0_66, %c0_67, %c0_68] : memref<1x1x32xf32, #tpu.memory_space<vmem>>, vector<1x1x32xf32>
      %155 = vector.shape_cast %154 : vector<1x1x32xf32> to vector<1x32xf32>
      %c0_69 = arith.constant 0 : index
      %c0_70 = arith.constant 0 : index
      %c0_71 = arith.constant 0 : index
      %156 = vector.load %arg12[%c0_69, %c0_70, %c0_71] : memref<1x1x32xf32, #tpu.memory_space<vmem>>, vector<1x1x32xf32>
      %157 = vector.shape_cast %156 : vector<1x1x32xf32> to vector<1x32xf32>
      %cst_72 = arith.constant dense<0.000000e+00> : vector<1xf32>
      %158 = vector.multi_reduction <add>, %153, %cst_72 [1] : vector<1x32xf32> to vector<1xf32>
      %159 = vector.shape_cast %158 : vector<1xf32> to vector<1x1xf32>
      %cst_73 = arith.constant 3.200000e+01 : f32
      %160 = vector.broadcast %cst_73 : f32 to vector<1x1xf32>
      %161 = arith.divf %159, %160 : vector<1x1xf32>
      %162 = vector.broadcast %161 : vector<1x1xf32> to vector<1x32xf32>
      %163 = arith.subf %153, %162 : vector<1x32xf32>
      %164 = arith.mulf %163, %163 : vector<1x32xf32>
      %cst_74 = arith.constant dense<0.000000e+00> : vector<1xf32>
      %165 = vector.multi_reduction <add>, %164, %cst_74 [1] : vector<1x32xf32> to vector<1xf32>
      %166 = vector.shape_cast %165 : vector<1xf32> to vector<1x1xf32>
      %cst_75 = arith.constant 3.200000e+01 : f32
      %167 = vector.broadcast %cst_75 : f32 to vector<1x1xf32>
      %168 = arith.divf %166, %167 : vector<1x1xf32>
      %169 = vector.broadcast %161 : vector<1x1xf32> to vector<1x32xf32>
      %170 = arith.subf %153, %169 : vector<1x32xf32>
      %cst_76 = arith.constant 9.99999974E-6 : f32
      %171 = vector.broadcast %cst_76 : f32 to vector<1x1xf32>
      %172 = arith.addf %168, %171 : vector<1x1xf32>
      %173 = math.rsqrt %172 : vector<1x1xf32>
      %174 = vector.broadcast %173 : vector<1x1xf32> to vector<1x32xf32>
      %175 = arith.mulf %170, %174 : vector<1x32xf32>
      %176 = arith.mulf %175, %155 : vector<1x32xf32>
      %177 = arith.addf %176, %157 : vector<1x32xf32>
      %178 = arith.truncf %177 : vector<1x32xf32> to vector<1x32xbf16>
      %c0_77 = arith.constant 0 : index
      %c0_78 = arith.constant 0 : index
      %c0_79 = arith.constant 0 : index
      %179 = vector.load %arg13[%c0_77, %c0_78, %c0_79] : memref<1x32x64xbf16, #tpu.memory_space<vmem>>, vector<1x32x64xbf16>
      %180 = vector.shape_cast %179 : vector<1x32x64xbf16> to vector<32x64xbf16>
      %cst_80 = arith.constant dense<0.000000e+00> : vector<1x64xf32>
      %181 = tpu.matmul %178, %180, %cst_80 {dimension_numbers = #tpu.dot_dimension_numbers<[1], [0], [0], [1], [0, 0, 1, 1], [], []>} : vector<1x32xbf16>, vector<32x64xbf16>, vector<1x64xf32> -> vector<1x64xf32>
      %c0_81 = arith.constant 0 : index
      %c0_82 = arith.constant 0 : index
      %c0_83 = arith.constant 0 : index
      %182 = vector.load %arg14[%c0_81, %c0_82, %c0_83] : memref<1x1x64xf32, #tpu.memory_space<vmem>>, vector<1x1x64xf32>
      %183 = vector.shape_cast %182 : vector<1x1x64xf32> to vector<1x64xf32>
      %184 = arith.addf %181, %183 : vector<1x64xf32>
      %cst_84 = arith.constant 0.000000e+00 : f32
      %185 = vector.broadcast %cst_84 : f32 to vector<1x64xf32>
      %186 = arith.maximumf %184, %185 : vector<1x64xf32>
      %187 = arith.truncf %186 : vector<1x64xf32> to vector<1x64xbf16>
      %c0_85 = arith.constant 0 : index
      %c0_86 = arith.constant 0 : index
      %c0_87 = arith.constant 0 : index
      %188 = vector.load %arg15[%c0_85, %c0_86, %c0_87] : memref<1x64x32xbf16, #tpu.memory_space<vmem>>, vector<1x64x32xbf16>
      %189 = vector.shape_cast %188 : vector<1x64x32xbf16> to vector<64x32xbf16>
      %cst_88 = arith.constant dense<0.000000e+00> : vector<1x32xf32>
      %190 = tpu.matmul %187, %189, %cst_88 {dimension_numbers = #tpu.dot_dimension_numbers<[1], [0], [0], [1], [0, 0, 1, 1], [], []>} : vector<1x64xbf16>, vector<64x32xbf16>, vector<1x32xf32> -> vector<1x32xf32>
      %c0_89 = arith.constant 0 : index
      %c0_90 = arith.constant 0 : index
      %c0_91 = arith.constant 0 : index
      %191 = vector.load %arg16[%c0_89, %c0_90, %c0_91] : memref<1x1x32xf32, #tpu.memory_space<vmem>>, vector<1x1x32xf32>
      %192 = vector.shape_cast %191 : vector<1x1x32xf32> to vector<1x32xf32>
      %193 = arith.addf %190, %192 : vector<1x32xf32>
      %194 = arith.addf %177, %193 : vector<1x32xf32>
      %c0_92 = arith.constant 0 : index
      %c0_93 = arith.constant 0 : index
      %c0_94 = arith.constant 0 : index
      %195 = vector.load %arg17[%c0_92, %c0_93, %c0_94] : memref<1x1x32xf32, #tpu.memory_space<vmem>>, vector<1x1x32xf32>
      %196 = vector.shape_cast %195 : vector<1x1x32xf32> to vector<1x32xf32>
      %c0_95 = arith.constant 0 : index
      %c0_96 = arith.constant 0 : index
      %c0_97 = arith.constant 0 : index
      %197 = vector.load %arg18[%c0_95, %c0_96, %c0_97] : memref<1x1x32xf32, #tpu.memory_space<vmem>>, vector<1x1x32xf32>
      %198 = vector.shape_cast %197 : vector<1x1x32xf32> to vector<1x32xf32>
      %cst_98 = arith.constant dense<0.000000e+00> : vector<1xf32>
      %199 = vector.multi_reduction <add>, %194, %cst_98 [1] : vector<1x32xf32> to vector<1xf32>
      %200 = vector.shape_cast %199 : vector<1xf32> to vector<1x1xf32>
      %cst_99 = arith.constant 3.200000e+01 : f32
      %201 = vector.broadcast %cst_99 : f32 to vector<1x1xf32>
      %202 = arith.divf %200, %201 : vector<1x1xf32>
      %203 = vector.broadcast %202 : vector<1x1xf32> to vector<1x32xf32>
      %204 = arith.subf %194, %203 : vector<1x32xf32>
      %205 = arith.mulf %204, %204 : vector<1x32xf32>
      %cst_100 = arith.constant dense<0.000000e+00> : vector<1xf32>
      %206 = vector.multi_reduction <add>, %205, %cst_100 [1] : vector<1x32xf32> to vector<1xf32>
      %207 = vector.shape_cast %206 : vector<1xf32> to vector<1x1xf32>
      %cst_101 = arith.constant 3.200000e+01 : f32
      %208 = vector.broadcast %cst_101 : f32 to vector<1x1xf32>
      %209 = arith.divf %207, %208 : vector<1x1xf32>
      %210 = vector.broadcast %202 : vector<1x1xf32> to vector<1x32xf32>
      %211 = arith.subf %194, %210 : vector<1x32xf32>
      %cst_102 = arith.constant 9.99999974E-6 : f32
      %212 = vector.broadcast %cst_102 : f32 to vector<1x1xf32>
      %213 = arith.addf %209, %212 : vector<1x1xf32>
      %214 = math.rsqrt %213 : vector<1x1xf32>
      %215 = vector.broadcast %214 : vector<1x1xf32> to vector<1x32xf32>
      %216 = arith.mulf %211, %215 : vector<1x32xf32>
      %217 = arith.mulf %216, %196 : vector<1x32xf32>
      %218 = arith.addf %217, %198 : vector<1x32xf32>
      %219 = vector.shape_cast %218 : vector<1x32xf32> to vector<1x1x32xf32>
      %c0_103 = arith.constant 0 : index
      %c7 = arith.constant 7 : index
      %c0_104 = arith.constant 0 : index
      %220 = vector.load %arg19[%c0_103, %c7, %c0_104] : memref<1x8x32xf32, #tpu.memory_space<vmem>>, vector<1x1x32xf32>
      tpu.vector_store %arg19[%c0_103, %c7, %c0_104], %219 {strides = array<i32>} : memref<1x8x32xf32, #tpu.memory_space<vmem>>, vector<1x1x32xf32>,
    } else {
    }
    return
  }
  func.func @transform_0(%arg0: i32, %arg1: i32) -> (i32, i32, i32) {
    %c0_i32 = arith.constant 0 : i32
    %c0_i32_0 = arith.constant 0 : i32
    %c0_i32_1 = arith.constant 0 : i32
    return %arg0, %c0_i32, %c0_i32_0 : i32, i32, i32
  }
  func.func @transform_1(%arg0: i32, %arg1: i32) -> (i32, i32, i32) {
    %c0_i32 = arith.constant 0 : i32
    %c0_i32_0 = arith.constant 0 : i32
    %c0_i32_1 = arith.constant 0 : i32
    return %arg1, %c0_i32, %c0_i32_0 : i32, i32, i32
  }
  func.func @transform_2(%arg0: i32, %arg1: i32) -> (i32, i32, i32) {
    %c0_i32 = arith.constant 0 : i32
    %c0_i32_0 = arith.constant 0 : i32
    %c0_i32_1 = arith.constant 0 : i32
    return %arg1, %c0_i32, %c0_i32_0 : i32, i32, i32
  }
  func.func @transform_3(%arg0: i32, %arg1: i32) -> (i32, i32, i32) {
    %c0_i32 = arith.constant 0 : i32
    %c0_i32_0 = arith.constant 0 : i32
    %c0_i32_1 = arith.constant 0 : i32
    return %arg1, %c0_i32, %c0_i32_0 : i32, i32, i32
  }
  func.func @transform_4(%arg0: i32, %arg1: i32) -> (i32, i32, i32) {
    %c0_i32 = arith.constant 0 : i32
    %c0_i32_0 = arith.constant 0 : i32
    %c0_i32_1 = arith.constant 0 : i32
    return %arg1, %c0_i32, %c0_i32_0 : i32, i32, i32
  }
  func.func @transform_5(%arg0: i32, %arg1: i32) -> (i32, i32, i32) {
    %c0_i32 = arith.constant 0 : i32
    %c0_i32_0 = arith.constant 0 : i32
    %c0_i32_1 = arith.constant 0 : i32
    return %arg1, %c0_i32, %c0_i32_0 : i32, i32, i32
  }
  func.func @transform_6(%arg0: i32, %arg1: i32) -> (i32, i32, i32) {
    %c0_i32 = arith.constant 0 : i32
    %c0_i32_0 = arith.constant 0 : i32
    %c0_i32_1 = arith.constant 0 : i32
    return %arg1, %c0_i32, %c0_i32_0 : i32, i32, i32
  }
  func.func @transform_7(%arg0: i32, %arg1: i32) -> (i32, i32, i32, i32) {
    %c0_i32 = arith.constant 0 : i32
    %c0_i32_0 = arith.constant 0 : i32
    %c0_i32_1 = arith.constant 0 : i32
    %c0_i32_2 = arith.constant 0 : i32
    return %arg1, %c0_i32, %c0_i32_0, %c0_i32_1 : i32, i32, i32, i32
  }
  func.func @transform_8(%arg0: i32, %arg1: i32) -> (i32, i32, i32) {
    %c0_i32 = arith.constant 0 : i32
    %c0_i32_0 = arith.constant 0 : i32
    %c0_i32_1 = arith.constant 0 : i32
    return %arg1, %c0_i32, %c0_i32_0 : i32, i32, i32
  }
  func.func @transform_9(%arg0: i32, %arg1: i32) -> (i32, i32, i32) {
    %c0_i32 = arith.constant 0 : i32
    %c0_i32_0 = arith.constant 0 : i32
    %c0_i32_1 = arith.constant 0 : i32
    return %arg1, %c0_i32, %c0_i32_0 : i32, i32, i32
  }
  func.func @transform_10(%arg0: i32, %arg1: i32) -> (i32, i32, i32) {
    %c0_i32 = arith.constant 0 : i32
    %c0_i32_0 = arith.constant 0 : i32
    %c0_i32_1 = arith.constant 0 : i32
    return %arg1, %c0_i32, %c0_i32_0 : i32, i32, i32
  }
  func.func @transform_11(%arg0: i32, %arg1: i32) -> (i32, i32, i32) {
    %c0_i32 = arith.constant 0 : i32
    %c0_i32_0 = arith.constant 0 : i32
    %c0_i32_1 = arith.constant 0 : i32
    return %arg1, %c0_i32, %c0_i32_0 : i32, i32, i32
  }
  func.func @transform_12(%arg0: i32, %arg1: i32) -> (i32, i32, i32) {
    %c0_i32 = arith.constant 0 : i32
    %c0_i32_0 = arith.constant 0 : i32
    %c0_i32_1 = arith.constant 0 : i32
    return %arg1, %c0_i32, %c0_i32_0 : i32, i32, i32
  }
  func.func @transform_13(%arg0: i32, %arg1: i32) -> (i32, i32, i32) {
    %c0_i32 = arith.constant 0 : i32
    %c0_i32_0 = arith.constant 0 : i32
    %c0_i32_1 = arith.constant 0 : i32
    return %arg1, %c0_i32, %c0_i32_0 : i32, i32, i32
  }
  func.func @transform_14(%arg0: i32, %arg1: i32) -> (i32, i32, i32) {
    %c0_i32 = arith.constant 0 : i32
    %c0_i32_0 = arith.constant 0 : i32
    %c0_i32_1 = arith.constant 0 : i32
    return %arg1, %c0_i32, %c0_i32_0 : i32, i32, i32
  }
  func.func @transform_15(%arg0: i32, %arg1: i32) -> (i32, i32, i32) {
    %c0_i32 = arith.constant 0 : i32
    %c0_i32_0 = arith.constant 0 : i32
    %c0_i32_1 = arith.constant 0 : i32
    return %arg1, %c0_i32, %c0_i32_0 : i32, i32, i32
  }
  func.func @transform_16(%arg0: i32, %arg1: i32) -> (i32, i32, i32) {
    %c0_i32 = arith.constant 0 : i32
    %c0_i32_0 = arith.constant 0 : i32
    %c0_i32_1 = arith.constant 0 : i32
    return %arg1, %c0_i32, %c0_i32_0 : i32, i32, i32
  }
  func.func @transform_17(%arg0: i32, %arg1: i32) -> (i32, i32, i32) {
    %c0_i32 = arith.constant 0 : i32
    %c0_i32_0 = arith.constant 0 : i32
    %c0_i32_1 = arith.constant 0 : i32
    return %arg0, %c0_i32, %c0_i32_0 : i32, i32, i32
  }
}

</mosaic_0001>

<llo_original>
// kernel: tpu_custom_call.1
$region0: #{tpu_custom_call.1}
  #allocation0 [shape = 'u32[]', space=smem, size = 0x4, offset = 0x4, fixed_abs, tag = 'smem constant byte address 0x4 - core index']
  #allocation1 [shape = 'u32[144,128]{1,0:T(1,128)}', space=vmem, size = 0x12000, scoped, tag = 'internal scratch']
  %s0 = inlined_call_operand.hbm [shape: f32[2,8,32], index: 0, kind: input, shape index: {}, may-alias: {0,17}]
  %s1 = inlined_call_operand.vmem [shape: bf16[2,32,32], index: 1, kind: input, shape index: {}]
  %s2 = inlined_call_operand.vmem [shape: bf16[2,32,32], index: 2, kind: input, shape index: {}]
  %s3 = inlined_call_operand.vmem [shape: bf16[2,32,32], index: 3, kind: input, shape index: {}]
  %s4 = inlined_call_operand.vmem [shape: f32[2,1,32], index: 4, kind: input, shape index: {}]
  %s5 = inlined_call_operand.hbm [shape: f32[2,1,32], index: 5, kind: input, shape index: {}]
  %s6 = inlined_call_operand.hbm [shape: f32[2,1,32], index: 6, kind: input, shape index: {}]
  %s7 = inlined_call_operand.hbm [shape: bf16[2,4,8,32], index: 7, kind: input, shape index: {}]
  %s8 = inlined_call_operand.hbm [shape: f32[2,1,32], index: 8, kind: input, shape index: {}]
  %s9 = inlined_call_operand.hbm [shape: f32[2,1,32], index: 9, kind: input, shape index: {}]
  %s10 = inlined_call_operand.vmem [shape: f32[2,1,32], index: 10, kind: input, shape index: {}]
  %s11 = inlined_call_operand.vmem [shape: bf16[2,32,64], index: 11, kind: input, shape index: {}]
  %s12 = inlined_call_operand.vmem [shape: f32[2,1,64], index: 12, kind: input, shape index: {}]
  %s13 = inlined_call_operand.vmem [shape: bf16[2,64,32], index: 13, kind: input, shape index: {}]
  %s14 = inlined_call_operand.vmem [shape: f32[2,1,32], index: 14, kind: input, shape index: {}]
  %s15 = inlined_call_operand.vmem [shape: f32[2,1,32], index: 15, kind: input, shape index: {}]
  %s16 = inlined_call_operand.vmem [shape: f32[2,1,32], index: 16, kind: input, shape index: {}]
  %s17 = inlined_call_operand.hbm [shape: f32[2,8,32], index: 17, kind: output, shape index: {}, may-alias: {0,17}]
  %s18 = sld [smem:[#allocation0]]
  $region137: #{tpu_custom_call.1} parent=0
    _
  %s20 = ssub.s32 1, %s18
  %s21 = scalar_select 0, %s20, %s18
  $region1: #{tpu_custom_call.1} parent=0
    #allocation2 [shape = 'u8[8192]{0}', space=vmem, size = 0x2000, scoped, tag = 'input window, operand 0']
    #allocation3 [shape = 's32[2]{0}', space=sflag, size = 0x8, scoped, tag = 'scoped memory for tpu_custom_call.1']
    #allocation4 [shape = 's32[2]{0}', space=sflag, size = 0x8, scoped, tag = 'scoped memory for tpu_custom_call.1']
    #allocation5 [shape = 'u8[1024]{0}', space=vmem, size = 0x400, scoped, tag = 'input window, operand 5']
    #allocation6 [shape = 's32[2]{0}', space=sflag, size = 0x8, scoped, tag = 'scoped memory for tpu_custom_call.1']
    #allocation7 [shape = 'u8[1024]{0}', space=vmem, size = 0x400, scoped, tag = 'input window, operand 6']
    #allocation8 [shape = 'u8[16384]{0}', space=vmem, size = 0x4000, scoped, tag = 'input window, operand 7']
    #allocation9 [shape = 's32[2]{0}', space=sflag, size = 0x8, scoped, tag = 'scoped memory for tpu_custom_call.1']
    #allocation10 [shape = 'u8[1024]{0}', space=vmem, size = 0x400, scoped, tag = 'input window, operand 8']
    #allocation11 [shape = 'u8[1024]{0}', space=vmem, size = 0x400, scoped, tag = 'input window, operand 9']
    #allocation12 [shape = 's32[2]{0}', space=sflag, size = 0x8, scoped, tag = 'scoped memory for tpu_custom_call.1']
    #allocation13 [shape = 'u8[8192]{0}', space=vmem, size = 0x2000, scoped, tag = 'output window, operand 0']
    %22 = vsyncpa [#allocation3], 0
    %s23 = scalar_lea.sflag [#allocation3], 1
    %24 = vsyncpa %s23, 0
    %25 = vsyncpa [#allocation6], 0
    %s26 = scalar_lea.sflag [#allocation6], 1
    %27 = vsyncpa %s26, 0
    %28 = vsyncpa [#allocation9], 0
    %s29 = scalar_lea.sflag [#allocation9], 1
    %30 = vsyncpa %s29, 0
    %31 = vsyncpa [#allocation12], 0
    %s32 = scalar_lea.sflag [#allocation12], 1
    %33 = vsyncpa %s32, 0
    %34 = vsyncpa [#allocation4], 0
    %s35 = scalar_lea.sflag [#allocation4], 1
    %36 = vsyncpa %s35, 0
    loop: start=0, step=1, limit=6
    $region2: #{tpu_custom_call.1} parent=1 // loop_pre_header
      _
    $region3: #{tpu_custom_call.1} parent=1 // loop_header
      %s38 = sphi 0, %s42
      %p39 = scmp.ge.s32.totalorder %s38, 6
      %s45 = sphi 0, %s57
      %s46 = sphi 0, %s53
      %s47 = sphi 0, %s45
      %s48 = sphi 0, %s46
      %s49 = sphi 0, %s47
      %s50 = sphi 0, %s48
      %s60 = sphi 0, %s62
      %s63 = sphi 0, %s60
      %s64 = sphi 0, %s63
      %s80 = sphi 0, %s64
      %s86 = sphi 0, %s88
      %s89 = sphi 0, %s86
      %s90 = sphi 0, %s89
      %s106 = sphi 0, %s90
      %s112 = sphi 0, %s114
      %s115 = sphi 0, %s112
      %s116 = sphi 0, %s115
      %s132 = sphi 0, %s116
      %s138 = sphi 0, %s140
      %s141 = sphi 0, %s138
      %s142 = sphi 0, %s141
      %s158 = sphi 0, %s142
      %s164 = sphi 0, %s166
      %s167 = sphi 0, %s164
      %s168 = sphi 0, %s167
      %s184 = sphi 0, %s168
      %s190 = sphi 0, %s192
      %s193 = sphi 0, %s190
      %s194 = sphi 0, %s193
      %s210 = sphi 0, %s194
      %s216 = sphi 0, %s218
      %s219 = sphi 0, %s216
      %s220 = sphi 0, %s219
      %s236 = sphi 0, %s220
      %s242 = sphi 0, %s244
      %s245 = sphi 0, %s242
      %s246 = sphi 0, %s245
      %s262 = sphi 0, %s246
      %s268 = sphi 0, %s270
      %s271 = sphi 0, %s268
      %s272 = sphi 0, %s271
      %s288 = sphi 0, %s272
      %s294 = sphi 0, %s296
      %s297 = sphi 0, %s294
      %s298 = sphi 0, %s297
      %s314 = sphi 0, %s298
      %s320 = sphi 0, %s322
      %s323 = sphi 0, %s320
      %s324 = sphi 0, %s323
      %s340 = sphi 0, %s324
      %s346 = sphi 0, %s348
      %s349 = sphi 0, %s346
      %s350 = sphi 0, %s349
      %s366 = sphi 0, %s350
      %s372 = sphi 0, %s374
      %s375 = sphi 0, %s372
      %s376 = sphi 0, %s375
      %s392 = sphi 0, %s376
      %s398 = sphi 0, %s400
      %s401 = sphi 0, %s398
      %s402 = sphi 0, %s401
      %s418 = sphi 0, %s402
      %s424 = sphi 0, %s426
      %s427 = sphi 0, %s424
      %s428 = sphi 0, %s427
      %s444 = sphi 0, %s428
      %s450 = sphi 0, %s452
      %s453 = sphi 0, %s450
      %s454 = sphi 0, %s453
      %s470 = sphi 0, %s454
      %s476 = sphi 0, %s478
      %s479 = sphi 0, %s476
      %s480 = sphi 0, %s479
      %s496 = sphi 0, %s480
      %s502 = sphi 0, %s504
      %s505 = sphi 0, %s502
      %s506 = sphi 0, %s505
      %s522 = sphi 0, %s506
    $region4: #{tpu_custom_call.1} parent=1 // loop_header_branch
      %41 = sbr.rel (%p39) target = $region8
    $region5: #{tpu_custom_call.1} parent=1 // loop_body
      %s43 = ssub.s32 %s38, 1
      %s44 = ssub.s32 %s38, 2
      %s51 = sadd.s32 1, %s46
      %p52 = scmp.ge.s32.totalorder %s51, 2
      %s53 = scalar_select %p52, 0, %s51
      %s54 = sadd.s32 1, %s45
      %s55 = scalar_select %p52, %s54, %s45
      %p56 = scmp.ge.s32.totalorder %s55, 2
      %s57 = scalar_select %p56, 0, %s55
      %s58 = ssub.s32 %s45, %s57
      %p59 = scmp.eq.s32.totalorder %s58, 0
      %s61 = sadd.s32 %s60, 1
      %s62 = scalar_select %p59, %s60, %s61
      %p65 = pneg %p59
      %p66 = scmp.eq.s32.totalorder %s38, 3
      %p67 = por %p65, %p66
      %p68 = scmp.ne.s32.totalorder %s60, %s63
      %p69 = scmp.eq.s32.totalorder %s38, 0
      %p70 = por %p68, %p69
      %p71 = scmp.ne.s32.totalorder %s60, %s63
      %p72 = scmp.eq.s32.totalorder %s43, 3
      %p73 = por %p71, %p72
      %p74 = scmp.ne.s32.totalorder %s63, %s64
      %p75 = scmp.eq.s32.totalorder %s43, 0
      %p76 = por %p74, %p75
      %p77 = scmp.ne.s32.totalorder %s63, %s64
      %p78 = scmp.eq.s32.totalorder %s44, 3
      %p79 = por %p77, %p78
      %p81 = scmp.ne.s32.totalorder %s64, %s80
      %p82 = scmp.eq.s32.totalorder %s44, 0
      %p83 = por %p81, %p82
      %s84 = ssub.s32 %s46, %s53
      %p85 = scmp.eq.s32.totalorder %s84, 0
      %s87 = sadd.s32 %s86, 1
      %s88 = scalar_select %p85, %s86, %s87
      %p91 = pneg %p85
      %p92 = scmp.eq.s32.totalorder %s38, 3
      %p93 = por %p91, %p92
      %p94 = scmp.ne.s32.totalorder %s86, %s89
      %p95 = scmp.eq.s32.totalorder %s38, 0
      %p96 = por %p94, %p95
      %p97 = scmp.ne.s32.totalorder %s86, %s89
      %p98 = scmp.eq.s32.totalorder %s43, 3
      %p99 = por %p97, %p98
      %p100 = scmp.ne.s32.totalorder %s89, %s90
      %p101 = scmp.eq.s32.totalorder %s43, 0
      %p102 = por %p100, %p101
      %p103 = scmp.ne.s32.totalorder %s89, %s90
      %p104 = scmp.eq.s32.totalorder %s44, 3
      %p105 = por %p103, %p104
      %p107 = scmp.ne.s32.totalorder %s90, %s106
      %p108 = scmp.eq.s32.totalorder %s44, 0
      %p109 = por %p107, %p108
      %s110 = ssub.s32 %s46, %s53
      %p111 = scmp.eq.s32.totalorder %s110, 0
      %s113 = sadd.s32 %s112, 1
      %s114 = scalar_select %p111, %s112, %s113
      %p117 = pneg %p111
      %p118 = scmp.eq.s32.totalorder %s38, 3
      %p119 = por %p117, %p118
      %p120 = scmp.ne.s32.totalorder %s112, %s115
      %p121 = scmp.eq.s32.totalorder %s38, 0
      %p122 = por %p120, %p121
      %p123 = scmp.ne.s32.totalorder %s112, %s115
      %p124 = scmp.eq.s32.totalorder %s43, 3
      %p125 = por %p123, %p124
      %p126 = scmp.ne.s32.totalorder %s115, %s116
      %p127 = scmp.eq.s32.totalorder %s43, 0
      %p128 = por %p126, %p127
      %p129 = scmp.ne.s32.totalorder %s115, %s116
      %p130 = scmp.eq.s32.totalorder %s44, 3
      %p131 = por %p129, %p130
      %p133 = scmp.ne.s32.totalorder %s116, %s132
      %p134 = scmp.eq.s32.totalorder %s44, 0
      %p135 = por %p133, %p134
      %s136 = ssub.s32 %s46, %s53
      %p137 = scmp.eq.s32.totalorder %s136, 0
      %s139 = sadd.s32 %s138, 1
      %s140 = scalar_select %p137, %s138, %s139
      %p143 = pneg %p137
      %p144 = scmp.eq.s32.totalorder %s38, 3
      %p145 = por %p143, %p144
      %p146 = scmp.ne.s32.totalorder %s138, %s141
      %p147 = scmp.eq.s32.totalorder %s38, 0
      %p148 = por %p146, %p147
      %p149 = scmp.ne.s32.totalorder %s138, %s141
      %p150 = scmp.eq.s32.totalorder %s43, 3
      %p151 = por %p149, %p150
      %p152 = scmp.ne.s32.totalorder %s141, %s142
      %p153 = scmp.eq.s32.totalorder %s43, 0
      %p154 = por %p152, %p153
      %p155 = scmp.ne.s32.totalorder %s141, %s142
      %p156 = scmp.eq.s32.totalorder %s44, 3
      %p157 = por %p155, %p156
      %p159 = scmp.ne.s32.totalorder %s142, %s158
      %p160 = scmp.eq.s32.totalorder %s44, 0
      %p161 = por %p159, %p160
      %s162 = ssub.s32 %s46, %s53
      %p163 = scmp.eq.s32.totalorder %s162, 0
      %s165 = sadd.s32 %s164, 1
      %s166 = scalar_select %p163, %s164, %s165
      %p169 = pneg %p163
      %p170 = scmp.eq.s32.totalorder %s38, 3
      %p171 = por %p169, %p170
      %p172 = scmp.ne.s32.totalorder %s164, %s167
      %p173 = scmp.eq.s32.totalorder %s38, 0
      %p174 = por %p172, %p173
      %p175 = scmp.ne.s32.totalorder %s164, %s167
      %p176 = scmp.eq.s32.totalorder %s43, 3
      %p177 = por %p175, %p176
      %p178 = scmp.ne.s32.totalorder %s167, %s168
      %p179 = scmp.eq.s32.totalorder %s43, 0
      %p180 = por %p178, %p179
      %p181 = scmp.ne.s32.totalorder %s167, %s168
      %p182 = scmp.eq.s32.totalorder %s44, 3
      %p183 = por %p181, %p182
      %p185 = scmp.ne.s32.totalorder %s168, %s184
      %p186 = scmp.eq.s32.totalorder %s44, 0
      %p187 = por %p185, %p186
      %s188 = ssub.s32 %s46, %s53
      %p189 = scmp.eq.s32.totalorder %s188, 0
      %s191 = sadd.s32 %s190, 1
      %s192 = scalar_select %p189, %s190, %s191
      %p195 = pneg %p189
      %p196 = scmp.eq.s32.totalorder %s38, 3
      %p197 = por %p195, %p196
      %p198 = scmp.ne.s32.totalorder %s190, %s193
      %p199 = scmp.eq.s32.totalorder %s38, 0
      %p200 = por %p198, %p199
      %p201 = scmp.ne.s32.totalorder %s190, %s193
      %p202 = scmp.eq.s32.totalorder %s43, 3
      %p203 = por %p201, %p202
      %p204 = scmp.ne.s32.totalorder %s193, %s194
      %p205 = scmp.eq.s32.totalorder %s43, 0
      %p206 = por %p204, %p205
      %p207 = scmp.ne.s32.totalorder %s193, %s194
      %p208 = scmp.eq.s32.totalorder %s44, 3
      %p209 = por %p207, %p208
      %p211 = scmp.ne.s32.totalorder %s194, %s210
      %p212 = scmp.eq.s32.totalorder %s44, 0
      %p213 = por %p211, %p212
      %s214 = ssub.s32 %s46, %s53
      %p215 = scmp.eq.s32.totalorder %s214, 0
      %s217 = sadd.s32 %s216, 1
      %s218 = scalar_select %p215, %s216, %s217
      %p221 = pneg %p215
      %p222 = scmp.eq.s32.totalorder %s38, 3
      %p223 = por %p221, %p222
      %p224 = scmp.ne.s32.totalorder %s216, %s219
      %p225 = scmp.eq.s32.totalorder %s38, 0
      %p226 = por %p224, %p225
      %p227 = scmp.ne.s32.totalorder %s216, %s219
      %p228 = scmp.eq.s32.totalorder %s43, 3
      %p229 = por %p227, %p228
      %p230 = scmp.ne.s32.totalorder %s219, %s220
      %p231 = scmp.eq.s32.totalorder %s43, 0
      %p232 = por %p230, %p231
      %p233 = scmp.ne.s32.totalorder %s219, %s220
      %p234 = scmp.eq.s32.totalorder %s44, 3
      %p235 = por %p233, %p234
      %p237 = scmp.ne.s32.totalorder %s220, %s236
      %p238 = scmp.eq.s32.totalorder %s44, 0
      %p239 = por %p237, %p238
      %s240 = ssub.s32 %s46, %s53
      %p241 = scmp.eq.s32.totalorder %s240, 0
      %s243 = sadd.s32 %s242, 1
      %s244 = scalar_select %p241, %s242, %s243
      %p247 = pneg %p241
      %p248 = scmp.eq.s32.totalorder %s38, 3
      %p249 = por %p247, %p248
      %p250 = scmp.ne.s32.totalorder %s242, %s245
      %p251 = scmp.eq.s32.totalorder %s38, 0
      %p252 = por %p250, %p251
      %p253 = scmp.ne.s32.totalorder %s242, %s245
      %p254 = scmp.eq.s32.totalorder %s43, 3
      %p255 = por %p253, %p254
      %p256 = scmp.ne.s32.totalorder %s245, %s246
      %p257 = scmp.eq.s32.totalorder %s43, 0
      %p258 = por %p256, %p257
      %p259 = scmp.ne.s32.totalorder %s245, %s246
      %p260 = scmp.eq.s32.totalorder %s44, 3
      %p261 = por %p259, %p260
      %p263 = scmp.ne.s32.totalorder %s246, %s262
      %p264 = scmp.eq.s32.totalorder %s44, 0
      %p265 = por %p263, %p264
      %s266 = ssub.s32 %s46, %s53
      %p267 = scmp.eq.s32.totalorder %s266, 0
      %s269 = sadd.s32 %s268, 1
      %s270 = scalar_select %p267, %s268, %s269
      %p273 = pneg %p267
      %p274 = scmp.eq.s32.totalorder %s38, 3
      %p275 = por %p273, %p274
      %p276 = scmp.ne.s32.totalorder %s268, %s271
      %p277 = scmp.eq.s32.totalorder %s38, 0
      %p278 = por %p276, %p277
      %p279 = scmp.ne.s32.totalorder %s268, %s271
      %p280 = scmp.eq.s32.totalorder %s43, 3
      %p281 = por %p279, %p280
      %p282 = scmp.ne.s32.totalorder %s271, %s272
      %p283 = scmp.eq.s32.totalorder %s43, 0
      %p284 = por %p282, %p283
      %p285 = scmp.ne.s32.totalorder %s271, %s272
      %p286 = scmp.eq.s32.totalorder %s44, 3
      %p287 = por %p285, %p286
      %p289 = scmp.ne.s32.totalorder %s272, %s288
      %p290 = scmp.eq.s32.totalorder %s44, 0
      %p291 = por %p289, %p290
      %s292 = ssub.s32 %s46, %s53
      %p293 = scmp.eq.s32.totalorder %s292, 0
      %s295 = sadd.s32 %s294, 1
      %s296 = scalar_select %p293, %s294, %s295
      %p299 = pneg %p293
      %p300 = scmp.eq.s32.totalorder %s38, 3
      %p301 = por %p299, %p300
      %p302 = scmp.ne.s32.totalorder %s294, %s297
      %p303 = scmp.eq.s32.totalorder %s38, 0
      %p304 = por %p302, %p303
      %p305 = scmp.ne.s32.totalorder %s294, %s297
      %p306 = scmp.eq.s32.totalorder %s43, 3
      %p307 = por %p305, %p306
      %p308 = scmp.ne.s32.totalorder %s297, %s298
      %p309 = scmp.eq.s32.totalorder %s43, 0
      %p310 = por %p308, %p309
      %p311 = scmp.ne.s32.totalorder %s297, %s298
      %p312 = scmp.eq.s32.totalorder %s44, 3
      %p313 = por %p311, %p312
      %p315 = scmp.ne.s32.totalorder %s298, %s314
      %p316 = scmp.eq.s32.totalorder %s44, 0
      %p317 = por %p315, %p316
      %s318 = ssub.s32 %s46, %s53
      %p319 = scmp.eq.s32.totalorder %s318, 0
      %s321 = sadd.s32 %s320, 1
      %s322 = scalar_select %p319, %s320, %s321
      %p325 = pneg %p319
      %p326 = scmp.eq.s32.totalorder %s38, 3
      %p327 = por %p325, %p326
      %p328 = scmp.ne.s32.totalorder %s320, %s323
      %p329 = scmp.eq.s32.totalorder %s38, 0
      %p330 = por %p328, %p329
      %p331 = scmp.ne.s32.totalorder %s320, %s323
      %p332 = scmp.eq.s32.totalorder %s43, 3
      %p333 = por %p331, %p332
      %p334 = scmp.ne.s32.totalorder %s323, %s324
      %p335 = scmp.eq.s32.totalorder %s43, 0
      %p336 = por %p334, %p335
      %p337 = scmp.ne.s32.totalorder %s323, %s324
      %p338 = scmp.eq.s32.totalorder %s44, 3
      %p339 = por %p337, %p338
      %p341 = scmp.ne.s32.totalorder %s324, %s340
      %p342 = scmp.eq.s32.totalorder %s44, 0
      %p343 = por %p341, %p342
      %s344 = ssub.s32 %s46, %s53
      %p345 = scmp.eq.s32.totalorder %s344, 0
      %s347 = sadd.s32 %s346, 1
      %s348 = scalar_select %p345, %s346, %s347
      %p351 = pneg %p345
      %p352 = scmp.eq.s32.totalorder %s38, 3
      %p353 = por %p351, %p352
      %p354 = scmp.ne.s32.totalorder %s346, %s349
      %p355 = scmp.eq.s32.totalorder %s38, 0
      %p356 = por %p354, %p355
      %p357 = scmp.ne.s32.totalorder %s346, %s349
      %p358 = scmp.eq.s32.totalorder %s43, 3
      %p359 = por %p357, %p358
      %p360 = scmp.ne.s32.totalorder %s349, %s350
      %p361 = scmp.eq.s32.totalorder %s43, 0
      %p362 = por %p360, %p361
      %p363 = scmp.ne.s32.totalorder %s349, %s350
      %p364 = scmp.eq.s32.totalorder %s44, 3
      %p365 = por %p363, %p364
      %p367 = scmp.ne.s32.totalorder %s350, %s366
      %p368 = scmp.eq.s32.totalorder %s44, 0
      %p369 = por %p367, %p368
      %s370 = ssub.s32 %s46, %s53
      %p371 = scmp.eq.s32.totalorder %s370, 0
      %s373 = sadd.s32 %s372, 1
      %s374 = scalar_select %p371, %s372, %s373
      %p377 = pneg %p371
      %p378 = scmp.eq.s32.totalorder %s38, 3
      %p379 = por %p377, %p378
      %p380 = scmp.ne.s32.totalorder %s372, %s375
      %p381 = scmp.eq.s32.totalorder %s38, 0
      %p382 = por %p380, %p381
      %p383 = scmp.ne.s32.totalorder %s372, %s375
      %p384 = scmp.eq.s32.totalorder %s43, 3
      %p385 = por %p383, %p384
      %p386 = scmp.ne.s32.totalorder %s375, %s376
      %p387 = scmp.eq.s32.totalorder %s43, 0
      %p388 = por %p386, %p387
      %p389 = scmp.ne.s32.totalorder %s375, %s376
      %p390 = scmp.eq.s32.totalorder %s44, 3
      %p391 = por %p389, %p390
      %p393 = scmp.ne.s32.totalorder %s376, %s392
      %p394 = scmp.eq.s32.totalorder %s44, 0
      %p395 = por %p393, %p394
      %s396 = ssub.s32 %s46, %s53
      %p397 = scmp.eq.s32.totalorder %s396, 0
      %s399 = sadd.s32 %s398, 1
      %s400 = scalar_select %p397, %s398, %s399
      %p403 = pneg %p397
      %p404 = scmp.eq.s32.totalorder %s38, 3
      %p405 = por %p403, %p404
      %p406 = scmp.ne.s32.totalorder %s398, %s401
      %p407 = scmp.eq.s32.totalorder %s38, 0
      %p408 = por %p406, %p407
      %p409 = scmp.ne.s32.totalorder %s398, %s401
      %p410 = scmp.eq.s32.totalorder %s43, 3
      %p411 = por %p409, %p410
      %p412 = scmp.ne.s32.totalorder %s401, %s402
      %p413 = scmp.eq.s32.totalorder %s43, 0
      %p414 = por %p412, %p413
      %p415 = scmp.ne.s32.totalorder %s401, %s402
      %p416 = scmp.eq.s32.totalorder %s44, 3
      %p417 = por %p415, %p416
      %p419 = scmp.ne.s32.totalorder %s402, %s418
      %p420 = scmp.eq.s32.totalorder %s44, 0
      %p421 = por %p419, %p420
      %s422 = ssub.s32 %s46, %s53
      %p423 = scmp.eq.s32.totalorder %s422, 0
      %s425 = sadd.s32 %s424, 1
      %s426 = scalar_select %p423, %s424, %s425
      %p429 = pneg %p423
      %p430 = scmp.eq.s32.totalorder %s38, 3
      %p431 = por %p429, %p430
      %p432 = scmp.ne.s32.totalorder %s424, %s427
      %p433 = scmp.eq.s32.totalorder %s38, 0
      %p434 = por %p432, %p433
      %p435 = scmp.ne.s32.totalorder %s424, %s427
      %p436 = scmp.eq.s32.totalorder %s43, 3
      %p437 = por %p435, %p436
      %p438 = scmp.ne.s32.totalorder %s427, %s428
      %p439 = scmp.eq.s32.totalorder %s43, 0
      %p440 = por %p438, %p439
      %p441 = scmp.ne.s32.totalorder %s427, %s428
      %p442 = scmp.eq.s32.totalorder %s44, 3
      %p443 = por %p441, %p442
      %p445 = scmp.ne.s32.totalorder %s428, %s444
      %p446 = scmp.eq.s32.totalorder %s44, 0
      %p447 = por %p445, %p446
      %s448 = ssub.s32 %s46, %s53
      %p449 = scmp.eq.s32.totalorder %s448, 0
      %s451 = sadd.s32 %s450, 1
      %s452 = scalar_select %p449, %s450, %s451
      %p455 = pneg %p449
      %p456 = scmp.eq.s32.totalorder %s38, 3
      %p457 = por %p455, %p456
      %p458 = scmp.ne.s32.totalorder %s450, %s453
      %p459 = scmp.eq.s32.totalorder %s38, 0
      %p460 = por %p458, %p459
      %p461 = scmp.ne.s32.totalorder %s450, %s453
      %p462 = scmp.eq.s32.totalorder %s43, 3
      %p463 = por %p461, %p462
      %p464 = scmp.ne.s32.totalorder %s453, %s454
      %p465 = scmp.eq.s32.totalorder %s43, 0
      %p466 = por %p464, %p465
      %p467 = scmp.ne.s32.totalorder %s453, %s454
      %p468 = scmp.eq.s32.totalorder %s44, 3
      %p469 = por %p467, %p468
      %p471 = scmp.ne.s32.totalorder %s454, %s470
      %p472 = scmp.eq.s32.totalorder %s44, 0
      %p473 = por %p471, %p472
      %s474 = ssub.s32 %s46, %s53
      %p475 = scmp.eq.s32.totalorder %s474, 0
      %s477 = sadd.s32 %s476, 1
      %s478 = scalar_select %p475, %s476, %s477
      %p481 = pneg %p475
      %p482 = scmp.eq.s32.totalorder %s38, 3
      %p483 = por %p481, %p482
      %p484 = scmp.ne.s32.totalorder %s476, %s479
      %p485 = scmp.eq.s32.totalorder %s38, 0
      %p486 = por %p484, %p485
      %p487 = scmp.ne.s32.totalorder %s476, %s479
      %p488 = scmp.eq.s32.totalorder %s43, 3
      %p489 = por %p487, %p488
      %p490 = scmp.ne.s32.totalorder %s479, %s480
      %p491 = scmp.eq.s32.totalorder %s43, 0
      %p492 = por %p490, %p491
      %p493 = scmp.ne.s32.totalorder %s479, %s480
      %p494 = scmp.eq.s32.totalorder %s44, 3
      %p495 = por %p493, %p494
      %p497 = scmp.ne.s32.totalorder %s480, %s496
      %p498 = scmp.eq.s32.totalorder %s44, 0
      %p499 = por %p497, %p498
      %s500 = ssub.s32 %s45, %s57
      %p501 = scmp.eq.s32.totalorder %s500, 0
      %s503 = sadd.s32 %s502, 1
      %s504 = scalar_select %p501, %s502, %s503
      %p507 = pneg %p501
      %p508 = scmp.eq.s32.totalorder %s38, 3
      %p509 = por %p507, %p508
      %p510 = scmp.ne.s32.totalorder %s502, %s505
      %p511 = scmp.eq.s32.totalorder %s38, 0
      %p512 = por %p510, %p511
      %p513 = scmp.ne.s32.totalorder %s502, %s505
      %p514 = scmp.eq.s32.totalorder %s43, 3
      %p515 = por %p513, %p514
      %p516 = scmp.ne.s32.totalorder %s505, %s506
      %p517 = scmp.eq.s32.totalorder %s43, 0
      %p518 = por %p516, %p517
      %p519 = scmp.ne.s32.totalorder %s505, %s506
      %p520 = scmp.eq.s32.totalorder %s44, 3
      %p521 = por %p519, %p520
      %p523 = scmp.ne.s32.totalorder %s506, %s522
      %p524 = scmp.eq.s32.totalorder %s44, 0
      %p525 = por %p523, %p524
      %p526 = scmp.le.s32.totalorder 1, %s38
      %p527 = scmp.lt.s32.totalorder %s38, 5
      %p528 = pnand %p526, %p527
      %p529 = pneg %p528
      // Predicated region
      $region9: #{tpu_custom_call.1} parent=5 // pred_check
        _
      $region10: #{tpu_custom_call.1} parent=5 // pred_check_branch
        %531 = sbr.rel (%p528) target = $region12
      $region11: #{tpu_custom_call.1} parent=5 // pred_region
        %s532 = ssub.s32 %s38, 1
      $region12: #{tpu_custom_call.1} parent=5 // pred_fallthru
        _
      %p533 = scmp.lt.s32.totalorder %s38, 4
      // Predicated region
      $region13: #{tpu_custom_call.1} parent=5 // pred_check
        %p534 = pneg %p533
      $region14: #{tpu_custom_call.1} parent=5 // pred_check_branch
        %536 = sbr.rel (%p534) target = $region16
      $region15: #{tpu_custom_call.1} parent=5 // pred_region
        // Predicated region
        $region17: #{tpu_custom_call.1} parent=15 // pred_check
          %p537 = pneg %p70
        $region18: #{tpu_custom_call.1} parent=15 // pred_check_branch
          %539 = sbr.rel (%p537) target = $region20
        $region19: #{tpu_custom_call.1} parent=15 // pred_region
          %s540 = sand.u32 %s60, 1
          %s541 = scalar_lea.sflag [#allocation3], %s540
          %s542 = sand.u32 %s60, 1
          %s543 = smul.addr %s542, 8
          %s544 = scalar_lea.vmem [#allocation2], %s543
          %s546 = ssub.s32 128, 128
          %547 = vsyncadd %s541, %s546
          %s548 = smul.addr %s45, 128
          %s549 = scalar_lea.hbm %s0, %s548
          %s551 = sshll.u32 %s544, 4
          %s552 = int_to_ptr.vmem [resolvable:$true] %s551
          %554 = dma.hbm_to_vmem [thread:$0]  %s549, 128, %s552, %s541
        $region20: #{tpu_custom_call.1} parent=15 // pred_fallthru
          _
        // Predicated region
        $region21: #{tpu_custom_call.1} parent=15 // pred_check
          %p555 = pneg %p96
        $region22: #{tpu_custom_call.1} parent=15 // pred_check_branch
          %557 = sbr.rel (%p555) target = $region24
        $region23: #{tpu_custom_call.1} parent=15 // pred_region
          %p558 = scmp.lt.s32.totalorder %s46, 1
          %s559 = scalar_select %p558, %s46, 1
          %s560 = smul.addr %s559, 4
          %s561 = smul.addr %s560, 4
          %s562 = scalar_lea.vmem %s1, %s561
        $region24: #{tpu_custom_call.1} parent=15 // pred_fallthru
          _
        // Predicated region
        $region25: #{tpu_custom_call.1} parent=15 // pred_check
          %p563 = pneg %p122
        $region26: #{tpu_custom_call.1} parent=15 // pred_check_branch
          %565 = sbr.rel (%p563) target = $region28
        $region27: #{tpu_custom_call.1} parent=15 // pred_region
          %p566 = scmp.lt.s32.totalorder %s46, 1
          %s567 = scalar_select %p566, %s46, 1
          %s568 = smul.addr %s567, 4
          %s569 = smul.addr %s568, 4
          %s570 = scalar_lea.vmem %s2, %s569
        $region28: #{tpu_custom_call.1} parent=15 // pred_fallthru
          _
        // Predicated region
        $region29: #{tpu_custom_call.1} parent=15 // pred_check
          %p571 = pneg %p148
        $region30: #{tpu_custom_call.1} parent=15 // pred_check_branch
          %573 = sbr.rel (%p571) target = $region32
        $region31: #{tpu_custom_call.1} parent=15 // pred_region
          %p574 = scmp.lt.s32.totalorder %s46, 1
          %s575 = scalar_select %p574, %s46, 1
          %s576 = smul.addr %s575, 4
          %s577 = smul.addr %s576, 4
          %s578 = scalar_lea.vmem %s3, %s577
        $region32: #{tpu_custom_call.1} parent=15 // pred_fallthru
          _
        // Predicated region
        $region33: #{tpu_custom_call.1} parent=15 // pred_check
          %p579 = pneg %p174
        $region34: #{tpu_custom_call.1} parent=15 // pred_check_branch
          %581 = sbr.rel (%p579) target = $region36
        $region35: #{tpu_custom_call.1} parent=15 // pred_region
          %p582 = scmp.lt.s32.totalorder %s46, 1
          %s583 = scalar_select %p582, %s46, 1
          %s584 = scalar_lea.vmem %s4, %s583
        $region36: #{tpu_custom_call.1} parent=15 // pred_fallthru
          _
        // Predicated region
        $region37: #{tpu_custom_call.1} parent=15 // pred_check
          %p585 = pneg %p200
        $region38: #{tpu_custom_call.1} parent=15 // pred_check_branch
          %587 = sbr.rel (%p585) target = $region40
        $region39: #{tpu_custom_call.1} parent=15 // pred_region
          %s588 = sand.u32 %s38, 1
          %s589 = scalar_lea.sflag [#allocation6], %s588
          %s590 = sand.u32 %s190, 1
          %s591 = scalar_lea.vmem [#allocation5], %s590
          %s593 = ssub.s32 16, 16
          %594 = vsyncadd %s589, %s593
          %s595 = smul.addr %s46, 16
          %s596 = scalar_lea.hbm %s5, %s595
          %s598 = sshll.u32 %s591, 4
          %s599 = int_to_ptr.vmem [resolvable:$true] %s598
          %601 = dma.hbm_to_vmem [thread:$0]  %s596, 16, %s599, %s589
        $region40: #{tpu_custom_call.1} parent=15 // pred_fallthru
          _
        // Predicated region
        $region41: #{tpu_custom_call.1} parent=15 // pred_check
          %p602 = pneg %p226
        $region42: #{tpu_custom_call.1} parent=15 // pred_check_branch
          %604 = sbr.rel (%p602) target = $region44
        $region43: #{tpu_custom_call.1} parent=15 // pred_region
          %s605 = sand.u32 %s38, 1
          %s606 = scalar_lea.sflag [#allocation6], %s605
          %s607 = sand.u32 %s216, 1
          %s608 = scalar_lea.vmem [#allocation7], %s607
          %s610 = ssub.s32 16, 16
          %611 = vsyncadd %s606, %s610
          %s612 = smul.addr %s46, 16
          %s613 = scalar_lea.hbm %s6, %s612
          %s615 = sshll.u32 %s608, 4
          %s616 = int_to_ptr.vmem [resolvable:$true] %s615
          %618 = dma.hbm_to_vmem [thread:$0]  %s613, 16, %s616, %s606
        $region44: #{tpu_custom_call.1} parent=15 // pred_fallthru
          _
        // Predicated region
        $region45: #{tpu_custom_call.1} parent=15 // pred_check
          %p619 = pneg %p252
        $region46: #{tpu_custom_call.1} parent=15 // pred_check_branch
          %621 = sbr.rel (%p619) target = $region48
        $region47: #{tpu_custom_call.1} parent=15 // pred_region
          %s622 = sand.u32 %s38, 1
          %s623 = scalar_lea.sflag [#allocation9], %s622
          %s624 = sand.u32 %s242, 1
          %s625 = smul.addr %s624, 16
          %s626 = scalar_lea.vmem [#allocation8], %s625
          %s628 = ssub.s32 256, 256
          %629 = vsyncadd %s623, %s628
          %s630 = smul.addr %s46, 4
          %s631 = smul.addr %s630, 64
          %s632 = scalar_lea.hbm %s7, %s631
          %s633 = sshll.u32 %s626, 4
          %s634 = int_to_ptr.vmem [resolvable:$true] %s633
          %639 = dma.hbm_to_vmem [thread:$0]  %s632, 256, %s634, %s623, 64, 64, 4
        $region48: #{tpu_custom_call.1} parent=15 // pred_fallthru
          _
        // Predicated region
        $region49: #{tpu_custom_call.1} parent=15 // pred_check
          %p640 = pneg %p278
        $region50: #{tpu_custom_call.1} parent=15 // pred_check_branch
          %642 = sbr.rel (%p640) target = $region52
        $region51: #{tpu_custom_call.1} parent=15 // pred_region
          %s643 = sand.u32 %s38, 1
          %s644 = scalar_lea.sflag [#allocation9], %s643
          %s645 = sand.u32 %s268, 1
          %s646 = scalar_lea.vmem [#allocation10], %s645
          %s648 = ssub.s32 16, 16
          %649 = vsyncadd %s644, %s648
          %s650 = smul.addr %s46, 16
          %s651 = scalar_lea.hbm %s8, %s650
          %s653 = sshll.u32 %s646, 4
          %s654 = int_to_ptr.vmem [resolvable:$true] %s653
          %656 = dma.hbm_to_vmem [thread:$0]  %s651, 16, %s654, %s644
        $region52: #{tpu_custom_call.1} parent=15 // pred_fallthru
          _
        // Predicated region
        $region53: #{tpu_custom_call.1} parent=15 // pred_check
          %p657 = pneg %p304
        $region54: #{tpu_custom_call.1} parent=15 // pred_check_branch
          %659 = sbr.rel (%p657) target = $region56
        $region55: #{tpu_custom_call.1} parent=15 // pred_region
          %s660 = sand.u32 %s294, 1
          %s661 = scalar_lea.sflag [#allocation12], %s660
          %s662 = sand.u32 %s294, 1
          %s663 = scalar_lea.vmem [#allocation11], %s662
          %s665 = ssub.s32 16, 16
          %666 = vsyncadd %s661, %s665
          %s667 = smul.addr %s46, 16
          %s668 = scalar_lea.hbm %s9, %s667
          %s670 = sshll.u32 %s663, 4
          %s671 = int_to_ptr.vmem [resolvable:$true] %s670
          %673 = dma.hbm_to_vmem [thread:$0]  %s668, 16, %s671, %s661
        $region56: #{tpu_custom_call.1} parent=15 // pred_fallthru
          _
        // Predicated region
        $region57: #{tpu_custom_call.1} parent=15 // pred_check
          %p674 = pneg %p330
        $region58: #{tpu_custom_call.1} parent=15 // pred_check_branch
          %676 = sbr.rel (%p674) target = $region60
        $region59: #{tpu_custom_call.1} parent=15 // pred_region
          %p677 = scmp.lt.s32.totalorder %s46, 1
          %s678 = scalar_select %p677, %s46, 1
          %s679 = scalar_lea.vmem %s10, %s678
        $region60: #{tpu_custom_call.1} parent=15 // pred_fallthru
          _
        // Predicated region
        $region61: #{tpu_custom_call.1} parent=15 // pred_check
          %p680 = pneg %p356
        $region62: #{tpu_custom_call.1} parent=15 // pred_check_branch
          %682 = sbr.rel (%p680) target = $region64
        $region63: #{tpu_custom_call.1} parent=15 // pred_region
          %p683 = scmp.lt.s32.totalorder %s46, 1
          %s684 = scalar_select %p683, %s46, 1
          %s685 = smul.addr %s684, 4
          %s686 = smul.addr %s685, 4
          %s687 = scalar_lea.vmem %s11, %s686
        $region64: #{tpu_custom_call.1} parent=15 // pred_fallthru
          _
        // Predicated region
        $region65: #{tpu_custom_call.1} parent=15 // pred_check
          %p688 = pneg %p382
        $region66: #{tpu_custom_call.1} parent=15 // pred_check_branch
          %690 = sbr.rel (%p688) target = $region68
        $region67: #{tpu_custom_call.1} parent=15 // pred_region
          %p691 = scmp.lt.s32.totalorder %s46, 1
          %s692 = scalar_select %p691, %s46, 1
          %s693 = scalar_lea.vmem %s12, %s692
        $region68: #{tpu_custom_call.1} parent=15 // pred_fallthru
          _
        // Predicated region
        $region69: #{tpu_custom_call.1} parent=15 // pred_check
          %p694 = pneg %p408
        $region70: #{tpu_custom_call.1} parent=15 // pred_check_branch
          %696 = sbr.rel (%p694) target = $region72
        $region71: #{tpu_custom_call.1} parent=15 // pred_region
          %p697 = scmp.lt.s32.totalorder %s46, 1
          %s698 = scalar_select %p697, %s46, 1
          %s699 = smul.addr %s698, 8
          %s700 = smul.addr %s699, 4
          %s701 = scalar_lea.vmem %s13, %s700
        $region72: #{tpu_custom_call.1} parent=15 // pred_fallthru
          _
        // Predicated region
        $region73: #{tpu_custom_call.1} parent=15 // pred_check
          %p702 = pneg %p434
        $region74: #{tpu_custom_call.1} parent=15 // pred_check_branch
          %704 = sbr.rel (%p702) target = $region76
        $region75: #{tpu_custom_call.1} parent=15 // pred_region
          %p705 = scmp.lt.s32.totalorder %s46, 1
          %s706 = scalar_select %p705, %s46, 1
          %s707 = scalar_lea.vmem %s14, %s706
        $region76: #{tpu_custom_call.1} parent=15 // pred_fallthru
          _
        // Predicated region
        $region77: #{tpu_custom_call.1} parent=15 // pred_check
          %p708 = pneg %p460
        $region78: #{tpu_custom_call.1} parent=15 // pred_check_branch
          %710 = sbr.rel (%p708) target = $region80
        $region79: #{tpu_custom_call.1} parent=15 // pred_region
          %p711 = scmp.lt.s32.totalorder %s46, 1
          %s712 = scalar_select %p711, %s46, 1
          %s713 = scalar_lea.vmem %s15, %s712
        $region80: #{tpu_custom_call.1} parent=15 // pred_fallthru
          _
        // Predicated region
        $region81: #{tpu_custom_call.1} parent=15 // pred_check
          %p714 = pneg %p486
        $region82: #{tpu_custom_call.1} parent=15 // pred_check_branch
          %716 = sbr.rel (%p714) target = $region84
        $region83: #{tpu_custom_call.1} parent=15 // pred_region
          %p717 = scmp.lt.s32.totalorder %s46, 1
          %s718 = scalar_select %p717, %s46, 1
          %s719 = scalar_lea.vmem %s16, %s718
        $region84: #{tpu_custom_call.1} parent=15 // pred_fallthru
          _
      $region16: #{tpu_custom_call.1} parent=5 // pred_fallthru
        _
      %p720 = scmp.le.s32.totalorder 1, %s38
      %p721 = scmp.lt.s32.totalorder %s38, 5
      %p722 = pnand %p720, %p721
      %p723 = pneg %p722
      // Predicated region
      $region85: #{tpu_custom_call.1} parent=5 // pred_check
        _
      $region86: #{tpu_custom_call.1} parent=5 // pred_check_branch
        %725 = sbr.rel (%p722) target = $region88
      $region87: #{tpu_custom_call.1} parent=5 // pred_region
        %s726 = ssub.s32 %s38, 1
        %s727 = sand.u32 %s63, 1
        %s728 = scalar_lea.sflag [#allocation3], %s727
        %s729 = sand.u32 %s63, 1
        %s730 = smul.addr %s729, 8
        %s731 = scalar_lea.vmem [#allocation2], %s730
        // Predicated region
        $region89: #{tpu_custom_call.1} parent=87 // pred_check
          %p732 = pneg %p76
        $region90: #{tpu_custom_call.1} parent=87 // pred_check_branch
          %734 = sbr.rel (%p732) target = $region92
        $region91: #{tpu_custom_call.1} parent=87 // pred_region
          %735 = dma.done %s728, 128
        $region92: #{tpu_custom_call.1} parent=87 // pred_fallthru
          _
        %s736 = sand.u32 %s43, 1
        %s737 = scalar_lea.sflag [#allocation6], %s736
        %s738 = sand.u32 %s193, 1
        %s739 = scalar_lea.vmem [#allocation5], %s738
        // Predicated region
        $region93: #{tpu_custom_call.1} parent=87 // pred_check
          %p740 = pneg %p206
        $region94: #{tpu_custom_call.1} parent=87 // pred_check_branch
          %742 = sbr.rel (%p740) target = $region96
        $region95: #{tpu_custom_call.1} parent=87 // pred_region
          %743 = dma.done %s737, 16
        $region96: #{tpu_custom_call.1} parent=87 // pred_fallthru
          _
        %s744 = sand.u32 %s43, 1
        %s745 = scalar_lea.sflag [#allocation6], %s744
        %s746 = sand.u32 %s219, 1
        %s747 = scalar_lea.vmem [#allocation7], %s746
        // Predicated region
        $region97: #{tpu_custom_call.1} parent=87 // pred_check
          %p748 = pneg %p232
        $region98: #{tpu_custom_call.1} parent=87 // pred_check_branch
          %750 = sbr.rel (%p748) target = $region100
        $region99: #{tpu_custom_call.1} parent=87 // pred_region
          %751 = dma.done %s745, 16
        $region100: #{tpu_custom_call.1} parent=87 // pred_fallthru
          _
        %s752 = sand.u32 %s43, 1
        %s753 = scalar_lea.sflag [#allocation9], %s752
        %s754 = sand.u32 %s245, 1
        %s755 = smul.addr %s754, 16
        %s756 = scalar_lea.vmem [#allocation8], %s755
        // Predicated region
        $region101: #{tpu_custom_call.1} parent=87 // pred_check
          %p757 = pneg %p258
        $region102: #{tpu_custom_call.1} parent=87 // pred_check_branch
          %759 = sbr.rel (%p757) target = $region104
        $region103: #{tpu_custom_call.1} parent=87 // pred_region
          %760 = dma.done %s753, 256
        $region104: #{tpu_custom_call.1} parent=87 // pred_fallthru
          _
        %s761 = sand.u32 %s43, 1
        %s762 = scalar_lea.sflag [#allocation9], %s761
        %s763 = sand.u32 %s271, 1
        %s764 = scalar_lea.vmem [#allocation10], %s763
        // Predicated region
        $region105: #{tpu_custom_call.1} parent=87 // pred_check
          %p765 = pneg %p284
        $region106: #{tpu_custom_call.1} parent=87 // pred_check_branch
          %767 = sbr.rel (%p765) target = $region108
        $region107: #{tpu_custom_call.1} parent=87 // pred_region
          %768 = dma.done %s762, 16
        $region108: #{tpu_custom_call.1} parent=87 // pred_fallthru
          _
        %s769 = sand.u32 %s297, 1
        %s770 = scalar_lea.sflag [#allocation12], %s769
        %s771 = sand.u32 %s297, 1
        %s772 = scalar_lea.vmem [#allocation11], %s771
        // Predicated region
        $region109: #{tpu_custom_call.1} parent=87 // pred_check
          %p773 = pneg %p310
        $region110: #{tpu_custom_call.1} parent=87 // pred_check_branch
          %775 = sbr.rel (%p773) target = $region112
        $region111: #{tpu_custom_call.1} parent=87 // pred_region
          %776 = dma.done %s770, 16
        $region112: #{tpu_custom_call.1} parent=87 // pred_fallthru
          _
        %s777 = sand.u32 %s63, 1
        %s778 = scalar_lea.sflag [#allocation3], %s777
        %s779 = sand.u32 %s63, 1
        %s780 = smul.addr %s779, 8
        %s781 = scalar_lea.vmem [#allocation2], %s780
        %p782 = pneg %p76
        %p783 = pneg %p73
        %p784 = scmp.lt.s32.totalorder %s48, 1
        %s785 = scalar_select %p784, %s48, 1
        %s786 = smul.addr %s785, 4
        %s787 = smul.addr %s786, 4
        %s788 = scalar_lea.vmem %s1, %s787
        %p789 = pneg %p102
        %p790 = pneg %p99
        %p791 = scmp.lt.s32.totalorder %s48, 1
        %s792 = scalar_select %p791, %s48, 1
        %s793 = smul.addr %s792, 4
        %s794 = smul.addr %s793, 4
        %s795 = scalar_lea.vmem %s2, %s794
        %p796 = pneg %p128
        %p797 = pneg %p125
        %p798 = scmp.lt.s32.totalorder %s48, 1
        %s799 = scalar_select %p798, %s48, 1
        %s800 = smul.addr %s799, 4
        %s801 = smul.addr %s800, 4
        %s802 = scalar_lea.vmem %s3, %s801
        %p803 = pneg %p154
        %p804 = pneg %p151
        %p805 = scmp.lt.s32.totalorder %s48, 1
        %s806 = scalar_select %p805, %s48, 1
        %s807 = scalar_lea.vmem %s4, %s806
        %p808 = pneg %p180
        %p809 = pneg %p177
        %s810 = sand.u32 %s43, 1
        %s811 = scalar_lea.sflag [#allocation6], %s810
        %s812 = sand.u32 %s193, 1
        %s813 = scalar_lea.vmem [#allocation5], %s812
        %p814 = pneg %p206
        %p815 = pneg %p203
        %s816 = sand.u32 %s43, 1
        %s817 = scalar_lea.sflag [#allocation6], %s816
        %s818 = sand.u32 %s219, 1
        %s819 = scalar_lea.vmem [#allocation7], %s818
        %p820 = pneg %p232
        %p821 = pneg %p229
        %s822 = sand.u32 %s43, 1
        %s823 = scalar_lea.sflag [#allocation9], %s822
        %s824 = sand.u32 %s245, 1
        %s825 = smul.addr %s824, 16
        %s826 = scalar_lea.vmem [#allocation8], %s825
        %p827 = pneg %p258
        %p828 = pneg %p255
        %s829 = sand.u32 %s43, 1
        %s830 = scalar_lea.sflag [#allocation9], %s829
        %s831 = sand.u32 %s271, 1
        %s832 = scalar_lea.vmem [#allocation10], %s831
        %p833 = pneg %p284
        %p834 = pneg %p281
        %s835 = sand.u32 %s297, 1
        %s836 = scalar_lea.sflag [#allocation12], %s835
        %s837 = sand.u32 %s297, 1
        %s838 = scalar_lea.vmem [#allocation11], %s837
        %p839 = pneg %p310
        %p840 = pneg %p307
        %p841 = scmp.lt.s32.totalorder %s48, 1
        %s842 = scalar_select %p841, %s48, 1
        %s843 = scalar_lea.vmem %s10, %s842
        %p844 = pneg %p336
        %p845 = pneg %p333
        %p846 = scmp.lt.s32.totalorder %s48, 1
        %s847 = scalar_select %p846, %s48, 1
        %s848 = smul.addr %s847, 4
        %s849 = smul.addr %s848, 4
        %s850 = scalar_lea.vmem %s11, %s849
        %p851 = pneg %p362
        %p852 = pneg %p359
        %p853 = scmp.lt.s32.totalorder %s48, 1
        %s854 = scalar_select %p853, %s48, 1
        %s855 = scalar_lea.vmem %s12, %s854
        %p856 = pneg %p388
        %p857 = pneg %p385
        %p858 = scmp.lt.s32.totalorder %s48, 1
        %s859 = scalar_select %p858, %s48, 1
        %s860 = smul.addr %s859, 8
        %s861 = smul.addr %s860, 4
        %s862 = scalar_lea.vmem %s13, %s861
        %p863 = pneg %p414
        %p864 = pneg %p411
        %p865 = scmp.lt.s32.totalorder %s48, 1
        %s866 = scalar_select %p865, %s48, 1
        %s867 = scalar_lea.vmem %s14, %s866
        %p868 = pneg %p440
        %p869 = pneg %p437
        %p870 = scmp.lt.s32.totalorder %s48, 1
        %s871 = scalar_select %p870, %s48, 1
        %s872 = scalar_lea.vmem %s15, %s871
        %p873 = pneg %p466
        %p874 = pneg %p463
        %p875 = scmp.lt.s32.totalorder %s48, 1
        %s876 = scalar_select %p875, %s48, 1
        %s877 = scalar_lea.vmem %s16, %s876
        %p878 = pneg %p492
        %p879 = pneg %p489
        %p880 = pneg %p518
        %p881 = pneg %p515
        %s882 = sand.u32 %s505, 1
        %s883 = scalar_lea.sflag [#allocation4], %s882
        %s884 = sand.u32 %s505, 1
        %s885 = smul.addr %s884, 8
        %s886 = scalar_lea.vmem [#allocation13], %s885
        %p887 = scmp.lt.s32.totalorder %s48, 1
        %s888 = scalar_select %p887, %s48, 1
        %s889 = smul.addr %s888, 4
        %s890 = smul.addr %s889, 4
        %s891 = scalar_lea.vmem %s1, %s890
        %p892 = scmp.lt.s32.totalorder %s48, 1
        %s893 = scalar_select %p892, %s48, 1
        %s894 = smul.addr %s893, 4
        %s895 = smul.addr %s894, 4
        %s896 = scalar_lea.vmem %s2, %s895
        %p897 = scmp.lt.s32.totalorder %s48, 1
        %s898 = scalar_select %p897, %s48, 1
        %s899 = smul.addr %s898, 4
        %s900 = smul.addr %s899, 4
        %s901 = scalar_lea.vmem %s3, %s900
        %p902 = scmp.lt.s32.totalorder %s48, 1
        %s903 = scalar_select %p902, %s48, 1
        %s904 = scalar_lea.vmem %s4, %s903
        %p905 = scmp.lt.s32.totalorder %s48, 1
        %s906 = scalar_select %p905, %s48, 1
        %s907 = scalar_lea.vmem %s10, %s906
        %p908 = scmp.lt.s32.totalorder %s48, 1
        %s909 = scalar_select %p908, %s48, 1
        %s910 = smul.addr %s909, 4
        %s911 = smul.addr %s910, 4
        %s912 = scalar_lea.vmem %s11, %s911
        %p913 = scmp.lt.s32.totalorder %s48, 1
        %s914 = scalar_select %p913, %s48, 1
        %s915 = scalar_lea.vmem %s12, %s914
        %p916 = scmp.lt.s32.totalorder %s48, 1
        %s917 = scalar_select %p916, %s48, 1
        %s918 = smul.addr %s917, 8
        %s919 = smul.addr %s918, 4
        %s920 = scalar_lea.vmem %s13, %s919
        %p921 = scmp.lt.s32.totalorder %s48, 1
        %s922 = scalar_select %p921, %s48, 1
        %s923 = scalar_lea.vmem %s14, %s922
        %p924 = scmp.lt.s32.totalorder %s48, 1
        %s925 = scalar_select %p924, %s48, 1
        %s926 = scalar_lea.vmem %s15, %s925
        %p927 = scmp.lt.s32.totalorder %s48, 1
        %s928 = scalar_select %p927, %s48, 1
        %s929 = scalar_lea.vmem %s16, %s928
        %p931 = scmp.eq.s32.totalorder %s48, 0
        // Predicated region
        $region113: #{tpu_custom_call.1} parent=87 // pred_check
          %p932 = pneg %p931
        $region114: #{tpu_custom_call.1} parent=87 // pred_check_branch
          %934 = sbr.rel (%p932) target = $region116
        $region115: #{tpu_custom_call.1} parent=87 // pred_region
          %v935 = vld [vmem:[%s731] sm:$0xff]
          %vm936 = vcmask 261120
          %937 = vst.msk [vmem:[%s886] sm:$0xff] %vm936, %v935
        $region116: #{tpu_custom_call.1} parent=87 // pred_fallthru
          _
        %v938 = vld [vmem:[%s886] sm:$0xff]
        %v939 = vpack.c.bf16 %v938, %v938
        %v940 = vld [vmem:[%s891] sm:$0xf]
        %v941 = vld [vmem:[%s891 + $0x4] sm:$0xf]
        %v942 = vld [vmem:[%s891 + $0x8] sm:$0xf]
        %v943 = vld [vmem:[%s891 + $0xc] sm:$0xf]
        %v944 = vld [vmem:[%s904] sm:$0x1]
        %v946 = vlaneseq
        %v947 = vshrl.u32 %v946, 7
        %v948 = vsub.s32 0, %v947
        %v949 = vrot.slane %v944, %v948
        %v955 = vunpack.c.l.b16 %v940
        %v956 = vunpack.c.l.b16 %v941
        %v957 = vunpack.c.l.b16 %v942
        %v958 = vunpack.c.l.b16 %v943
        %v959 = vpack.c.b16 %v956, %v955
        %v960 = vpack.c.b16 %v958, %v957
        %vm963 = vcmask 261120
        %v965 = vsel %vm963, %v939, 0
        %967 = vmatprep.subr.bf16.mxu0 0
        %968 = vmatpush1.bf16.msra.mxu0 %v959
        %969 = vmatprep.subr.bf16.mxu0 0
        %970 = vmatpush1.bf16.msra.mxu0 %v960
        %971 = vmatprep.subr.bf16.mxu0 0
        %972 = vmatpush1.bf16.msra.mxu0 0
        %973 = vmatprep.subr.bf16.mxu0 0
        %974 = vmatpush1.bf16.msra.mxu0 0
        %975 = vmatprep.subr.bf16.mxu0 0
        %976 = vmatpush1.bf16.msra.mxu0 0
        %977 = vmatprep.subr.bf16.mxu0 0
        %978 = vmatpush1.bf16.msra.mxu0 0
        %979 = vmatprep.subr.bf16.mxu0 0
        %980 = vmatpush1.bf16.msra.mxu0 0
        %981 = vmatprep.subr.bf16.mxu0 0
        %982 = vmatpush1.bf16.msra.mxu0 0
        %983 = vmatprep.subr.bf16.mxu0 0
        %984 = vmatpush1.bf16.msra.mxu0 0
        %985 = vmatprep.subr.bf16.mxu0 0
        %986 = vmatpush1.bf16.msra.mxu0 0
        %987 = vmatprep.subr.bf16.mxu0 0
        %988 = vmatpush1.bf16.msra.mxu0 0
        %989 = vmatprep.subr.bf16.mxu0 0
        %990 = vmatpush1.bf16.msra.mxu0 0
        %991 = vmatprep.subr.bf16.mxu0 0
        %992 = vmatpush1.bf16.msra.mxu0 0
        %993 = vmatprep.subr.bf16.mxu0 0
        %994 = vmatpush1.bf16.msra.mxu0 0
        %995 = vmatprep.subr.bf16.mxu0 0
        %996 = vmatpush1.bf16.msra.mxu0 0
        %997 = vmatprep.subr.bf16.mxu0 0
        %998 = vmatpush1.bf16.msra.mxu0 0
        %999 = vmatprep.mubr.bf16.mxu0 0
        %1000 = vmatmul.mubr.bf16.gmra.mrb[0].mxu0 %v965
        %v1001 = vpop.f32.mrb[0].mxu0
        %v1002 = vadd.f32 %v949, %v1001
        %v1003 = vpop.f32.mrb[0].mxu0
        %v1004 = vpop.f32.mrb[0].mxu0
        %v1005 = vpop.f32.mrb[0].mxu0
        %1006 = vdwg.mxu0
        %v1007 = vmul.f32 %v1002, 0.35355338
        %v1008 = vld [vmem:[%s896] sm:$0xf]
        %v1009 = vld [vmem:[%s896 + $0x4] sm:$0xf]
        %v1010 = vld [vmem:[%s896 + $0x8] sm:$0xf]
        %v1011 = vld [vmem:[%s896 + $0xc] sm:$0xf]
        %v1012 = vld [vmem:[%s739] sm:$0x1]
        %v1014 = vlaneseq
        %v1015 = vshrl.u32 %v1014, 7
        %v1016 = vsub.s32 0, %v1015
        %v1017 = vrot.slane %v1012, %v1016
        %v1023 = vunpack.c.l.b16 %v1008
        %v1024 = vunpack.c.l.b16 %v1009
        %v1025 = vunpack.c.l.b16 %v1010
        %v1026 = vunpack.c.l.b16 %v1011
        %v1027 = vpack.c.b16 %v1024, %v1023
        %v1028 = vpack.c.b16 %v1026, %v1025
        %1031 = vmatprep.subr.bf16.mxu0 0
        %1032 = vmatpush1.bf16.msra.mxu0 %v1027
        %1033 = vmatprep.subr.bf16.mxu0 0
        %1034 = vmatpush1.bf16.msra.mxu0 %v1028
        %1035 = vmatprep.subr.bf16.mxu0 0
        %1036 = vmatpush1.bf16.msra.mxu0 0
        %1037 = vmatprep.subr.bf16.mxu0 0
        %1038 = vmatpush1.bf16.msra.mxu0 0
        %1039 = vmatprep.subr.bf16.mxu0 0
        %1040 = vmatpush1.bf16.msra.mxu0 0
        %1041 = vmatprep.subr.bf16.mxu0 0
        %1042 = vmatpush1.bf16.msra.mxu0 0
        %1043 = vmatprep.subr.bf16.mxu0 0
        %1044 = vmatpush1.bf16.msra.mxu0 0
        %1045 = vmatprep.subr.bf16.mxu0 0
        %1046 = vmatpush1.bf16.msra.mxu0 0
        %1047 = vmatprep.subr.bf16.mxu0 0
        %1048 = vmatpush1.bf16.msra.mxu0 0
        %1049 = vmatprep.subr.bf16.mxu0 0
        %1050 = vmatpush1.bf16.msra.mxu0 0
        %1051 = vmatprep.subr.bf16.mxu0 0
        %1052 = vmatpush1.bf16.msra.mxu0 0
        %1053 = vmatprep.subr.bf16.mxu0 0
        %1054 = vmatpush1.bf16.msra.mxu0 0
        %1055 = vmatprep.subr.bf16.mxu0 0
        %1056 = vmatpush1.bf16.msra.mxu0 0
        %1057 = vmatprep.subr.bf16.mxu0 0
        %1058 = vmatpush1.bf16.msra.mxu0 0
        %1059 = vmatprep.subr.bf16.mxu0 0
        %1060 = vmatpush1.bf16.msra.mxu0 0
        %1061 = vmatprep.subr.bf16.mxu0 0
        %1062 = vmatpush1.bf16.msra.mxu0 0
        %1063 = vmatprep.mubr.bf16.mxu0 0
        %1064 = vmatmul.mubr.bf16.gmra.mrb[0].mxu0 %v965
        %v1065 = vpop.f32.mrb[0].mxu0
        %v1066 = vadd.f32 %v1017, %v1065
        %v1067 = vpop.f32.mrb[0].mxu0
        %v1068 = vpop.f32.mrb[0].mxu0
        %v1069 = vpop.f32.mrb[0].mxu0
        %1070 = vdwg.mxu0
        %v1071 = vld [vmem:[%s901] sm:$0xf]
        %v1072 = vld [vmem:[%s901 + $0x4] sm:$0xf]
        %v1073 = vld [vmem:[%s901 + $0x8] sm:$0xf]
        %v1074 = vld [vmem:[%s901 + $0xc] sm:$0xf]
        %v1075 = vld [vmem:[%s747] sm:$0x1]
        %v1077 = vlaneseq
        %v1078 = vshrl.u32 %v1077, 7
        %v1079 = vsub.s32 0, %v1078
        %v1080 = vrot.slane %v1075, %v1079
        %v1086 = vunpack.c.l.b16 %v1071
        %v1087 = vunpack.c.l.b16 %v1072
        %v1088 = vunpack.c.l.b16 %v1073
        %v1089 = vunpack.c.l.b16 %v1074
        %v1090 = vpack.c.b16 %v1087, %v1086
        %v1091 = vpack.c.b16 %v1089, %v1088
        %1094 = vmatprep.subr.bf16.mxu0 0
        %1095 = vmatpush1.bf16.msra.mxu0 %v1090
        %1096 = vmatprep.subr.bf16.mxu0 0
        %1097 = vmatpush1.bf16.msra.mxu0 %v1091
        %1098 = vmatprep.subr.bf16.mxu0 0
        %1099 = vmatpush1.bf16.msra.mxu0 0
        %1100 = vmatprep.subr.bf16.mxu0 0
        %1101 = vmatpush1.bf16.msra.mxu0 0
        %1102 = vmatprep.subr.bf16.mxu0 0
        %1103 = vmatpush1.bf16.msra.mxu0 0
        %1104 = vmatprep.subr.bf16.mxu0 0
        %1105 = vmatpush1.bf16.msra.mxu0 0
        %1106 = vmatprep.subr.bf16.mxu0 0
        %1107 = vmatpush1.bf16.msra.mxu0 0
        %1108 = vmatprep.subr.bf16.mxu0 0
        %1109 = vmatpush1.bf16.msra.mxu0 0
        %1110 = vmatprep.subr.bf16.mxu0 0
        %1111 = vmatpush1.bf16.msra.mxu0 0
        %1112 = vmatprep.subr.bf16.mxu0 0
        %1113 = vmatpush1.bf16.msra.mxu0 0
        %1114 = vmatprep.subr.bf16.mxu0 0
        %1115 = vmatpush1.bf16.msra.mxu0 0
        %1116 = vmatprep.subr.bf16.mxu0 0
        %1117 = vmatpush1.bf16.msra.mxu0 0
        %1118 = vmatprep.subr.bf16.mxu0 0
        %1119 = vmatpush1.bf16.msra.mxu0 0
        %1120 = vmatprep.subr.bf16.mxu0 0
        %1121 = vmatpush1.bf16.msra.mxu0 0
        %1122 = vmatprep.subr.bf16.mxu0 0
        %1123 = vmatpush1.bf16.msra.mxu0 0
        %1124 = vmatprep.subr.bf16.mxu0 0
        %1125 = vmatpush1.bf16.msra.mxu0 0
        %1126 = vmatprep.mubr.bf16.mxu0 0
        %1127 = vmatmul.mubr.bf16.gmra.mrb[0].mxu0 %v965
        %v1128 = vpop.f32.mrb[0].mxu0
        %v1129 = vadd.f32 %v1080, %v1128
        %v1130 = vpop.f32.mrb[0].mxu0
        %v1131 = vpop.f32.mrb[0].mxu0
        %v1132 = vpop.f32.mrb[0].mxu0
        %1133 = vdwg.mxu0
        %v1134 = vpack.c.bf16 %v1007, %v1007
        %v1135 = vpack.c.bf16 %v1066, %v1066
        %v1136 = vpack.c.bf16 %v1129, %v1129
        %v1137 = vlaneseq
        %v1138 = vshrl.u32 %v1137, 7
        %v1139 = vlaneseq
        %v1140 = vand.u32 %v1139, 127
        %vm1141 = vcmp.le.s32.totalorder %v1140, %v1138
        %v1142 = vsel %vm1141, 0.0, -1e+30
        %vm1143 = vcmask 64512
        %v1145 = vsel %vm1143, %v1134, 0
        %v1148 = vsel %vm1143, %v1135, 0
        %1150 = vmatprep.subr.bf16.mxu0 0
        %1151 = vmatpush1.bf16.xpose.msra.mxu0 %v1148
        %1152 = vmatprep.subr.bf16.mxu0 0
        %1153 = vmatpush1.bf16.xpose.msra.mxu0 0
        %1154 = vmatprep.subr.bf16.mxu0 0
        %1155 = vmatpush1.bf16.xpose.msra.mxu0 0
        %1156 = vmatprep.subr.bf16.mxu0 0
        %1157 = vmatpush1.bf16.xpose.msra.mxu0 0
        %1158 = vmatprep.subr.bf16.mxu0 0
        %1159 = vmatpush1.bf16.xpose.msra.mxu0 0
        %1160 = vmatprep.subr.bf16.mxu0 0
        %1161 = vmatpush1.bf16.xpose.msra.mxu0 0
        %1162 = vmatprep.subr.bf16.mxu0 0
        %1163 = vmatpush1.bf16.xpose.msra.mxu0 0
        %1164 = vmatprep.subr.bf16.mxu0 0
        %1165 = vmatpush1.bf16.xpose.msra.mxu0 0
        %1166 = vmatprep.subr.bf16.mxu0 0
        %1167 = vmatpush1.bf16.xpose.msra.mxu0 0
        %1168 = vmatprep.subr.bf16.mxu0 0
        %1169 = vmatpush1.bf16.xpose.msra.mxu0 0
        %1170 = vmatprep.subr.bf16.mxu0 0
        %1171 = vmatpush1.bf16.xpose.msra.mxu0 0
        %1172 = vmatprep.subr.bf16.mxu0 0
        %1173 = vmatpush1.bf16.xpose.msra.mxu0 0
        %1174 = vmatprep.subr.bf16.mxu0 0
        %1175 = vmatpush1.bf16.xpose.msra.mxu0 0
        %1176 = vmatprep.subr.bf16.mxu0 0
        %1177 = vmatpush1.bf16.xpose.msra.mxu0 0
        %1178 = vmatprep.subr.bf16.mxu0 0
        %1179 = vmatpush1.bf16.xpose.msra.mxu0 0
        %1180 = vmatprep.subr.bf16.mxu0 0
        %1181 = vmatpush1.bf16.xpose.msra.mxu0 0
        %1182 = vmatprep.mubr.bf16.mxu0 0
        %1183 = vmatmul.mubr.bf16.gmra.mrb[0].mxu0 %v1145
        %v1184 = vpop.f32.mrb[0].mxu0
        %v1185 = vadd.f32 %v1142, %v1184
        %v1186 = vpop.f32.mrb[0].mxu0
        %v1187 = vpop.f32.mrb[0].mxu0
        %v1188 = vpop.f32.mrb[0].mxu0
        %1189 = vdwg.mxu0
        %v1190 = vsel %vm1143, %v1185, -inf
        %1191 = vmax.xlane.f32.xlu0 %v1190
        %v1192 = vpop.xlane.xlu0 %1191
        %v1193 = vsub.f32 %v1185, %v1192
        %v1194 = vmul.f32 %v1193, 1.442695
        %v1195 = vpow.pop %v1194
        %v1196 = vsel %vm1143, %v1195, 0.0
        %1197 = vadd.xlane.f32.xlu0 %v1196
        %v1198 = vpop.xlane.xlu0 %1197
        %v1199 = vrcp.pop %v1198
        %v1200 = vmul.f32 %v1195, %v1199
        %v1201 = vpack.c.bf16 %v1200, %v1200
        %v1203 = vsel %vm1143, %v1201, 0
        %vm1205 = vcmask 1043456
        %v1207 = vsel %vm1205, %v1136, 0
        %1209 = vmatprep.subr.bf16.mxu0 0
        %1210 = vmatpush1.bf16.msra.mxu0 %v1207
        %1211 = vmatprep.subr.bf16.mxu0 0
        %1212 = vmatpush1.bf16.msra.mxu0 0
        %1213 = vmatprep.subr.bf16.mxu0 0
        %1214 = vmatpush1.bf16.msra.mxu0 0
        %1215 = vmatprep.subr.bf16.mxu0 0
        %1216 = vmatpush1.bf16.msra.mxu0 0
        %1217 = vmatprep.subr.bf16.mxu0 0
        %1218 = vmatpush1.bf16.msra.mxu0 0
        %1219 = vmatprep.subr.bf16.mxu0 0
        %1220 = vmatpush1.bf16.msra.mxu0 0
        %1221 = vmatprep.subr.bf16.mxu0 0
        %1222 = vmatpush1.bf16.msra.mxu0 0
        %1223 = vmatprep.subr.bf16.mxu0 0
        %1224 = vmatpush1.bf16.msra.mxu0 0
        %1225 = vmatprep.subr.bf16.mxu0 0
        %1226 = vmatpush1.bf16.msra.mxu0 0
        %1227 = vmatprep.subr.bf16.mxu0 0
        %1228 = vmatpush1.bf16.msra.mxu0 0
        %1229 = vmatprep.subr.bf16.mxu0 0
        %1230 = vmatpush1.bf16.msra.mxu0 0
        %1231 = vmatprep.subr.bf16.mxu0 0
        %1232 = vmatpush1.bf16.msra.mxu0 0
        %1233 = vmatprep.subr.bf16.mxu0 0
        %1234 = vmatpush1.bf16.msra.mxu0 0
        %1235 = vmatprep.subr.bf16.mxu0 0
        %1236 = vmatpush1.bf16.msra.mxu0 0
        %1237 = vmatprep.subr.bf16.mxu0 0
        %1238 = vmatpush1.bf16.msra.mxu0 0
        %1239 = vmatprep.subr.bf16.mxu0 0
        %1240 = vmatpush1.bf16.msra.mxu0 0
        %1241 = vmatprep.mubr.bf16.mxu0 0
        %1242 = vmatmul.mubr.bf16.gmra.mrb[0].mxu0 %v1203
        %v1243 = vpop.f32.mrb[0].mxu0
        %v1244 = vadd.f32 0.0, %v1243
        %v1245 = vpop.f32.mrb[0].mxu0
        %v1246 = vpop.f32.mrb[0].mxu0
        %v1247 = vpop.f32.mrb[0].mxu0
        %1248 = vdwg.mxu0
        %v1249 = vpack.c.bf16 %v1244, %v1244
        %v1250 = vld [vmem:[%s756] sm:$0xf]
        %1252 = vrot.lane.b32.xlu0 %v1134, 120
        %v1253 = vpop.permute.xlu0 %1252
        %1255 = vrot.lane.b32.xlu0 %v1135, 120
        %v1256 = vpop.permute.xlu0 %1255
        %v1258 = vsel %vm1143, %v1253, 0
        %v1261 = vsel %vm1143, %v1256, 0
        %1263 = vmatprep.subr.bf16.mxu0 0
        %1264 = vmatpush1.bf16.xpose.msra.mxu0 %v1261
        %1265 = vmatprep.subr.bf16.mxu0 0
        %1266 = vmatpush1.bf16.xpose.msra.mxu0 0
        %1267 = vmatprep.subr.bf16.mxu0 0
        %1268 = vmatpush1.bf16.xpose.msra.mxu0 0
        %1269 = vmatprep.subr.bf16.mxu0 0
        %1270 = vmatpush1.bf16.xpose.msra.mxu0 0
        %1271 = vmatprep.subr.bf16.mxu0 0
        %1272 = vmatpush1.bf16.xpose.msra.mxu0 0
        %1273 = vmatprep.subr.bf16.mxu0 0
        %1274 = vmatpush1.bf16.xpose.msra.mxu0 0
        %1275 = vmatprep.subr.bf16.mxu0 0
        %1276 = vmatpush1.bf16.xpose.msra.mxu0 0
        %1277 = vmatprep.subr.bf16.mxu0 0
        %1278 = vmatpush1.bf16.xpose.msra.mxu0 0
        %1279 = vmatprep.subr.bf16.mxu0 0
        %1280 = vmatpush1.bf16.xpose.msra.mxu0 0
        %1281 = vmatprep.subr.bf16.mxu0 0
        %1282 = vmatpush1.bf16.xpose.msra.mxu0 0
        %1283 = vmatprep.subr.bf16.mxu0 0
        %1284 = vmatpush1.bf16.xpose.msra.mxu0 0
        %1285 = vmatprep.subr.bf16.mxu0 0
        %1286 = vmatpush1.bf16.xpose.msra.mxu0 0
        %1287 = vmatprep.subr.bf16.mxu0 0
        %1288 = vmatpush1.bf16.xpose.msra.mxu0 0
        %1289 = vmatprep.subr.bf16.mxu0 0
        %1290 = vmatpush1.bf16.xpose.msra.mxu0 0
        %1291 = vmatprep.subr.bf16.mxu0 0
        %1292 = vmatpush1.bf16.xpose.msra.mxu0 0
        %1293 = vmatprep.subr.bf16.mxu0 0
        %1294 = vmatpush1.bf16.xpose.msra.mxu0 0
        %1295 = vmatprep.mubr.bf16.mxu0 0
        %1296 = vmatmul.mubr.bf16.gmra.mrb[0].mxu0 %v1258
        %v1297 = vpop.f32.mrb[0].mxu0
        %v1298 = vadd.f32 %v1142, %v1297
        %v1299 = vpop.f32.mrb[0].mxu0
        %v1300 = vpop.f32.mrb[0].mxu0
        %v1301 = vpop.f32.mrb[0].mxu0
        %1302 = vdwg.mxu0
        %v1303 = vsel %vm1143, %v1298, -inf
        %1304 = vmax.xlane.f32.xlu0 %v1303
        %v1305 = vpop.xlane.xlu0 %1304
        %v1306 = vsub.f32 %v1298, %v1305
        %v1307 = vmul.f32 %v1306, 1.442695
        %v1308 = vpow.pop %v1307
        %v1309 = vsel %vm1143, %v1308, 0.0
        %1310 = vadd.xlane.f32.xlu0 %v1309
        %v1311 = vpop.xlane.xlu0 %1310
        %v1312 = vrcp.pop %v1311
        %v1313 = vmul.f32 %v1308, %v1312
        %v1314 = vpack.c.bf16 %v1313, %v1313
        %1316 = vrot.lane.b32.xlu0 %v1136, 120
        %v1317 = vpop.permute.xlu0 %1316
        %v1319 = vsel %vm1143, %v1314, 0
        %v1322 = vsel %vm1205, %v1317, 0
        %1324 = vmatprep.subr.bf16.mxu0 0
        %1325 = vmatpush1.bf16.msra.mxu0 %v1322
        %1326 = vmatprep.subr.bf16.mxu0 0
        %1327 = vmatpush1.bf16.msra.mxu0 0
        %1328 = vmatprep.subr.bf16.mxu0 0
        %1329 = vmatpush1.bf16.msra.mxu0 0
        %1330 = vmatprep.subr.bf16.mxu0 0
        %1331 = vmatpush1.bf16.msra.mxu0 0
        %1332 = vmatprep.subr.bf16.mxu0 0
        %1333 = vmatpush1.bf16.msra.mxu0 0
        %1334 = vmatprep.subr.bf16.mxu0 0
        %1335 = vmatpush1.bf16.msra.mxu0 0
        %1336 = vmatprep.subr.bf16.mxu0 0
        %1337 = vmatpush1.bf16.msra.mxu0 0
        %1338 = vmatprep.subr.bf16.mxu0 0
        %1339 = vmatpush1.bf16.msra.mxu0 0
        %1340 = vmatprep.subr.bf16.mxu0 0
        %1341 = vmatpush1.bf16.msra.mxu0 0
        %1342 = vmatprep.subr.bf16.mxu0 0
        %1343 = vmatpush1.bf16.msra.mxu0 0
        %1344 = vmatprep.subr.bf16.mxu0 0
        %1345 = vmatpush1.bf16.msra.mxu0 0
        %1346 = vmatprep.subr.bf16.mxu0 0
        %1347 = vmatpush1.bf16.msra.mxu0 0
        %1348 = vmatprep.subr.bf16.mxu0 0
        %1349 = vmatpush1.bf16.msra.mxu0 0
        %1350 = vmatprep.subr.bf16.mxu0 0
        %1351 = vmatpush1.bf16.msra.mxu0 0
        %1352 = vmatprep.subr.bf16.mxu0 0
        %1353 = vmatpush1.bf16.msra.mxu0 0
        %1354 = vmatprep.subr.bf16.mxu0 0
        %1355 = vmatpush1.bf16.msra.mxu0 0
        %1356 = vmatprep.mubr.bf16.mxu0 0
        %1357 = vmatmul.mubr.bf16.gmra.mrb[0].mxu0 %v1319
        %v1358 = vpop.f32.mrb[0].mxu0
        %v1359 = vadd.f32 0.0, %v1358
        %v1360 = vpop.f32.mrb[0].mxu0
        %v1361 = vpop.f32.mrb[0].mxu0
        %v1362 = vpop.f32.mrb[0].mxu0
        %1363 = vdwg.mxu0
        %v1364 = vpack.c.bf16 %v1359, %v1359
        %s1365 = scalar_lea.vmem %s756, 4 [#allocation8]
        %v1366 = vld [vmem:[%s1365] sm:$0xf]
        %v1368 = vsel %vm1143, %v1364, 0
        %v1371 = vsel %vm1205, %v1366, 0
        %1373 = vmatprep.subr.bf16.mxu0 0
        %1374 = vmatpush1.bf16.msra.mxu0 %v1371
        %1375 = vmatprep.subr.bf16.mxu0 0
        %1376 = vmatpush1.bf16.msra.mxu0 0
        %1377 = vmatprep.subr.bf16.mxu0 0
        %1378 = vmatpush1.bf16.msra.mxu0 0
        %1379 = vmatprep.subr.bf16.mxu0 0
        %1380 = vmatpush1.bf16.msra.mxu0 0
        %1381 = vmatprep.subr.bf16.mxu0 0
        %1382 = vmatpush1.bf16.msra.mxu0 0
        %1383 = vmatprep.subr.bf16.mxu0 0
        %1384 = vmatpush1.bf16.msra.mxu0 0
        %1385 = vmatprep.subr.bf16.mxu0 0
        %1386 = vmatpush1.bf16.msra.mxu0 0
        %1387 = vmatprep.subr.bf16.mxu0 0
        %1388 = vmatpush1.bf16.msra.mxu0 0
        %1389 = vmatprep.subr.bf16.mxu0 0
        %1390 = vmatpush1.bf16.msra.mxu0 0
        %1391 = vmatprep.subr.bf16.mxu0 0
        %1392 = vmatpush1.bf16.msra.mxu0 0
        %1393 = vmatprep.subr.bf16.mxu0 0
        %1394 = vmatpush1.bf16.msra.mxu0 0
        %1395 = vmatprep.subr.bf16.mxu0 0
        %1396 = vmatpush1.bf16.msra.mxu0 0
        %1397 = vmatprep.subr.bf16.mxu0 0
        %1398 = vmatpush1.bf16.msra.mxu0 0
        %1399 = vmatprep.subr.bf16.mxu0 0
        %1400 = vmatpush1.bf16.msra.mxu0 0
        %1401 = vmatprep.subr.bf16.mxu0 0
        %1402 = vmatpush1.bf16.msra.mxu0 0
        %1403 = vmatprep.subr.bf16.mxu0 0
        %1404 = vmatpush1.bf16.msra.mxu0 0
        %1405 = vmatprep.mubr.bf16.mxu0 0
        %1406 = vmatmul.mubr.bf16.gmra.mrb[0].mxu0 %v1368
        %v1407 = vpop.f32.mrb[0].mxu0
        %v1408 = vadd.f32 0.0, %v1407
        %v1409 = vpop.f32.mrb[0].mxu0
        %v1410 = vpop.f32.mrb[0].mxu0
        %v1411 = vpop.f32.mrb[0].mxu0
        %1412 = vdwg.mxu0
        %v1414 = vsel %vm1143, %v1249, 0
        %v1417 = vsel %vm1205, %v1250, 0
        %1419 = vmatprep.subr.bf16.mxu0 0
        %1420 = vmatpush1.bf16.msra.mxu0 %v1417
        %1421 = vmatprep.subr.bf16.mxu0 0
        %1422 = vmatpush1.bf16.msra.mxu0 0
        %1423 = vmatprep.subr.bf16.mxu0 0
        %1424 = vmatpush1.bf16.msra.mxu0 0
        %1425 = vmatprep.subr.bf16.mxu0 0
        %1426 = vmatpush1.bf16.msra.mxu0 0
        %1427 = vmatprep.subr.bf16.mxu0 0
        %1428 = vmatpush1.bf16.msra.mxu0 0
        %1429 = vmatprep.subr.bf16.mxu0 0
        %1430 = vmatpush1.bf16.msra.mxu0 0
        %1431 = vmatprep.subr.bf16.mxu0 0
        %1432 = vmatpush1.bf16.msra.mxu0 0
        %1433 = vmatprep.subr.bf16.mxu0 0
        %1434 = vmatpush1.bf16.msra.mxu0 0
        %1435 = vmatprep.subr.bf16.mxu0 0
        %1436 = vmatpush1.bf16.msra.mxu0 0
        %1437 = vmatprep.subr.bf16.mxu0 0
        %1438 = vmatpush1.bf16.msra.mxu0 0
        %1439 = vmatprep.subr.bf16.mxu0 0
        %1440 = vmatpush1.bf16.msra.mxu0 0
        %1441 = vmatprep.subr.bf16.mxu0 0
        %1442 = vmatpush1.bf16.msra.mxu0 0
        %1443 = vmatprep.subr.bf16.mxu0 0
        %1444 = vmatpush1.bf16.msra.mxu0 0
        %1445 = vmatprep.subr.bf16.mxu0 0
        %1446 = vmatpush1.bf16.msra.mxu0 0
        %1447 = vmatprep.subr.bf16.mxu0 0
        %1448 = vmatpush1.bf16.msra.mxu0 0
        %1449 = vmatprep.subr.bf16.mxu0 0
        %1450 = vmatpush1.bf16.msra.mxu0 0
        %1451 = vmatprep.mubr.bf16.mxu0 0
        %1452 = vmatmul.mubr.bf16.gmra.mrb[0].mxu0 %v1414
        %v1453 = vpop.f32.mrb[0].mxu0
        %v1454 = vadd.f32 %v1408, %v1453
        %v1455 = vpop.f32.mrb[0].mxu0
        %v1456 = vpop.f32.mrb[0].mxu0
        %v1457 = vpop.f32.mrb[0].mxu0
        %1458 = vdwg.mxu0
        %1459 = vrot.lane.b32.xlu0 %v1134, 112
        %v1460 = vpop.permute.xlu0 %1459
        %1461 = vrot.lane.b32.xlu0 %v1135, 112
        %v1462 = vpop.permute.xlu0 %1461
        %v1464 = vsel %vm1143, %v1460, 0
        %v1467 = vsel %vm1143, %v1462, 0
        %1469 = vmatprep.subr.bf16.mxu0 0
        %1470 = vmatpush1.bf16.xpose.msra.mxu0 %v1467
        %1471 = vmatprep.subr.bf16.mxu0 0
        %1472 = vmatpush1.bf16.xpose.msra.mxu0 0
        %1473 = vmatprep.subr.bf16.mxu0 0
        %1474 = vmatpush1.bf16.xpose.msra.mxu0 0
        %1475 = vmatprep.subr.bf16.mxu0 0
        %1476 = vmatpush1.bf16.xpose.msra.mxu0 0
        %1477 = vmatprep.subr.bf16.mxu0 0
        %1478 = vmatpush1.bf16.xpose.msra.mxu0 0
        %1479 = vmatprep.subr.bf16.mxu0 0
        %1480 = vmatpush1.bf16.xpose.msra.mxu0 0
        %1481 = vmatprep.subr.bf16.mxu0 0
        %1482 = vmatpush1.bf16.xpose.msra.mxu0 0
        %1483 = vmatprep.subr.bf16.mxu0 0
        %1484 = vmatpush1.bf16.xpose.msra.mxu0 0
        %1485 = vmatprep.subr.bf16.mxu0 0
        %1486 = vmatpush1.bf16.xpose.msra.mxu0 0
        %1487 = vmatprep.subr.bf16.mxu0 0
        %1488 = vmatpush1.bf16.xpose.msra.mxu0 0
        %1489 = vmatprep.subr.bf16.mxu0 0
        %1490 = vmatpush1.bf16.xpose.msra.mxu0 0
        %1491 = vmatprep.subr.bf16.mxu0 0
        %1492 = vmatpush1.bf16.xpose.msra.mxu0 0
        %1493 = vmatprep.subr.bf16.mxu0 0
        %1494 = vmatpush1.bf16.xpose.msra.mxu0 0
        %1495 = vmatprep.subr.bf16.mxu0 0
        %1496 = vmatpush1.bf16.xpose.msra.mxu0 0
        %1497 = vmatprep.subr.bf16.mxu0 0
        %1498 = vmatpush1.bf16.xpose.msra.mxu0 0
        %1499 = vmatprep.subr.bf16.mxu0 0
        %1500 = vmatpush1.bf16.xpose.msra.mxu0 0
        %1501 = vmatprep.mubr.bf16.mxu0 0
        %1502 = vmatmul.mubr.bf16.gmra.mrb[0].mxu0 %v1464
        %v1503 = vpop.f32.mrb[0].mxu0
        %v1504 = vadd.f32 %v1142, %v1503
        %v1505 = vpop.f32.mrb[0].mxu0
        %v1506 = vpop.f32.mrb[0].mxu0
        %v1507 = vpop.f32.mrb[0].mxu0
        %1508 = vdwg.mxu0
        %v1509 = vsel %vm1143, %v1504, -inf
        %1510 = vmax.xlane.f32.xlu0 %v1509
        %v1511 = vpop.xlane.xlu0 %1510
        %v1512 = vsub.f32 %v1504, %v1511
        %v1513 = vmul.f32 %v1512, 1.442695
        %v1514 = vpow.pop %v1513
        %v1515 = vsel %vm1143, %v1514, 0.0
        %1516 = vadd.xlane.f32.xlu0 %v1515
        %v1517 = vpop.xlane.xlu0 %1516
        %v1518 = vrcp.pop %v1517
        %v1519 = vmul.f32 %v1514, %v1518
        %v1520 = vpack.c.bf16 %v1519, %v1519
        %1521 = vrot.lane.b32.xlu0 %v1136, 112
        %v1522 = vpop.permute.xlu0 %1521
        %v1524 = vsel %vm1143, %v1520, 0
        %v1527 = vsel %vm1205, %v1522, 0
        %1529 = vmatprep.subr.bf16.mxu0 0
        %1530 = vmatpush1.bf16.msra.mxu0 %v1527
        %1531 = vmatprep.subr.bf16.mxu0 0
        %1532 = vmatpush1.bf16.msra.mxu0 0
        %1533 = vmatprep.subr.bf16.mxu0 0
        %1534 = vmatpush1.bf16.msra.mxu0 0
        %1535 = vmatprep.subr.bf16.mxu0 0
        %1536 = vmatpush1.bf16.msra.mxu0 0
        %1537 = vmatprep.subr.bf16.mxu0 0
        %1538 = vmatpush1.bf16.msra.mxu0 0
        %1539 = vmatprep.subr.bf16.mxu0 0
        %1540 = vmatpush1.bf16.msra.mxu0 0
        %1541 = vmatprep.subr.bf16.mxu0 0
        %1542 = vmatpush1.bf16.msra.mxu0 0
        %1543 = vmatprep.subr.bf16.mxu0 0
        %1544 = vmatpush1.bf16.msra.mxu0 0
        %1545 = vmatprep.subr.bf16.mxu0 0
        %1546 = vmatpush1.bf16.msra.mxu0 0
        %1547 = vmatprep.subr.bf16.mxu0 0
        %1548 = vmatpush1.bf16.msra.mxu0 0
        %1549 = vmatprep.subr.bf16.mxu0 0
        %1550 = vmatpush1.bf16.msra.mxu0 0
        %1551 = vmatprep.subr.bf16.mxu0 0
        %1552 = vmatpush1.bf16.msra.mxu0 0
        %1553 = vmatprep.subr.bf16.mxu0 0
        %1554 = vmatpush1.bf16.msra.mxu0 0
        %1555 = vmatprep.subr.bf16.mxu0 0
        %1556 = vmatpush1.bf16.msra.mxu0 0
        %1557 = vmatprep.subr.bf16.mxu0 0
        %1558 = vmatpush1.bf16.msra.mxu0 0
        %1559 = vmatprep.subr.bf16.mxu0 0
        %1560 = vmatpush1.bf16.msra.mxu0 0
        %1561 = vmatprep.mubr.bf16.mxu0 0
        %1562 = vmatmul.mubr.bf16.gmra.mrb[0].mxu0 %v1524
        %v1563 = vpop.f32.mrb[0].mxu0
        %v1564 = vadd.f32 0.0, %v1563
        %v1565 = vpop.f32.mrb[0].mxu0
        %v1566 = vpop.f32.mrb[0].mxu0
        %v1567 = vpop.f32.mrb[0].mxu0
        %1568 = vdwg.mxu0
        %v1569 = vpack.c.bf16 %v1564, %v1564
        %s1570 = scalar_lea.vmem %s756, 8 [#allocation8]
        %v1571 = vld [vmem:[%s1570] sm:$0xf]
        %v1573 = vsel %vm1143, %v1569, 0
        %v1576 = vsel %vm1205, %v1571, 0
        %1578 = vmatprep.subr.bf16.mxu0 0
        %1579 = vmatpush1.bf16.msra.mxu0 %v1576
        %1580 = vmatprep.subr.bf16.mxu0 0
        %1581 = vmatpush1.bf16.msra.mxu0 0
        %1582 = vmatprep.subr.bf16.mxu0 0
        %1583 = vmatpush1.bf16.msra.mxu0 0
        %1584 = vmatprep.subr.bf16.mxu0 0
        %1585 = vmatpush1.bf16.msra.mxu0 0
        %1586 = vmatprep.subr.bf16.mxu0 0
        %1587 = vmatpush1.bf16.msra.mxu0 0
        %1588 = vmatprep.subr.bf16.mxu0 0
        %1589 = vmatpush1.bf16.msra.mxu0 0
        %1590 = vmatprep.subr.bf16.mxu0 0
        %1591 = vmatpush1.bf16.msra.mxu0 0
        %1592 = vmatprep.subr.bf16.mxu0 0
        %1593 = vmatpush1.bf16.msra.mxu0 0
        %1594 = vmatprep.subr.bf16.mxu0 0
        %1595 = vmatpush1.bf16.msra.mxu0 0
        %1596 = vmatprep.subr.bf16.mxu0 0
        %1597 = vmatpush1.bf16.msra.mxu0 0
        %1598 = vmatprep.subr.bf16.mxu0 0
        %1599 = vmatpush1.bf16.msra.mxu0 0
        %1600 = vmatprep.subr.bf16.mxu0 0
        %1601 = vmatpush1.bf16.msra.mxu0 0
        %1602 = vmatprep.subr.bf16.mxu0 0
        %1603 = vmatpush1.bf16.msra.mxu0 0
        %1604 = vmatprep.subr.bf16.mxu0 0
        %1605 = vmatpush1.bf16.msra.mxu0 0
        %1606 = vmatprep.subr.bf16.mxu0 0
        %1607 = vmatpush1.bf16.msra.mxu0 0
        %1608 = vmatprep.subr.bf16.mxu0 0
        %1609 = vmatpush1.bf16.msra.mxu0 0
        %1610 = vmatprep.mubr.bf16.mxu0 0
        %1611 = vmatmul.mubr.bf16.gmra.mrb[0].mxu0 %v1573
        %v1612 = vpop.f32.mrb[0].mxu0
        %v1613 = vadd.f32 0.0, %v1612
        %v1614 = vpop.f32.mrb[0].mxu0
        %v1615 = vpop.f32.mrb[0].mxu0
        %v1616 = vpop.f32.mrb[0].mxu0
        %1617 = vdwg.mxu0
        %v1618 = vadd.f32 %v1454, %v1613
        %1619 = vrot.lane.b32.xlu0 %v1134, 104
        %v1620 = vpop.permute.xlu0 %1619
        %1621 = vrot.lane.b32.xlu0 %v1135, 104
        %v1622 = vpop.permute.xlu0 %1621
        %v1624 = vsel %vm1143, %v1620, 0
        %v1627 = vsel %vm1143, %v1622, 0
        %1629 = vmatprep.subr.bf16.mxu0 0
        %1630 = vmatpush1.bf16.xpose.msra.mxu0 %v1627
        %1631 = vmatprep.subr.bf16.mxu0 0
        %1632 = vmatpush1.bf16.xpose.msra.mxu0 0
        %1633 = vmatprep.subr.bf16.mxu0 0
        %1634 = vmatpush1.bf16.xpose.msra.mxu0 0
        %1635 = vmatprep.subr.bf16.mxu0 0
        %1636 = vmatpush1.bf16.xpose.msra.mxu0 0
        %1637 = vmatprep.subr.bf16.mxu0 0
        %1638 = vmatpush1.bf16.xpose.msra.mxu0 0
        %1639 = vmatprep.subr.bf16.mxu0 0
        %1640 = vmatpush1.bf16.xpose.msra.mxu0 0
        %1641 = vmatprep.subr.bf16.mxu0 0
        %1642 = vmatpush1.bf16.xpose.msra.mxu0 0
        %1643 = vmatprep.subr.bf16.mxu0 0
        %1644 = vmatpush1.bf16.xpose.msra.mxu0 0
        %1645 = vmatprep.subr.bf16.mxu0 0
        %1646 = vmatpush1.bf16.xpose.msra.mxu0 0
        %1647 = vmatprep.subr.bf16.mxu0 0
        %1648 = vmatpush1.bf16.xpose.msra.mxu0 0
        %1649 = vmatprep.subr.bf16.mxu0 0
        %1650 = vmatpush1.bf16.xpose.msra.mxu0 0
        %1651 = vmatprep.subr.bf16.mxu0 0
        %1652 = vmatpush1.bf16.xpose.msra.mxu0 0
        %1653 = vmatprep.subr.bf16.mxu0 0
        %1654 = vmatpush1.bf16.xpose.msra.mxu0 0
        %1655 = vmatprep.subr.bf16.mxu0 0
        %1656 = vmatpush1.bf16.xpose.msra.mxu0 0
        %1657 = vmatprep.subr.bf16.mxu0 0
        %1658 = vmatpush1.bf16.xpose.msra.mxu0 0
        %1659 = vmatprep.subr.bf16.mxu0 0
        %1660 = vmatpush1.bf16.xpose.msra.mxu0 0
        %1661 = vmatprep.mubr.bf16.mxu0 0
        %1662 = vmatmul.mubr.bf16.gmra.mrb[0].mxu0 %v1624
        %v1663 = vpop.f32.mrb[0].mxu0
        %v1664 = vadd.f32 %v1142, %v1663
        %v1665 = vpop.f32.mrb[0].mxu0
        %v1666 = vpop.f32.mrb[0].mxu0
        %v1667 = vpop.f32.mrb[0].mxu0
        %1668 = vdwg.mxu0
        %v1669 = vsel %vm1143, %v1664, -inf
        %1670 = vmax.xlane.f32.xlu0 %v1669
        %v1671 = vpop.xlane.xlu0 %1670
        %v1672 = vsub.f32 %v1664, %v1671
        %v1673 = vmul.f32 %v1672, 1.442695
        %v1674 = vpow.pop %v1673
        %v1675 = vsel %vm1143, %v1674, 0.0
        %1676 = vadd.xlane.f32.xlu0 %v1675
        %v1677 = vpop.xlane.xlu0 %1676
        %v1678 = vrcp.pop %v1677
        %v1679 = vmul.f32 %v1674, %v1678
        %v1680 = vpack.c.bf16 %v1679, %v1679
        %1681 = vrot.lane.b32.xlu0 %v1136, 104
        %v1682 = vpop.permute.xlu0 %1681
        %v1684 = vsel %vm1143, %v1680, 0
        %v1687 = vsel %vm1205, %v1682, 0
        %1689 = vmatprep.subr.bf16.mxu0 0
        %1690 = vmatpush1.bf16.msra.mxu0 %v1687
        %1691 = vmatprep.subr.bf16.mxu0 0
        %1692 = vmatpush1.bf16.msra.mxu0 0
        %1693 = vmatprep.subr.bf16.mxu0 0
        %1694 = vmatpush1.bf16.msra.mxu0 0
        %1695 = vmatprep.subr.bf16.mxu0 0
        %1696 = vmatpush1.bf16.msra.mxu0 0
        %1697 = vmatprep.subr.bf16.mxu0 0
        %1698 = vmatpush1.bf16.msra.mxu0 0
        %1699 = vmatprep.subr.bf16.mxu0 0
        %1700 = vmatpush1.bf16.msra.mxu0 0
        %1701 = vmatprep.subr.bf16.mxu0 0
        %1702 = vmatpush1.bf16.msra.mxu0 0
        %1703 = vmatprep.subr.bf16.mxu0 0
        %1704 = vmatpush1.bf16.msra.mxu0 0
        %1705 = vmatprep.subr.bf16.mxu0 0
        %1706 = vmatpush1.bf16.msra.mxu0 0
        %1707 = vmatprep.subr.bf16.mxu0 0
        %1708 = vmatpush1.bf16.msra.mxu0 0
        %1709 = vmatprep.subr.bf16.mxu0 0
        %1710 = vmatpush1.bf16.msra.mxu0 0
        %1711 = vmatprep.subr.bf16.mxu0 0
        %1712 = vmatpush1.bf16.msra.mxu0 0
        %1713 = vmatprep.subr.bf16.mxu0 0
        %1714 = vmatpush1.bf16.msra.mxu0 0
        %1715 = vmatprep.subr.bf16.mxu0 0
        %1716 = vmatpush1.bf16.msra.mxu0 0
        %1717 = vmatprep.subr.bf16.mxu0 0
        %1718 = vmatpush1.bf16.msra.mxu0 0
        %1719 = vmatprep.subr.bf16.mxu0 0
        %1720 = vmatpush1.bf16.msra.mxu0 0
        %1721 = vmatprep.mubr.bf16.mxu0 0
        %1722 = vmatmul.mubr.bf16.gmra.mrb[0].mxu0 %v1684
        %v1723 = vpop.f32.mrb[0].mxu0
        %v1724 = vadd.f32 0.0, %v1723
        %v1725 = vpop.f32.mrb[0].mxu0
        %v1726 = vpop.f32.mrb[0].mxu0
        %v1727 = vpop.f32.mrb[0].mxu0
        %1728 = vdwg.mxu0
        %v1729 = vpack.c.bf16 %v1724, %v1724
        %s1730 = scalar_lea.vmem %s756, 12 [#allocation8]
        %v1731 = vld [vmem:[%s1730] sm:$0xf]
        %v1733 = vsel %vm1143, %v1729, 0
        %v1736 = vsel %vm1205, %v1731, 0
        %1738 = vmatprep.subr.bf16.mxu0 0
        %1739 = vmatpush1.bf16.msra.mxu0 %v1736
        %1740 = vmatprep.subr.bf16.mxu0 0
        %1741 = vmatpush1.bf16.msra.mxu0 0
        %1742 = vmatprep.subr.bf16.mxu0 0
        %1743 = vmatpush1.bf16.msra.mxu0 0
        %1744 = vmatprep.subr.bf16.mxu0 0
        %1745 = vmatpush1.bf16.msra.mxu0 0
        %1746 = vmatprep.subr.bf16.mxu0 0
        %1747 = vmatpush1.bf16.msra.mxu0 0
        %1748 = vmatprep.subr.bf16.mxu0 0
        %1749 = vmatpush1.bf16.msra.mxu0 0
        %1750 = vmatprep.subr.bf16.mxu0 0
        %1751 = vmatpush1.bf16.msra.mxu0 0
        %1752 = vmatprep.subr.bf16.mxu0 0
        %1753 = vmatpush1.bf16.msra.mxu0 0
        %1754 = vmatprep.subr.bf16.mxu0 0
        %1755 = vmatpush1.bf16.msra.mxu0 0
        %1756 = vmatprep.subr.bf16.mxu0 0
        %1757 = vmatpush1.bf16.msra.mxu0 0
        %1758 = vmatprep.subr.bf16.mxu0 0
        %1759 = vmatpush1.bf16.msra.mxu0 0
        %1760 = vmatprep.subr.bf16.mxu0 0
        %1761 = vmatpush1.bf16.msra.mxu0 0
        %1762 = vmatprep.subr.bf16.mxu0 0
        %1763 = vmatpush1.bf16.msra.mxu0 0
        %1764 = vmatprep.subr.bf16.mxu0 0
        %1765 = vmatpush1.bf16.msra.mxu0 0
        %1766 = vmatprep.subr.bf16.mxu0 0
        %1767 = vmatpush1.bf16.msra.mxu0 0
        %1768 = vmatprep.subr.bf16.mxu0 0
        %1769 = vmatpush1.bf16.msra.mxu0 0
        %1770 = vmatprep.mubr.bf16.mxu0 0
        %1771 = vmatmul.mubr.bf16.gmra.mrb[0].mxu0 %v1733
        %v1772 = vpop.f32.mrb[0].mxu0
        %v1773 = vadd.f32 0.0, %v1772
        %v1774 = vpop.f32.mrb[0].mxu0
        %v1775 = vpop.f32.mrb[0].mxu0
        %v1776 = vpop.f32.mrb[0].mxu0
        %1777 = vdwg.mxu0
        %v1778 = vadd.f32 %v1618, %v1773
        %v1779 = vld [vmem:[%s764] sm:$0x1]
        %v1781 = vlaneseq
        %v1782 = vshrl.u32 %v1781, 7
        %v1783 = vsub.s32 0, %v1782
        %v1784 = vrot.slane %v1779, %v1783
        %v1786 = vadd.f32 %v1778, %v1784
        %p1787 = scmp.lt.s32.totalorder %s48, 1
        // Predicated region
        $region117: #{tpu_custom_call.1} parent=87 // pred_check
          %p1788 = pneg %p1787
        $region118: #{tpu_custom_call.1} parent=87 // pred_check_branch
          %1790 = sbr.rel (%p1788) target = $region120
        $region119: #{tpu_custom_call.1} parent=87 // pred_region
          %v1791 = vadd.f32 %v938, %v1786
          %v1792 = vld [vmem:[%s772] sm:$0x1]
          %v1793 = vld [vmem:[%s907] sm:$0x1]
          %v1794 = vsel %vm963, %v1791, 0.0
          %1795 = vadd.xlane.f32.xlu0 %v1794
          %v1796 = vpop.xlane.xlu0 %1795
          %v1797 = vrcp.pop 32.0
          %v1798 = vmul.f32 %v1796, %v1797
          %v1799 = vsub.f32 %v1791, %v1798
          %v1800 = vmul.f32 %v1799, %v1799
          %v1801 = vsel %vm963, %v1800, 0.0
          %1802 = vadd.xlane.f32.xlu0 %v1801
          %v1803 = vpop.xlane.xlu0 %1802
          %v1804 = vmul.f32 %v1803, %v1797
          %v1805 = vadd.f32 %v1804, 1e-05
          %v1806 = vrsqrt.pop %v1805
          %v1807 = vmul.f32 %v1799, %v1806
          %v1809 = vlaneseq
          %v1810 = vshrl.u32 %v1809, 7
          %v1811 = vsub.s32 0, %v1810
          %v1812 = vrot.slane %v1792, %v1811
          %v1814 = vmul.f32 %v1807, %v1812
          %v1816 = vlaneseq
          %v1817 = vshrl.u32 %v1816, 7
          %v1818 = vsub.s32 0, %v1817
          %v1819 = vrot.slane %v1793, %v1818
          %v1821 = vadd.f32 %v1814, %v1819
          %v1822 = vpack.c.bf16 %v1821, %v1821
          %v1823 = vld [vmem:[%s912] sm:$0xf]
          %v1824 = vld [vmem:[%s912 + $0x4] sm:$0xf]
          %v1825 = vld [vmem:[%s912 + $0x8] sm:$0xf]
          %v1826 = vld [vmem:[%s912 + $0xc] sm:$0xf]
          %v1827 = vld [vmem:[%s915] sm:$0x1]
          %v1829 = vlaneseq
          %v1830 = vshrl.u32 %v1829, 7
          %v1831 = vsub.s32 0, %v1830
          %v1832 = vrot.slane %v1827, %v1831
          %v1838 = vunpack.c.l.b16 %v1823
          %v1839 = vunpack.c.l.b16 %v1824
          %v1840 = vunpack.c.l.b16 %v1825
          %v1841 = vunpack.c.l.b16 %v1826
          %v1842 = vpack.c.b16 %v1839, %v1838
          %v1843 = vpack.c.b16 %v1841, %v1840
          %v1847 = vsel %vm963, %v1822, 0
          %1849 = vmatprep.subr.bf16.mxu0 0
          %1850 = vmatpush1.bf16.msra.mxu0 %v1842
          %1851 = vmatprep.subr.bf16.mxu0 0
          %1852 = vmatpush1.bf16.msra.mxu0 %v1843
          %1853 = vmatprep.subr.bf16.mxu0 0
          %1854 = vmatpush1.bf16.msra.mxu0 0
          %1855 = vmatprep.subr.bf16.mxu0 0
          %1856 = vmatpush1.bf16.msra.mxu0 0
          %1857 = vmatprep.subr.bf16.mxu0 0
          %1858 = vmatpush1.bf16.msra.mxu0 0
          %1859 = vmatprep.subr.bf16.mxu0 0
          %1860 = vmatpush1.bf16.msra.mxu0 0
          %1861 = vmatprep.subr.bf16.mxu0 0
          %1862 = vmatpush1.bf16.msra.mxu0 0
          %1863 = vmatprep.subr.bf16.mxu0 0
          %1864 = vmatpush1.bf16.msra.mxu0 0
          %1865 = vmatprep.subr.bf16.mxu0 0
          %1866 = vmatpush1.bf16.msra.mxu0 0
          %1867 = vmatprep.subr.bf16.mxu0 0
          %1868 = vmatpush1.bf16.msra.mxu0 0
          %1869 = vmatprep.subr.bf16.mxu0 0
          %1870 = vmatpush1.bf16.msra.mxu0 0
          %1871 = vmatprep.subr.bf16.mxu0 0
          %1872 = vmatpush1.bf16.msra.mxu0 0
          %1873 = vmatprep.subr.bf16.mxu0 0
          %1874 = vmatpush1.bf16.msra.mxu0 0
          %1875 = vmatprep.subr.bf16.mxu0 0
          %1876 = vmatpush1.bf16.msra.mxu0 0
          %1877 = vmatprep.subr.bf16.mxu0 0
          %1878 = vmatpush1.bf16.msra.mxu0 0
          %1879 = vmatprep.subr.bf16.mxu0 0
          %1880 = vmatpush1.bf16.msra.mxu0 0
          %1881 = vmatprep.mubr.bf16.mxu0 0
          %1882 = vmatmul.mubr.bf16.gmra.mrb[0].mxu0 %v1847
          %v1883 = vpop.f32.mrb[0].mxu0
          %v1884 = vadd.f32 %v1832, %v1883
          %v1885 = vpop.f32.mrb[0].mxu0
          %v1886 = vpop.f32.mrb[0].mxu0
          %v1887 = vpop.f32.mrb[0].mxu0
          %1888 = vdwg.mxu0
          %v1889 = vmax.f32 %v1884, 0.0
          %v1890 = vpack.c.bf16 %v1889, %v1889
          %v1891 = vld [vmem:[%s920] sm:$0xf]
          %v1892 = vld [vmem:[%s920 + $0x4] sm:$0xf]
          %v1893 = vld [vmem:[%s920 + $0x8] sm:$0xf]
          %v1894 = vld [vmem:[%s920 + $0xc] sm:$0xf]
          %v1895 = vld [vmem:[%s920 + $0x10] sm:$0xf]
          %v1896 = vld [vmem:[%s920 + $0x14] sm:$0xf]
          %v1897 = vld [vmem:[%s920 + $0x18] sm:$0xf]
          %v1898 = vld [vmem:[%s920 + $0x1c] sm:$0xf]
          %v1899 = vld [vmem:[%s923] sm:$0x1]
          %v1901 = vlaneseq
          %v1902 = vshrl.u32 %v1901, 7
          %v1903 = vsub.s32 0, %v1902
          %v1904 = vrot.slane %v1899, %v1903
          %v1914 = vunpack.c.l.b16 %v1891
          %v1915 = vunpack.c.l.b16 %v1892
          %v1916 = vunpack.c.l.b16 %v1893
          %v1917 = vunpack.c.l.b16 %v1894
          %v1918 = vunpack.c.l.b16 %v1895
          %v1919 = vunpack.c.l.b16 %v1896
          %v1920 = vunpack.c.l.b16 %v1897
          %v1921 = vunpack.c.l.b16 %v1898
          %v1922 = vpack.c.b16 %v1915, %v1914
          %v1923 = vpack.c.b16 %v1917, %v1916
          %v1924 = vpack.c.b16 %v1919, %v1918
          %v1925 = vpack.c.b16 %v1921, %v1920
          %vm1930 = vcmask 523264
          %v1932 = vsel %vm1930, %v1890, 0
          %1934 = vmatprep.subr.bf16.mxu0 0
          %1935 = vmatpush1.bf16.msra.mxu0 %v1922
          %1936 = vmatprep.subr.bf16.mxu0 0
          %1937 = vmatpush1.bf16.msra.mxu0 %v1923
          %1938 = vmatprep.subr.bf16.mxu0 0
          %1939 = vmatpush1.bf16.msra.mxu0 %v1924
          %1940 = vmatprep.subr.bf16.mxu0 0
          %1941 = vmatpush1.bf16.msra.mxu0 %v1925
          %1942 = vmatprep.subr.bf16.mxu0 0
          %1943 = vmatpush1.bf16.msra.mxu0 0
          %1944 = vmatprep.subr.bf16.mxu0 0
          %1945 = vmatpush1.bf16.msra.mxu0 0
          %1946 = vmatprep.subr.bf16.mxu0 0
          %1947 = vmatpush1.bf16.msra.mxu0 0
          %1948 = vmatprep.subr.bf16.mxu0 0
          %1949 = vmatpush1.bf16.msra.mxu0 0
          %1950 = vmatprep.subr.bf16.mxu0 0
          %1951 = vmatpush1.bf16.msra.mxu0 0
          %1952 = vmatprep.subr.bf16.mxu0 0
          %1953 = vmatpush1.bf16.msra.mxu0 0
          %1954 = vmatprep.subr.bf16.mxu0 0
          %1955 = vmatpush1.bf16.msra.mxu0 0
          %1956 = vmatprep.subr.bf16.mxu0 0
          %1957 = vmatpush1.bf16.msra.mxu0 0
          %1958 = vmatprep.subr.bf16.mxu0 0
          %1959 = vmatpush1.bf16.msra.mxu0 0
          %1960 = vmatprep.subr.bf16.mxu0 0
          %1961 = vmatpush1.bf16.msra.mxu0 0
          %1962 = vmatprep.subr.bf16.mxu0 0
          %1963 = vmatpush1.bf16.msra.mxu0 0
          %1964 = vmatprep.subr.bf16.mxu0 0
          %1965 = vmatpush1.bf16.msra.mxu0 0
          %1966 = vmatprep.mubr.bf16.mxu0 0
          %1967 = vmatmul.mubr.bf16.gmra.mrb[0].mxu0 %v1932
          %v1968 = vpop.f32.mrb[0].mxu0
          %v1969 = vadd.f32 %v1904, %v1968
          %v1970 = vpop.f32.mrb[0].mxu0
          %v1971 = vpop.f32.mrb[0].mxu0
          %v1972 = vpop.f32.mrb[0].mxu0
          %1973 = vdwg.mxu0
          %v1974 = vadd.f32 %v1821, %v1969
          %v1975 = vld [vmem:[%s926] sm:$0x1]
          %v1976 = vld [vmem:[%s929] sm:$0x1]
          %v1977 = vsel %vm963, %v1974, 0.0
          %1978 = vadd.xlane.f32.xlu0 %v1977
          %v1979 = vpop.xlane.xlu0 %1978
          %v1980 = vmul.f32 %v1979, %v1797
          %v1981 = vsub.f32 %v1974, %v1980
          %v1982 = vmul.f32 %v1981, %v1981
          %v1983 = vsel %vm963, %v1982, 0.0
          %1984 = vadd.xlane.f32.xlu0 %v1983
          %v1985 = vpop.xlane.xlu0 %1984
          %v1986 = vmul.f32 %v1985, %v1797
          %v1987 = vadd.f32 %v1986, 1e-05
          %v1988 = vrsqrt.pop %v1987
          %v1989 = vmul.f32 %v1981, %v1988
          %v1991 = vlaneseq
          %v1992 = vshrl.u32 %v1991, 7
          %v1993 = vsub.s32 0, %v1992
          %v1994 = vrot.slane %v1975, %v1993
          %v1996 = vmul.f32 %v1989, %v1994
          %v1998 = vlaneseq
          %v1999 = vshrl.u32 %v1998, 7
          %v2000 = vsub.s32 0, %v1999
          %v2001 = vrot.slane %v1976, %v2000
          %v2003 = vadd.f32 %v1996, %v2001
          %2004 = vst.msk [vmem:[%s886] sm:$0xff] %vm963, %v2003
        $region120: #{tpu_custom_call.1} parent=87 // pred_fallthru
          _
        %p2005 = scmp.eq.s32.totalorder %s48, 1
        // Predicated region
        $region121: #{tpu_custom_call.1} parent=87 // pred_check
          %p2006 = pneg %p2005
        $region122: #{tpu_custom_call.1} parent=87 // pred_check_branch
          %2008 = sbr.rel (%p2006) target = $region124
        $region123: #{tpu_custom_call.1} parent=87 // pred_region
          %v2009 = vadd.f32 %v938, %v1786
          %v2010 = vld [vmem:[%s772] sm:$0x1]
          %v2011 = vld [vmem:[%s907] sm:$0x1]
          %vm2012 = vcmask 261127
          %v2013 = vsel %vm2012, %v2009, 0.0
          %2014 = vadd.xlane.f32.xlu0 %v2013
          %v2015 = vpop.xlane.xlu0 %2014
          %v2016 = vrcp.pop 32.0
          %v2017 = vmul.f32 %v2015, %v2016
          %v2018 = vsub.f32 %v2009, %v2017
          %v2019 = vmul.f32 %v2018, %v2018
          %v2020 = vsel %vm2012, %v2019, 0.0
          %2021 = vadd.xlane.f32.xlu0 %v2020
          %v2022 = vpop.xlane.xlu0 %2021
          %v2023 = vmul.f32 %v2022, %v2016
          %v2024 = vadd.f32 %v2023, 1e-05
          %v2025 = vrsqrt.pop %v2024
          %v2026 = vmul.f32 %v2018, %v2025
          %v2028 = vlaneseq
          %v2029 = vshrl.u32 %v2028, 7
          %v2030 = vsub.s32 0, %v2029
          %v2031 = vrot.slane %v2010, %v2030
          %v2033 = vmul.f32 %v2026, %v2031
          %v2035 = vlaneseq
          %v2036 = vshrl.u32 %v2035, 7
          %v2037 = vsub.s32 0, %v2036
          %v2038 = vrot.slane %v2011, %v2037
          %v2040 = vadd.f32 %v2033, %v2038
          %v2041 = vpack.c.bf16 %v2040, %v2040
          %v2042 = vld [vmem:[%s912] sm:$0xf]
          %v2043 = vld [vmem:[%s912 + $0x4] sm:$0xf]
          %v2044 = vld [vmem:[%s912 + $0x8] sm:$0xf]
          %v2045 = vld [vmem:[%s912 + $0xc] sm:$0xf]
          %v2046 = vld [vmem:[%s915] sm:$0x1]
          %v2048 = vshrl.u32 %v2041, 16
          %v2050 = vrot.slane %v2048, 3
          %v2055 = vunpack.c.l.b16 %v2042
          %v2056 = vunpack.c.l.b16 %v2043
          %v2057 = vunpack.c.l.b16 %v2044
          %v2058 = vunpack.c.l.b16 %v2045
          %v2059 = vpack.c.b16 %v2056, %v2055
          %v2060 = vpack.c.b16 %v2058, %v2057
          %v2064 = vsel %vm963, %v2050, 0
          %2066 = vmatprep.subr.bf16.mxu0 0
          %2067 = vmatpush1.bf16.msra.mxu0 %v2059
          %2068 = vmatprep.subr.bf16.mxu0 0
          %2069 = vmatpush1.bf16.msra.mxu0 %v2060
          %2070 = vmatprep.subr.bf16.mxu0 0
          %2071 = vmatpush1.bf16.msra.mxu0 0
          %2072 = vmatprep.subr.bf16.mxu0 0
          %2073 = vmatpush1.bf16.msra.mxu0 0
          %2074 = vmatprep.subr.bf16.mxu0 0
          %2075 = vmatpush1.bf16.msra.mxu0 0
          %2076 = vmatprep.subr.bf16.mxu0 0
          %2077 = vmatpush1.bf16.msra.mxu0 0
          %2078 = vmatprep.subr.bf16.mxu0 0
          %2079 = vmatpush1.bf16.msra.mxu0 0
          %2080 = vmatprep.subr.bf16.mxu0 0
          %2081 = vmatpush1.bf16.msra.mxu0 0
          %2082 = vmatprep.subr.bf16.mxu0 0
          %2083 = vmatpush1.bf16.msra.mxu0 0
          %2084 = vmatprep.subr.bf16.mxu0 0
          %2085 = vmatpush1.bf16.msra.mxu0 0
          %2086 = vmatprep.subr.bf16.mxu0 0
          %2087 = vmatpush1.bf16.msra.mxu0 0
          %2088 = vmatprep.subr.bf16.mxu0 0
          %2089 = vmatpush1.bf16.msra.mxu0 0
          %2090 = vmatprep.subr.bf16.mxu0 0
          %2091 = vmatpush1.bf16.msra.mxu0 0
          %2092 = vmatprep.subr.bf16.mxu0 0
          %2093 = vmatpush1.bf16.msra.mxu0 0
          %2094 = vmatprep.subr.bf16.mxu0 0
          %2095 = vmatpush1.bf16.msra.mxu0 0
          %2096 = vmatprep.subr.bf16.mxu0 0
          %2097 = vmatpush1.bf16.msra.mxu0 0
          %2098 = vmatprep.mubr.bf16.mxu0 0
          %2099 = vmatmul.mubr.bf16.gmra.mrb[0].mxu0 %v2064
          %v2100 = vpop.f32.mrb[0].mxu0
          %v2101 = vadd.f32 %v2046, %v2100
          %v2102 = vpop.f32.mrb[0].mxu0
          %v2103 = vpop.f32.mrb[0].mxu0
          %v2104 = vpop.f32.mrb[0].mxu0
          %2105 = vdwg.mxu0
          %v2106 = vmax.f32 %v2101, 0.0
          %v2107 = vpack.c.bf16 %v2106, %v2106
          %v2108 = vld [vmem:[%s920] sm:$0xf]
          %v2109 = vld [vmem:[%s920 + $0x4] sm:$0xf]
          %v2110 = vld [vmem:[%s920 + $0x8] sm:$0xf]
          %v2111 = vld [vmem:[%s920 + $0xc] sm:$0xf]
          %v2112 = vld [vmem:[%s920 + $0x10] sm:$0xf]
          %v2113 = vld [vmem:[%s920 + $0x14] sm:$0xf]
          %v2114 = vld [vmem:[%s920 + $0x18] sm:$0xf]
          %v2115 = vld [vmem:[%s920 + $0x1c] sm:$0xf]
          %v2116 = vld [vmem:[%s923] sm:$0x1]
          %v2125 = vunpack.c.l.b16 %v2108
          %v2126 = vunpack.c.l.b16 %v2109
          %v2127 = vunpack.c.l.b16 %v2110
          %v2128 = vunpack.c.l.b16 %v2111
          %v2129 = vunpack.c.l.b16 %v2112
          %v2130 = vunpack.c.l.b16 %v2113
          %v2131 = vunpack.c.l.b16 %v2114
          %v2132 = vunpack.c.l.b16 %v2115
          %v2133 = vpack.c.b16 %v2126, %v2125
          %v2134 = vpack.c.b16 %v2128, %v2127
          %v2135 = vpack.c.b16 %v2130, %v2129
          %v2136 = vpack.c.b16 %v2132, %v2131
          %vm2141 = vcmask 523264
          %v2143 = vsel %vm2141, %v2107, 0
          %2145 = vmatprep.subr.bf16.mxu0 0
          %2146 = vmatpush1.bf16.msra.mxu0 %v2133
          %2147 = vmatprep.subr.bf16.mxu0 0
          %2148 = vmatpush1.bf16.msra.mxu0 %v2134
          %2149 = vmatprep.subr.bf16.mxu0 0
          %2150 = vmatpush1.bf16.msra.mxu0 %v2135
          %2151 = vmatprep.subr.bf16.mxu0 0
          %2152 = vmatpush1.bf16.msra.mxu0 %v2136
          %2153 = vmatprep.subr.bf16.mxu0 0
          %2154 = vmatpush1.bf16.msra.mxu0 0
          %2155 = vmatprep.subr.bf16.mxu0 0
          %2156 = vmatpush1.bf16.msra.mxu0 0
          %2157 = vmatprep.subr.bf16.mxu0 0
          %2158 = vmatpush1.bf16.msra.mxu0 0
          %2159 = vmatprep.subr.bf16.mxu0 0
          %2160 = vmatpush1.bf16.msra.mxu0 0
          %2161 = vmatprep.subr.bf16.mxu0 0
          %2162 = vmatpush1.bf16.msra.mxu0 0
          %2163 = vmatprep.subr.bf16.mxu0 0
          %2164 = vmatpush1.bf16.msra.mxu0 0
          %2165 = vmatprep.subr.bf16.mxu0 0
          %2166 = vmatpush1.bf16.msra.mxu0 0
          %2167 = vmatprep.subr.bf16.mxu0 0
          %2168 = vmatpush1.bf16.msra.mxu0 0
          %2169 = vmatprep.subr.bf16.mxu0 0
          %2170 = vmatpush1.bf16.msra.mxu0 0
          %2171 = vmatprep.subr.bf16.mxu0 0
          %2172 = vmatpush1.bf16.msra.mxu0 0
          %2173 = vmatprep.subr.bf16.mxu0 0
          %2174 = vmatpush1.bf16.msra.mxu0 0
          %2175 = vmatprep.subr.bf16.mxu0 0
          %2176 = vmatpush1.bf16.msra.mxu0 0
          %2177 = vmatprep.mubr.bf16.mxu0 0
          %2178 = vmatmul.mubr.bf16.gmra.mrb[0].mxu0 %v2143
          %v2179 = vpop.f32.mrb[0].mxu0
          %v2180 = vadd.f32 %v2116, %v2179
          %v2181 = vpop.f32.mrb[0].mxu0
          %v2182 = vpop.f32.mrb[0].mxu0
          %v2183 = vpop.f32.mrb[0].mxu0
          %2184 = vdwg.mxu0
          %v2186 = vrot.slane %v2180, 1
          %v2188 = vadd.f32 %v2040, %v2186
          %v2189 = vld [vmem:[%s926] sm:$0x1]
          %v2190 = vld [vmem:[%s929] sm:$0x1]
          %v2191 = vsel %vm2012, %v2188, 0.0
          %2192 = vadd.xlane.f32.xlu0 %v2191
          %v2193 = vpop.xlane.xlu0 %2192
          %v2194 = vmul.f32 %v2193, %v2016
          %v2195 = vsub.f32 %v2188, %v2194
          %v2196 = vmul.f32 %v2195, %v2195
          %v2197 = vsel %vm2012, %v2196, 0.0
          %2198 = vadd.xlane.f32.xlu0 %v2197
          %v2199 = vpop.xlane.xlu0 %2198
          %v2200 = vmul.f32 %v2199, %v2016
          %v2201 = vadd.f32 %v2200, 1e-05
          %v2202 = vrsqrt.pop %v2201
          %v2203 = vmul.f32 %v2195, %v2202
          %v2205 = vlaneseq
          %v2206 = vshrl.u32 %v2205, 7
          %v2207 = vsub.s32 0, %v2206
          %v2208 = vrot.slane %v2189, %v2207
          %v2210 = vmul.f32 %v2203, %v2208
          %v2212 = vlaneseq
          %v2213 = vshrl.u32 %v2212, 7
          %v2214 = vsub.s32 0, %v2213
          %v2215 = vrot.slane %v2190, %v2214
          %v2217 = vadd.f32 %v2210, %v2215
          %2218 = vst.msk [vmem:[%s886] sm:$0x80] %vm2012, %v2217
        $region124: #{tpu_custom_call.1} parent=87 // pred_fallthru
          _
        %s2219 = sand.u32 %s505, 1
        %s2220 = scalar_lea.sflag [#allocation4], %s2219
        %s2221 = sand.u32 %s505, 1
        %s2222 = smul.addr %s2221, 8
        %s2223 = scalar_lea.vmem [#allocation13], %s2222
        // Predicated region
        $region125: #{tpu_custom_call.1} parent=87 // pred_check
          %p2224 = pneg %p515
        $region126: #{tpu_custom_call.1} parent=87 // pred_check_branch
          %2226 = sbr.rel (%p2224) target = $region128
        $region127: #{tpu_custom_call.1} parent=87 // pred_region
          %s2228 = ssub.s32 128, 128
          %2229 = vsyncadd %s2220, %s2228
          %s2230 = smul.addr %s47, 128
          %s2231 = scalar_lea.hbm %s17, %s2230
          %s2233 = sshll.u32 %s2223, 4
          %s2234 = int_to_ptr.vmem [resolvable:$true] %s2233
          %2236 = dma.vmem_to_hbm [thread:$0]  %s2234, 128, %s2231, %s2220
        $region128: #{tpu_custom_call.1} parent=87 // pred_fallthru
          _
      $region88: #{tpu_custom_call.1} parent=5 // pred_fallthru
        _
      %p2237 = scmp.le.s32.totalorder 2, %s38
      // Predicated region
      $region129: #{tpu_custom_call.1} parent=5 // pred_check
        %p2238 = pneg %p2237
      $region130: #{tpu_custom_call.1} parent=5 // pred_check_branch
        %2240 = sbr.rel (%p2238) target = $region132
      $region131: #{tpu_custom_call.1} parent=5 // pred_region
        %s2241 = ssub.s32 %s38, 2
        // Predicated region
        $region133: #{tpu_custom_call.1} parent=131 // pred_check
          %p2242 = pneg %p521
        $region134: #{tpu_custom_call.1} parent=131 // pred_check_branch
          %2244 = sbr.rel (%p2242) target = $region136
        $region135: #{tpu_custom_call.1} parent=131 // pred_region
          %s2245 = sand.u32 %s506, 1
          %s2246 = scalar_lea.sflag [#allocation4], %s2245
          %s2247 = sand.u32 %s506, 1
          %s2248 = smul.addr %s2247, 8
          %s2249 = scalar_lea.vmem [#allocation13], %s2248
          %2250 = dma.done %s2246, 128
        $region136: #{tpu_custom_call.1} parent=131 // pred_fallthru
          _
      $region132: #{tpu_custom_call.1} parent=5 // pred_fallthru
        _
    $region6: #{tpu_custom_call.1} parent=1 // loop_footer
      %s42 = sadd.s32 1, %s38
    $region7: #{tpu_custom_call.1} parent=1 // loop_footer_branch
      %37 = sbr.rel target = $region3
    $region8: #{tpu_custom_call.1} parent=1 // loop_exit
      _
    %2251 = vsyncpa [#allocation3], 1
    %s2252 = scalar_lea.sflag [#allocation3], 1
    %2253 = vsyncpa %s2252, 1
    %2254 = vsyncpa [#allocation6], 1
    %s2255 = scalar_lea.sflag [#allocation6], 1
    %2256 = vsyncpa %s2255, 1
    %2257 = vsyncpa [#allocation9], 1
    %s2258 = scalar_lea.sflag [#allocation9], 1
    %2259 = vsyncpa %s2258, 1
    %2260 = vsyncpa [#allocation12], 1
    %s2261 = scalar_lea.sflag [#allocation12], 1
    %2262 = vsyncpa %s2261, 1
    %2263 = vsyncpa [#allocation4], 1
    %s2264 = scalar_lea.sflag [#allocation4], 1
    %2265 = vsyncpa %s2264, 1

</llo_original>
